<compile_context>
chip_gen: v7x
topology: tpu7x:2x2x1
jax: 0.10.0
libtpu: 0.0.40
codegen_flags: <defaults>
</compile_context>

<pallas_src>
import functools

import numpy as np
import jax
import jax.numpy as jnp
from jax.experimental import pallas as pl
from jax.experimental.pallas import tpu as pltpu  # noqa: F401  (TPU backend assumed)

# ----------------------- model hyper-parameters (small) -----------------------
BATCH = 2
IMG_C, IMG_H, IMG_W = 3, 32, 32
PATCH = 8                       # patchify-conv kernel == stride
C_BACK = 16                     # backbone output channels
HIDDEN = 32                     # transformer hidden dim (d_model)
NUM_HEADS = 4
HEAD_DIM = HIDDEN // NUM_HEADS
FFN = 64
NUM_QUERIES = 8
NUM_CLASSES = 5                 # vision_detr replaces class_embed -> num_classes
ENC_LAYERS = 1
DEC_LAYERS = 1
HEAD_PAD = 128                  # lane-dense padded width for each head output

HF, WF = IMG_H // PATCH, IMG_W // PATCH
HW = HF * WF                    # encoder sequence length per image
SEQ_E = BATCH * HW              # stacked encoder sequence (32)
SEQ_D = BATCH * NUM_QUERIES     # stacked decoder sequence (16)
NEG_INF = -1e9


# ------------------------------ fused Pallas kernel ----------------------------
def _detr_kernel(woffs, foffs, patches_ref, w_ref, f_ref, out_ref):
    f32, bf16 = jnp.float32, jnp.bfloat16

    # Point-of-use slab reads (static offsets; every slice starts at lane 0).
    def W(name):
        o, r, c = woffs[name]
        return w_ref[o:o + r, 0:c]

    def F(name):
        o, r, c = foffs[name]
        return f_ref[o:o + r, 0:c]

    def mm(a16, w16):
        return jnp.dot(a16, w16, preferred_element_type=f32)

    def qkT(a16, b16):  # (M, d) x (N, d) -> (M, N), contraction on the feature dim
        return jax.lax.dot_general(a16, b16, (((1,), (1,)), ((), ())),
                                   preferred_element_type=f32)

    def layer_norm(x, g, b, eps=1e-5):
        mu = jnp.mean(x, axis=-1, keepdims=True)
        var = jnp.mean((x - mu) ** 2, axis=-1, keepdims=True)
        return (x - mu) * jax.lax.rsqrt(var + eps) * g + b

    def attend(xq16, xk16, xv16, mask, pfx):
        # Factored per-head attention (no sub-128-lane slicing):
        #   scores_h ≡ (xq @ A_h + u_h) @ xk^T   (A_h/u_h include 1/sqrt(dh) and bq)
        #   out_h     = softmax(scores_h) @ (xv @ M_h + c_h)      (M_h/c_h fold Wv,Wo,bv)
        acc = None
        for h in range(NUM_HEADS):
            qa16 = (mm(xq16, W(f"{pfx}_A{h}")) + F(f"{pfx}_u{h}")).astype(bf16)
            s = qkT(qa16, xk16) + mask                                  # (Lq, Lk) f32
            s = s - jnp.max(s, axis=-1, keepdims=True)
            e = jnp.exp(s)
            p16 = (e * pl.reciprocal(jnp.sum(e, axis=-1, keepdims=True),
                                     approx=True)).astype(bf16)
            vo16 = (mm(xv16, W(f"{pfx}_M{h}")) + F(f"{pfx}_c{h}")).astype(bf16)
            ho = mm(p16, vo16)                                          # (Lq, D) f32
            acc = ho if acc is None else acc + ho
        return acc + F(f"{pfx}_bo")

    # ---- backbone (patchify conv as matmul) + 1x1 input projection, all patches ----
    x = mm(patches_ref[...].astype(bf16), W("backbone_w")) + F("backbone_b")
    x = jnp.maximum(x, 0.0)                                             # (SEQ_E, C_BACK)
    src = mm(x.astype(bf16), W("proj_w")) + F("proj_b")                 # (SEQ_E, D)

    pos = F("pos")                # (SEQ_E, D)   batch-stacked positional embedding
    qpos = F("qpos")              # (SEQ_D, D)   batch-stacked learned queries
    enc_mask = F("enc_mask")      # (SEQ_E, SEQ_E) block-diag 0 / -1e9
    dec_mask = F("dec_mask")      # (SEQ_D, SEQ_D)
    cross_mask = F("cross_mask")  # (SEQ_D, SEQ_E)

    # ---------------- transformer encoder (post-norm), batch-stacked ----------------
    for li in range(ENC_LAYERS):
        pfx = f"enc{li}"
        xqk16 = (src + pos).astype(bf16)
        a = attend(xqk16, xqk16, src.astype(bf16), enc_mask, pfx + "_sa")
        src = layer_norm(src + a, F(pfx + "_ln1g"), F(pfx + "_ln1b"))
        s16 = src.astype(bf16)
        ff = jnp.maximum(mm(s16, W(pfx + "_ff1w")) + F(pfx + "_ff1b"), 0.0)
        ff = mm(ff.astype(bf16), W(pfx + "_ff2w")) + F(pfx + "_ff2b")
        src = layer_norm(src + ff, F(pfx + "_ln2g"), F(pfx + "_ln2b"))

    memory = src
    memk16 = (memory + pos).astype(bf16)   # cross-attn keys (pos added to k only)
    memv16 = memory.astype(bf16)           # cross-attn values

    # ---------------- transformer decoder (learned queries), batch-stacked ----------
    tgt = jnp.zeros((SEQ_D, HIDDEN), f32)
    for li in range(DEC_LAYERS):
        pfx = f"dec{li}"
        xq16 = (tgt + qpos).astype(bf16)
        a = attend(xq16, xq16, tgt.astype(bf16), dec_mask, pfx + "_sa")
        tgt = layer_norm(tgt + a, F(pfx + "_ln1g"), F(pfx + "_ln1b"))
        xq16 = (tgt + qpos).astype(bf16)
        a = attend(xq16, memk16, memv16, cross_mask, pfx + "_ca")
        tgt = layer_norm(tgt + a, F(pfx + "_ln2g"), F(pfx + "_ln2b"))
        t16 = tgt.astype(bf16)
        ff = jnp.maximum(mm(t16, W(pfx + "_ff1w")) + F(pfx + "_ff1b"), 0.0)
        ff = mm(ff.astype(bf16), W(pfx + "_ff2w")) + F(pfx + "_ff2b")
        tgt = layer_norm(tgt + ff, F(pfx + "_ln3g"), F(pfx + "_ln3b"))

    hs = layer_norm(tgt, F("dec_norm_g"), F("dec_norm_b"))              # (SEQ_D, D)
    hs16 = hs.astype(bf16)

    # ---------------- heads (merged, lane-dense 2*128-wide output slab) -------------
    logits = mm(hs16, W("class_w")) + F("class_b")                      # (SEQ_D, 128)
    h1 = jnp.maximum(mm(hs16, W("bbox_w1")) + F("bbox_b1"), 0.0)
    h2 = jnp.maximum(mm(h1.astype(bf16), W("bbox_w2")) + F("bbox_b2"), 0.0)
    bx = mm(h2.astype(bf16), W("bbox_w3")) + F("bbox_b3")               # (SEQ_D, 128)
    boxes = 1.0 / (1.0 + jnp.exp(-bx))

    out_ref[:, 0:HEAD_PAD] = logits
    out_ref[:, HEAD_PAD:2 * HEAD_PAD] = boxes


# ------------------------------ parameter init ---------------------------------
def _init_linear(key, fan_in, fan_out):
    k1, k2 = jax.random.split(key)
    bound = 1.0 / (fan_in ** 0.5)
    w = jax.random.uniform(k1, (fan_in, fan_out), jnp.float32, -bound, bound)
    b = jax.random.uniform(k2, (fan_out,), jnp.float32, -bound, bound)
    return w, b


def _init_attn(key, d):
    ks = jax.random.split(key, 4)
    p = {}
    for name, kk in zip(("q", "k", "v", "o"), ks):
        w, b = _init_linear(kk, d, d)
        p["w" + name], p["b" + name] = w, b
    return p


def init_params(key):
    keys = iter(jax.random.split(key, 64))
    p = {}
    p["backbone_w"], p["backbone_b"] = _init_linear(next(keys), IMG_C * PATCH * PATCH, C_BACK)
    p["proj_w"], p["proj_b"] = _init_linear(next(keys), C_BACK, HIDDEN)
    p["pos_embed"] = 0.02 * jax.random.normal(next(keys), (HW, HIDDEN), jnp.float32)
    p["query_embed"] = 0.02 * jax.random.normal(next(keys), (NUM_QUERIES, HIDDEN), jnp.float32)

    enc = []
    for _ in range(ENC_LAYERS):
        lp = {"self_attn": _init_attn(next(keys), HIDDEN)}
        lp["ff1_w"], lp["ff1_b"] = _init_linear(next(keys), HIDDEN, FFN)
        lp["ff2_w"], lp["ff2_b"] = _init_linear(next(keys), FFN, HIDDEN)
        lp["ln1_g"] = jnp.ones((HIDDEN,)); lp["ln1_b"] = jnp.zeros((HIDDEN,))
        lp["ln2_g"] = jnp.ones((HIDDEN,)); lp["ln2_b"] = jnp.zeros((HIDDEN,))
        enc.append(lp)
    p["enc_layers"] = enc

    dec = []
    for _ in range(DEC_LAYERS):
        lp = {"self_attn": _init_attn(next(keys), HIDDEN),
              "cross_attn": _init_attn(next(keys), HIDDEN)}
        lp["ff1_w"], lp["ff1_b"] = _init_linear(next(keys), HIDDEN, FFN)
        lp["ff2_w"], lp["ff2_b"] = _init_linear(next(keys), FFN, HIDDEN)
        lp["ln1_g"] = jnp.ones((HIDDEN,)); lp["ln1_b"] = jnp.zeros((HIDDEN,))
        lp["ln2_g"] = jnp.ones((HIDDEN,)); lp["ln2_b"] = jnp.zeros((HIDDEN,))
        lp["ln3_g"] = jnp.ones((HIDDEN,)); lp["ln3_b"] = jnp.zeros((HIDDEN,))
        dec.append(lp)
    p["dec_layers"] = dec
    p["dec_norm_g"] = jnp.ones((HIDDEN,)); p["dec_norm_b"] = jnp.zeros((HIDDEN,))

    # vision_detr replaces class_embed with a fresh Linear(in_features, num_classes)
    p["class_w"], p["class_b"] = _init_linear(next(keys), HIDDEN, NUM_CLASSES)
    p["bbox_w1"], p["bbox_b1"] = _init_linear(next(keys), HIDDEN, HIDDEN)
    p["bbox_w2"], p["bbox_b2"] = _init_linear(next(keys), HIDDEN, HIDDEN)
    p["bbox_w3"], p["bbox_b3"] = _init_linear(next(keys), HIDDEN, 4)
    return p


# ---------------- one-time parameter packing into two slabs (outside jit) -------
class _SlabPacker:
    """Packs named 2-D blocks row-wise into a single (R, width) slab.
    Each block starts at an 8-aligned row and at lane 0; lanes past its width are zero."""

    def __init__(self, width):
        self.width = width
        self.rows = 0
        self.offsets = {}
        self.chunks = []

    def add(self, name, arr):
        arr = np.asarray(arr, np.float32)
        if arr.ndim == 1:
            arr = arr[None, :]
        r, c = arr.shape
        assert c <= self.width, (name, arr.shape)
        r_pad = -(-r // 8) * 8
        buf = np.zeros((r_pad, self.width), np.float32)
        buf[:r, :c] = arr
        self.offsets[name] = (self.rows, r, c)
        self.chunks.append(buf)
        self.rows += r_pad

    def finish(self, dtype):
        slab = np.concatenate(self.chunks, axis=0)
        return jnp.asarray(slab).astype(dtype), self.offsets


def _block_diag_mask(rows_per, cols_per):
    r = np.repeat(np.arange(BATCH), rows_per)
    c = np.repeat(np.arange(BATCH), cols_per)
    return np.where(r[:, None] == c[None, :], 0.0, NEG_INF).astype(np.float32)


def prepare_params(p):
    """Fold heads/biases/scale into full-width matrices, pad the two output heads to
    128 lanes, and pack everything into one bf16 weight slab + one f32 misc slab."""
    scale = 1.0 / (HEAD_DIM ** 0.5)
    wpk = _SlabPacker(128)   # bf16 matmul weights
    fpk = _SlabPacker(128)   # f32 biases / LN / embeddings / masks

    def npf(a):
        return np.asarray(a, np.float32)

    wpk.add("backbone_w", npf(p["backbone_w"]))
    fpk.add("backbone_b", npf(p["backbone_b"]))
    wpk.add("proj_w", npf(p["proj_w"]))
    fpk.add("proj_b", npf(p["proj_b"]))

    fpk.add("pos", np.tile(npf(p["pos_embed"]), (BATCH, 1)))          # (SEQ_E, D)
    fpk.add("qpos", np.tile(npf(p["query_embed"]), (BATCH, 1)))       # (SEQ_D, D)

    fpk.add("enc_mask", _block_diag_mask(HW, HW))
    fpk.add("dec_mask", _block_diag_mask(NUM_QUERIES, NUM_QUERIES))
    fpk.add("cross_mask", _block_diag_mask(NUM_QUERIES, HW))

    def add_attn(pfx, ap):
        Wq, Wk, Wv, Wo = npf(ap["wq"]), npf(ap["wk"]), npf(ap["wv"]), npf(ap["wo"])
        bq, bv, bo = npf(ap["bq"]), npf(ap["bv"]), npf(ap["bo"])
        for h in range(NUM_HEADS):
            sl = slice(h * HEAD_DIM, (h + 1) * HEAD_DIM)
            # scores_h == scale * (xq @ Wq_h + bq_h) @ (xk @ Wk_h)^T  (+ row-constant
            # terms that softmax drops exactly) == (xq @ A_h + u_h) @ xk^T
            wpk.add(f"{pfx}_A{h}", scale * (Wq[:, sl] @ Wk[:, sl].T))          # (D, D)
            fpk.add(f"{pfx}_u{h}", scale * (bq[sl][None, :] @ Wk[:, sl].T))    # (1, D)
            # values_h @ Wo_h == xv @ M_h + c_h
            wpk.add(f"{pfx}_M{h}", Wv[:, sl] @ Wo[sl, :])                      # (D, D)
            fpk.add(f"{pfx}_c{h}", bv[sl][None, :] @ Wo[sl, :])                # (1, D)
        fpk.add(f"{pfx}_bo", bo)

    for li, lp in enumerate(p["enc_layers"]):
        pfx = f"enc{li}"
        add_attn(pfx + "_sa", lp["self_attn"])
        wpk.add(pfx + "_ff1w", npf(lp["ff1_w"])); fpk.add(pfx + "_ff1b", npf(lp["ff1_b"]))
        wpk.add(pfx + "_ff2w", npf(lp["ff2_w"])); fpk.add(pfx + "_ff2b", npf(lp["ff2_b"]))
        fpk.add(pfx + "_ln1g", npf(lp["ln1_g"])); fpk.add(pfx + "_ln1b", npf(lp["ln1_b"]))
        fpk.add(pfx + "_ln2g", npf(lp["ln2_g"])); fpk.add(pfx + "_ln2b", npf(lp["ln2_b"]))

    for li, lp in enumerate(p["dec_layers"]):
        pfx = f"dec{li}"
        add_attn(pfx + "_sa", lp["self_attn"])
        add_attn(pfx + "_ca", lp["cross_attn"])
        wpk.add(pfx + "_ff1w", npf(lp["ff1_w"])); fpk.add(pfx + "_ff1b", npf(lp["ff1_b"]))
        wpk.add(pfx + "_ff2w", npf(lp["ff2_w"])); fpk.add(pfx + "_ff2b", npf(lp["ff2_b"]))
        fpk.add(pfx + "_ln1g", npf(lp["ln1_g"])); fpk.add(pfx + "_ln1b", npf(lp["ln1_b"]))
        fpk.add(pfx + "_ln2g", npf(lp["ln2_g"])); fpk.add(pfx + "_ln2b", npf(lp["ln2_b"]))
        fpk.add(pfx + "_ln3g", npf(lp["ln3_g"])); fpk.add(pfx + "_ln3b", npf(lp["ln3_b"]))

    fpk.add("dec_norm_g", npf(p["dec_norm_g"])); fpk.add("dec_norm_b", npf(p["dec_norm_b"]))

    # heads: zero-pad to 128 lanes so the kernel's output stores are lane-dense
    cw = np.zeros((HIDDEN, HEAD_PAD), np.float32); cw[:, :NUM_CLASSES] = npf(p["class_w"])
    cb = np.zeros((1, HEAD_PAD), np.float32); cb[0, :NUM_CLASSES] = npf(p["class_b"])
    wpk.add("class_w", cw); fpk.add("class_b", cb)
    wpk.add("bbox_w1", npf(p["bbox_w1"])); fpk.add("bbox_b1", npf(p["bbox_b1"]))
    wpk.add("bbox_w2", npf(p["bbox_w2"])); fpk.add("bbox_b2", npf(p["bbox_b2"]))
    bw = np.zeros((HIDDEN, HEAD_PAD), np.float32); bw[:, :4] = npf(p["bbox_w3"])
    bb = np.zeros((1, HEAD_PAD), np.float32); bb[0, :4] = npf(p["bbox_b3"])
    wpk.add("bbox_w3", bw); fpk.add("bbox_b3", bb)

    wslab, woffs = wpk.finish(jnp.bfloat16)
    fslab, foffs = fpk.finish(jnp.float32)
    return {"wslab": wslab, "fslab": fslab, "woffs": woffs, "foffs": foffs}


# -------------------------------- forward pass ----------------------------------
def vision_detr_forward(images, wslab, fslab, *, woffs, foffs):
    B = images.shape[0]
    assert B == BATCH, "masks / positional embeddings are packed for BATCH images"

    # Patchify (pure layout transform) in XLA; the matmul runs inside the kernel.
    x = images.reshape(B, IMG_C, HF, PATCH, WF, PATCH)
    patches = x.transpose(0, 2, 4, 1, 3, 5).reshape(B * HW, IMG_C * PATCH * PATCH)

    kern = functools.partial(_detr_kernel, woffs, foffs)
    out = pl.pallas_call(
        kern,
        out_shape=jax.ShapeDtypeStruct((B * NUM_QUERIES, 2 * HEAD_PAD), jnp.float32),
    )(patches, wslab, fslab)

    logits = out[:, :NUM_CLASSES].reshape(B, NUM_QUERIES, NUM_CLASSES)
    boxes = out[:, HEAD_PAD:HEAD_PAD + 4].reshape(B, NUM_QUERIES, 4)
    return {"pred_logits": logits, "pred_boxes": boxes}


# ------------------------------------ main --------------------------------------
if __name__ == "__main__":
    root = jax.random.PRNGKey(0)
    k_img, k_par = jax.random.split(root)
    images = jax.random.normal(k_img, (BATCH, IMG_C, IMG_H, IMG_W), jnp.float32)
    params = init_params(k_par)
    prep = prepare_params(params)   # one-time weight folding + slab packing, outside jit

    fwd = jax.jit(functools.partial(vision_detr_forward,
                                    woffs=prep["woffs"], foffs=prep["foffs"]))
    out = fwd(images, prep["wslab"], prep["fslab"])
    jax.block_until_ready(out)

    assert out["pred_logits"].shape == (BATCH, NUM_QUERIES, NUM_CLASSES)
    assert out["pred_boxes"].shape == (BATCH, NUM_QUERIES, 4)
    assert bool(jnp.all(jnp.isfinite(out["pred_logits"])))
    assert bool(jnp.all((out["pred_boxes"] >= 0.0) & (out["pred_boxes"] <= 1.0)))
    print("KERNEL_OK")
</pallas_src>

<mosaic_0001>
module attributes {stable_mosaic.version = 11 : i64} {
  func.func @_detr_kernel(%arg0: memref<32x192xf32, #tpu.memory_space<vmem>>, %arg1: memref<1296x128xbf16, #tpu.memory_space<vmem>>, %arg2: memref<504x128xf32, #tpu.memory_space<vmem>>, %arg3: memref<16x256xf32, #tpu.memory_space<vmem>>) attributes {dimension_semantics = [], scalar_prefetch = 0 : i64, scratch_operands = 0 : i64, tpu.core_type = #tpu.core_type<tc>} {
    %c0 = arith.constant 0 : index
    %c0_0 = arith.constant 0 : index
    %0 = vector.load %arg0[%c0, %c0_0] : memref<32x192xf32, #tpu.memory_space<vmem>>, vector<32x192xf32>
    %1 = arith.truncf %0 : vector<32x192xf32> to vector<32x192xbf16>
    %c0_1 = arith.constant 0 : index
    %c0_2 = arith.constant 0 : index
    %2 = vector.load %arg1[%c0_1, %c0_2] : memref<1296x128xbf16, #tpu.memory_space<vmem>>, vector<192x16xbf16>
    %cst = arith.constant dense<0.000000e+00> : vector<32x16xf32>
    %3 = tpu.matmul %1, %2, %cst {dimension_numbers = #tpu.dot_dimension_numbers<[1], [0], [0], [1], [0, 0, 1, 1], [], []>} : vector<32x192xbf16>, vector<192x16xbf16>, vector<32x16xf32> -> vector<32x16xf32>
    %c0_3 = arith.constant 0 : index
    %c0_4 = arith.constant 0 : index
    %4 = vector.load %arg2[%c0_3, %c0_4] : memref<504x128xf32, #tpu.memory_space<vmem>>, vector<1x16xf32>
    %5 = vector.broadcast %4 : vector<1x16xf32> to vector<32x16xf32>
    %6 = arith.addf %3, %5 : vector<32x16xf32>
    %cst_5 = arith.constant 0.000000e+00 : f32
    %7 = vector.broadcast %cst_5 : f32 to vector<32x16xf32>
    %8 = arith.maximumf %6, %7 : vector<32x16xf32>
    %9 = arith.truncf %8 : vector<32x16xf32> to vector<32x16xbf16>
    %c192 = arith.constant 192 : index
    %c0_6 = arith.constant 0 : index
    %10 = vector.load %arg1[%c192, %c0_6] : memref<1296x128xbf16, #tpu.memory_space<vmem>>, vector<16x32xbf16>
    %cst_7 = arith.constant dense<0.000000e+00> : vector<32x32xf32>
    %11 = tpu.matmul %9, %10, %cst_7 {dimension_numbers = #tpu.dot_dimension_numbers<[1], [0], [0], [1], [0, 0, 1, 1], [], []>} : vector<32x16xbf16>, vector<16x32xbf16>, vector<32x32xf32> -> vector<32x32xf32>
    %c8 = arith.constant 8 : index
    %c0_8 = arith.constant 0 : index
    %12 = vector.load %arg2[%c8, %c0_8] : memref<504x128xf32, #tpu.memory_space<vmem>>, vector<1x32xf32>
    %13 = vector.broadcast %12 : vector<1x32xf32> to vector<32x32xf32>
    %14 = arith.addf %11, %13 : vector<32x32xf32>
    %c16 = arith.constant 16 : index
    %c0_9 = arith.constant 0 : index
    %15 = vector.load %arg2[%c16, %c0_9] : memref<504x128xf32, #tpu.memory_space<vmem>>, vector<32x32xf32>
    %c48 = arith.constant 48 : index
    %c0_10 = arith.constant 0 : index
    %16 = vector.load %arg2[%c48, %c0_10] : memref<504x128xf32, #tpu.memory_space<vmem>>, vector<16x32xf32>
    %c64 = arith.constant 64 : index
    %c0_11 = arith.constant 0 : index
    %17 = vector.load %arg2[%c64, %c0_11] : memref<504x128xf32, #tpu.memory_space<vmem>>, vector<32x32xf32>
    %c96 = arith.constant 96 : index
    %c0_12 = arith.constant 0 : index
    %18 = vector.load %arg2[%c96, %c0_12] : memref<504x128xf32, #tpu.memory_space<vmem>>, vector<16x16xf32>
    %c112 = arith.constant 112 : index
    %c0_13 = arith.constant 0 : index
    %19 = vector.load %arg2[%c112, %c0_13] : memref<504x128xf32, #tpu.memory_space<vmem>>, vector<16x32xf32>
    %20 = arith.addf %14, %15 : vector<32x32xf32>
    %21 = arith.truncf %20 : vector<32x32xf32> to vector<32x32xbf16>
    %22 = arith.truncf %14 : vector<32x32xf32> to vector<32x32xbf16>
    %c208 = arith.constant 208 : index
    %c0_14 = arith.constant 0 : index
    %23 = vector.load %arg1[%c208, %c0_14] : memref<1296x128xbf16, #tpu.memory_space<vmem>>, vector<32x32xbf16>
    %cst_15 = arith.constant dense<0.000000e+00> : vector<32x32xf32>
    %24 = tpu.matmul %21, %23, %cst_15 {dimension_numbers = #tpu.dot_dimension_numbers<[1], [0], [0], [1], [0, 0, 1, 1], [], []>} : vector<32x32xbf16>, vector<32x32xbf16>, vector<32x32xf32> -> vector<32x32xf32>
    %c128 = arith.constant 128 : index
    %c0_16 = arith.constant 0 : index
    %25 = vector.load %arg2[%c128, %c0_16] : memref<504x128xf32, #tpu.memory_space<vmem>>, vector<1x32xf32>
    %26 = vector.broadcast %25 : vector<1x32xf32> to vector<32x32xf32>
    %27 = arith.addf %24, %26 : vector<32x32xf32>
    %28 = arith.truncf %27 : vector<32x32xf32> to vector<32x32xbf16>
    %cst_17 = arith.constant dense<0.000000e+00> : vector<32x32xf32>
    %29 = tpu.matmul %28, %21, %cst_17 {dimension_numbers = #tpu.dot_dimension_numbers<[1], [1], [0], [0], [0, 0, 1, 0], [], []>} : vector<32x32xbf16>, vector<32x32xbf16>, vector<32x32xf32> -> vector<32x32xf32>
    %30 = arith.addf %29, %17 : vector<32x32xf32>
    %cst_18 = arith.constant dense<0xFF800000> : vector<32xf32>
    %31 = vector.multi_reduction <maximumf>, %30, %cst_18 [1] : vector<32x32xf32> to vector<32xf32>
    %32 = vector.shape_cast %31 : vector<32xf32> to vector<32x1xf32>
    %33 = vector.broadcast %32 : vector<32x1xf32> to vector<32x32xf32>
    %34 = arith.subf %30, %33 : vector<32x32xf32>
    %35 = math.exp %34 : vector<32x32xf32>
    %cst_19 = arith.constant dense<0.000000e+00> : vector<32xf32>
    %36 = vector.multi_reduction <add>, %35, %cst_19 [1] : vector<32x32xf32> to vector<32xf32>
    %37 = vector.shape_cast %36 : vector<32xf32> to vector<32x1xf32>
    %38 = tpu.reciprocal %37 {approx = true} : vector<32x1xf32> -> vector<32x1xf32>
    %39 = vector.broadcast %38 : vector<32x1xf32> to vector<32x32xf32>
    %40 = arith.mulf %35, %39 : vector<32x32xf32>
    %41 = arith.truncf %40 : vector<32x32xf32> to vector<32x32xbf16>
    %c240 = arith.constant 240 : index
    %c0_20 = arith.constant 0 : index
    %42 = vector.load %arg1[%c240, %c0_20] : memref<1296x128xbf16, #tpu.memory_space<vmem>>, vector<32x32xbf16>
    %cst_21 = arith.constant dense<0.000000e+00> : vector<32x32xf32>
    %43 = tpu.matmul %22, %42, %cst_21 {dimension_numbers = #tpu.dot_dimension_numbers<[1], [0], [0], [1], [0, 0, 1, 1], [], []>} : vector<32x32xbf16>, vector<32x32xbf16>, vector<32x32xf32> -> vector<32x32xf32>
    %c136 = arith.constant 136 : index
    %c0_22 = arith.constant 0 : index
    %44 = vector.load %arg2[%c136, %c0_22] : memref<504x128xf32, #tpu.memory_space<vmem>>, vector<1x32xf32>
    %45 = vector.broadcast %44 : vector<1x32xf32> to vector<32x32xf32>
    %46 = arith.addf %43, %45 : vector<32x32xf32>
    %47 = arith.truncf %46 : vector<32x32xf32> to vector<32x32xbf16>
    %cst_23 = arith.constant dense<0.000000e+00> : vector<32x32xf32>
    %48 = tpu.matmul %41, %47, %cst_23 {dimension_numbers = #tpu.dot_dimension_numbers<[1], [0], [0], [1], [0, 0, 1, 1], [], []>} : vector<32x32xbf16>, vector<32x32xbf16>, vector<32x32xf32> -> vector<32x32xf32>
    %c272 = arith.constant 272 : index
    %c0_24 = arith.constant 0 : index
    %49 = vector.load %arg1[%c272, %c0_24] : memref<1296x128xbf16, #tpu.memory_space<vmem>>, vector<32x32xbf16>
    %cst_25 = arith.constant dense<0.000000e+00> : vector<32x32xf32>
    %50 = tpu.matmul %21, %49, %cst_25 {dimension_numbers = #tpu.dot_dimension_numbers<[1], [0], [0], [1], [0, 0, 1, 1], [], []>} : vector<32x32xbf16>, vector<32x32xbf16>, vector<32x32xf32> -> vector<32x32xf32>
    %c144 = arith.constant 144 : index
    %c0_26 = arith.constant 0 : index
    %51 = vector.load %arg2[%c144, %c0_26] : memref<504x128xf32, #tpu.memory_space<vmem>>, vector<1x32xf32>
    %52 = vector.broadcast %51 : vector<1x32xf32> to vector<32x32xf32>
    %53 = arith.addf %50, %52 : vector<32x32xf32>
    %54 = arith.truncf %53 : vector<32x32xf32> to vector<32x32xbf16>
    %cst_27 = arith.constant dense<0.000000e+00> : vector<32x32xf32>
    %55 = tpu.matmul %54, %21, %cst_27 {dimension_numbers = #tpu.dot_dimension_numbers<[1], [1], [0], [0], [0, 0, 1, 0], [], []>} : vector<32x32xbf16>, vector<32x32xbf16>, vector<32x32xf32> -> vector<32x32xf32>
    %56 = arith.addf %55, %17 : vector<32x32xf32>
    %cst_28 = arith.constant dense<0xFF800000> : vector<32xf32>
    %57 = vector.multi_reduction <maximumf>, %56, %cst_28 [1] : vector<32x32xf32> to vector<32xf32>
    %58 = vector.shape_cast %57 : vector<32xf32> to vector<32x1xf32>
    %59 = vector.broadcast %58 : vector<32x1xf32> to vector<32x32xf32>
    %60 = arith.subf %56, %59 : vector<32x32xf32>
    %61 = math.exp %60 : vector<32x32xf32>
    %cst_29 = arith.constant dense<0.000000e+00> : vector<32xf32>
    %62 = vector.multi_reduction <add>, %61, %cst_29 [1] : vector<32x32xf32> to vector<32xf32>
    %63 = vector.shape_cast %62 : vector<32xf32> to vector<32x1xf32>
    %64 = tpu.reciprocal %63 {approx = true} : vector<32x1xf32> -> vector<32x1xf32>
    %65 = vector.broadcast %64 : vector<32x1xf32> to vector<32x32xf32>
    %66 = arith.mulf %61, %65 : vector<32x32xf32>
    %67 = arith.truncf %66 : vector<32x32xf32> to vector<32x32xbf16>
    %c304 = arith.constant 304 : index
    %c0_30 = arith.constant 0 : index
    %68 = vector.load %arg1[%c304, %c0_30] : memref<1296x128xbf16, #tpu.memory_space<vmem>>, vector<32x32xbf16>
    %cst_31 = arith.constant dense<0.000000e+00> : vector<32x32xf32>
    %69 = tpu.matmul %22, %68, %cst_31 {dimension_numbers = #tpu.dot_dimension_numbers<[1], [0], [0], [1], [0, 0, 1, 1], [], []>} : vector<32x32xbf16>, vector<32x32xbf16>, vector<32x32xf32> -> vector<32x32xf32>
    %c152 = arith.constant 152 : index
    %c0_32 = arith.constant 0 : index
    %70 = vector.load %arg2[%c152, %c0_32] : memref<504x128xf32, #tpu.memory_space<vmem>>, vector<1x32xf32>
    %71 = vector.broadcast %70 : vector<1x32xf32> to vector<32x32xf32>
    %72 = arith.addf %69, %71 : vector<32x32xf32>
    %73 = arith.truncf %72 : vector<32x32xf32> to vector<32x32xbf16>
    %cst_33 = arith.constant dense<0.000000e+00> : vector<32x32xf32>
    %74 = tpu.matmul %67, %73, %cst_33 {dimension_numbers = #tpu.dot_dimension_numbers<[1], [0], [0], [1], [0, 0, 1, 1], [], []>} : vector<32x32xbf16>, vector<32x32xbf16>, vector<32x32xf32> -> vector<32x32xf32>
    %75 = arith.addf %48, %74 : vector<32x32xf32>
    %c336 = arith.constant 336 : index
    %c0_34 = arith.constant 0 : index
    %76 = vector.load %arg1[%c336, %c0_34] : memref<1296x128xbf16, #tpu.memory_space<vmem>>, vector<32x32xbf16>
    %cst_35 = arith.constant dense<0.000000e+00> : vector<32x32xf32>
    %77 = tpu.matmul %21, %76, %cst_35 {dimension_numbers = #tpu.dot_dimension_numbers<[1], [0], [0], [1], [0, 0, 1, 1], [], []>} : vector<32x32xbf16>, vector<32x32xbf16>, vector<32x32xf32> -> vector<32x32xf32>
    %c160 = arith.constant 160 : index
    %c0_36 = arith.constant 0 : index
    %78 = vector.load %arg2[%c160, %c0_36] : memref<504x128xf32, #tpu.memory_space<vmem>>, vector<1x32xf32>
    %79 = vector.broadcast %78 : vector<1x32xf32> to vector<32x32xf32>
    %80 = arith.addf %77, %79 : vector<32x32xf32>
    %81 = arith.truncf %80 : vector<32x32xf32> to vector<32x32xbf16>
    %cst_37 = arith.constant dense<0.000000e+00> : vector<32x32xf32>
    %82 = tpu.matmul %81, %21, %cst_37 {dimension_numbers = #tpu.dot_dimension_numbers<[1], [1], [0], [0], [0, 0, 1, 0], [], []>} : vector<32x32xbf16>, vector<32x32xbf16>, vector<32x32xf32> -> vector<32x32xf32>
    %83 = arith.addf %82, %17 : vector<32x32xf32>
    %cst_38 = arith.constant dense<0xFF800000> : vector<32xf32>
    %84 = vector.multi_reduction <maximumf>, %83, %cst_38 [1] : vector<32x32xf32> to vector<32xf32>
    %85 = vector.shape_cast %84 : vector<32xf32> to vector<32x1xf32>
    %86 = vector.broadcast %85 : vector<32x1xf32> to vector<32x32xf32>
    %87 = arith.subf %83, %86 : vector<32x32xf32>
    %88 = math.exp %87 : vector<32x32xf32>
    %cst_39 = arith.constant dense<0.000000e+00> : vector<32xf32>
    %89 = vector.multi_reduction <add>, %88, %cst_39 [1] : vector<32x32xf32> to vector<32xf32>
    %90 = vector.shape_cast %89 : vector<32xf32> to vector<32x1xf32>
    %91 = tpu.reciprocal %90 {approx = true} : vector<32x1xf32> -> vector<32x1xf32>
    %92 = vector.broadcast %91 : vector<32x1xf32> to vector<32x32xf32>
    %93 = arith.mulf %88, %92 : vector<32x32xf32>
    %94 = arith.truncf %93 : vector<32x32xf32> to vector<32x32xbf16>
    %c368 = arith.constant 368 : index
    %c0_40 = arith.constant 0 : index
    %95 = vector.load %arg1[%c368, %c0_40] : memref<1296x128xbf16, #tpu.memory_space<vmem>>, vector<32x32xbf16>
    %cst_41 = arith.constant dense<0.000000e+00> : vector<32x32xf32>
    %96 = tpu.matmul %22, %95, %cst_41 {dimension_numbers = #tpu.dot_dimension_numbers<[1], [0], [0], [1], [0, 0, 1, 1], [], []>} : vector<32x32xbf16>, vector<32x32xbf16>, vector<32x32xf32> -> vector<32x32xf32>
    %c168 = arith.constant 168 : index
    %c0_42 = arith.constant 0 : index
    %97 = vector.load %arg2[%c168, %c0_42] : memref<504x128xf32, #tpu.memory_space<vmem>>, vector<1x32xf32>
    %98 = vector.broadcast %97 : vector<1x32xf32> to vector<32x32xf32>
    %99 = arith.addf %96, %98 : vector<32x32xf32>
    %100 = arith.truncf %99 : vector<32x32xf32> to vector<32x32xbf16>
    %cst_43 = arith.constant dense<0.000000e+00> : vector<32x32xf32>
    %101 = tpu.matmul %94, %100, %cst_43 {dimension_numbers = #tpu.dot_dimension_numbers<[1], [0], [0], [1], [0, 0, 1, 1], [], []>} : vector<32x32xbf16>, vector<32x32xbf16>, vector<32x32xf32> -> vector<32x32xf32>
    %102 = arith.addf %75, %101 : vector<32x32xf32>
    %c400 = arith.constant 400 : index
    %c0_44 = arith.constant 0 : index
    %103 = vector.load %arg1[%c400, %c0_44] : memref<1296x128xbf16, #tpu.memory_space<vmem>>, vector<32x32xbf16>
    %cst_45 = arith.constant dense<0.000000e+00> : vector<32x32xf32>
    %104 = tpu.matmul %21, %103, %cst_45 {dimension_numbers = #tpu.dot_dimension_numbers<[1], [0], [0], [1], [0, 0, 1, 1], [], []>} : vector<32x32xbf16>, vector<32x32xbf16>, vector<32x32xf32> -> vector<32x32xf32>
    %c176 = arith.constant 176 : index
    %c0_46 = arith.constant 0 : index
    %105 = vector.load %arg2[%c176, %c0_46] : memref<504x128xf32, #tpu.memory_space<vmem>>, vector<1x32xf32>
    %106 = vector.broadcast %105 : vector<1x32xf32> to vector<32x32xf32>
    %107 = arith.addf %104, %106 : vector<32x32xf32>
    %108 = arith.truncf %107 : vector<32x32xf32> to vector<32x32xbf16>
    %cst_47 = arith.constant dense<0.000000e+00> : vector<32x32xf32>
    %109 = tpu.matmul %108, %21, %cst_47 {dimension_numbers = #tpu.dot_dimension_numbers<[1], [1], [0], [0], [0, 0, 1, 0], [], []>} : vector<32x32xbf16>, vector<32x32xbf16>, vector<32x32xf32> -> vector<32x32xf32>
    %110 = arith.addf %109, %17 : vector<32x32xf32>
    %cst_48 = arith.constant dense<0xFF800000> : vector<32xf32>
    %111 = vector.multi_reduction <maximumf>, %110, %cst_48 [1] : vector<32x32xf32> to vector<32xf32>
    %112 = vector.shape_cast %111 : vector<32xf32> to vector<32x1xf32>
    %113 = vector.broadcast %112 : vector<32x1xf32> to vector<32x32xf32>
    %114 = arith.subf %110, %113 : vector<32x32xf32>
    %115 = math.exp %114 : vector<32x32xf32>
    %cst_49 = arith.constant dense<0.000000e+00> : vector<32xf32>
    %116 = vector.multi_reduction <add>, %115, %cst_49 [1] : vector<32x32xf32> to vector<32xf32>
    %117 = vector.shape_cast %116 : vector<32xf32> to vector<32x1xf32>
    %118 = tpu.reciprocal %117 {approx = true} : vector<32x1xf32> -> vector<32x1xf32>
    %119 = vector.broadcast %118 : vector<32x1xf32> to vector<32x32xf32>
    %120 = arith.mulf %115, %119 : vector<32x32xf32>
    %121 = arith.truncf %120 : vector<32x32xf32> to vector<32x32xbf16>
    %c432 = arith.constant 432 : index
    %c0_50 = arith.constant 0 : index
    %122 = vector.load %arg1[%c432, %c0_50] : memref<1296x128xbf16, #tpu.memory_space<vmem>>, vector<32x32xbf16>
    %cst_51 = arith.constant dense<0.000000e+00> : vector<32x32xf32>
    %123 = tpu.matmul %22, %122, %cst_51 {dimension_numbers = #tpu.dot_dimension_numbers<[1], [0], [0], [1], [0, 0, 1, 1], [], []>} : vector<32x32xbf16>, vector<32x32xbf16>, vector<32x32xf32> -> vector<32x32xf32>
    %c184 = arith.constant 184 : index
    %c0_52 = arith.constant 0 : index
    %124 = vector.load %arg2[%c184, %c0_52] : memref<504x128xf32, #tpu.memory_space<vmem>>, vector<1x32xf32>
    %125 = vector.broadcast %124 : vector<1x32xf32> to vector<32x32xf32>
    %126 = arith.addf %123, %125 : vector<32x32xf32>
    %127 = arith.truncf %126 : vector<32x32xf32> to vector<32x32xbf16>
    %cst_53 = arith.constant dense<0.000000e+00> : vector<32x32xf32>
    %128 = tpu.matmul %121, %127, %cst_53 {dimension_numbers = #tpu.dot_dimension_numbers<[1], [0], [0], [1], [0, 0, 1, 1], [], []>} : vector<32x32xbf16>, vector<32x32xbf16>, vector<32x32xf32> -> vector<32x32xf32>
    %129 = arith.addf %102, %128 : vector<32x32xf32>
    %c192_54 = arith.constant 192 : index
    %c0_55 = arith.constant 0 : index
    %130 = vector.load %arg2[%c192_54, %c0_55] : memref<504x128xf32, #tpu.memory_space<vmem>>, vector<1x32xf32>
    %131 = vector.broadcast %130 : vector<1x32xf32> to vector<32x32xf32>
    %132 = arith.addf %129, %131 : vector<32x32xf32>
    %133 = arith.addf %14, %132 : vector<32x32xf32>
    %c216 = arith.constant 216 : index
    %c0_56 = arith.constant 0 : index
    %134 = vector.load %arg2[%c216, %c0_56] : memref<504x128xf32, #tpu.memory_space<vmem>>, vector<1x32xf32>
    %c224 = arith.constant 224 : index
    %c0_57 = arith.constant 0 : index
    %135 = vector.load %arg2[%c224, %c0_57] : memref<504x128xf32, #tpu.memory_space<vmem>>, vector<1x32xf32>
    %cst_58 = arith.constant dense<0.000000e+00> : vector<32xf32>
    %136 = vector.multi_reduction <add>, %133, %cst_58 [1] : vector<32x32xf32> to vector<32xf32>
    %137 = vector.shape_cast %136 : vector<32xf32> to vector<32x1xf32>
    %cst_59 = arith.constant 3.200000e+01 : f32
    %138 = vector.broadcast %cst_59 : f32 to vector<32x1xf32>
    %139 = arith.divf %137, %138 : vector<32x1xf32>
    %140 = vector.broadcast %139 : vector<32x1xf32> to vector<32x32xf32>
    %141 = arith.subf %133, %140 : vector<32x32xf32>
    %142 = arith.mulf %141, %141 : vector<32x32xf32>
    %cst_60 = arith.constant dense<0.000000e+00> : vector<32xf32>
    %143 = vector.multi_reduction <add>, %142, %cst_60 [1] : vector<32x32xf32> to vector<32xf32>
    %144 = vector.shape_cast %143 : vector<32xf32> to vector<32x1xf32>
    %cst_61 = arith.constant 3.200000e+01 : f32
    %145 = vector.broadcast %cst_61 : f32 to vector<32x1xf32>
    %146 = arith.divf %144, %145 : vector<32x1xf32>
    %147 = vector.broadcast %139 : vector<32x1xf32> to vector<32x32xf32>
    %148 = arith.subf %133, %147 : vector<32x32xf32>
    %cst_62 = arith.constant 9.99999974E-6 : f32
    %149 = vector.broadcast %cst_62 : f32 to vector<32x1xf32>
    %150 = arith.addf %146, %149 : vector<32x1xf32>
    %151 = math.rsqrt %150 : vector<32x1xf32>
    %152 = vector.broadcast %151 : vector<32x1xf32> to vector<32x32xf32>
    %153 = arith.mulf %148, %152 : vector<32x32xf32>
    %154 = vector.broadcast %134 : vector<1x32xf32> to vector<32x32xf32>
    %155 = arith.mulf %153, %154 : vector<32x32xf32>
    %156 = vector.broadcast %135 : vector<1x32xf32> to vector<32x32xf32>
    %157 = arith.addf %155, %156 : vector<32x32xf32>
    %158 = arith.truncf %157 : vector<32x32xf32> to vector<32x32xbf16>
    %c464 = arith.constant 464 : index
    %c0_63 = arith.constant 0 : index
    %159 = vector.load %arg1[%c464, %c0_63] : memref<1296x128xbf16, #tpu.memory_space<vmem>>, vector<32x64xbf16>
    %cst_64 = arith.constant dense<0.000000e+00> : vector<32x64xf32>
    %160 = tpu.matmul %158, %159, %cst_64 {dimension_numbers = #tpu.dot_dimension_numbers<[1], [0], [0], [1], [0, 0, 1, 1], [], []>} : vector<32x32xbf16>, vector<32x64xbf16>, vector<32x64xf32> -> vector<32x64xf32>
    %c200 = arith.constant 200 : index
    %c0_65 = arith.constant 0 : index
    %161 = vector.load %arg2[%c200, %c0_65] : memref<504x128xf32, #tpu.memory_space<vmem>>, vector<1x64xf32>
    %162 = vector.broadcast %161 : vector<1x64xf32> to vector<32x64xf32>
    %163 = arith.addf %160, %162 : vector<32x64xf32>
    %cst_66 = arith.constant 0.000000e+00 : f32
    %164 = vector.broadcast %cst_66 : f32 to vector<32x64xf32>
    %165 = arith.maximumf %163, %164 : vector<32x64xf32>
    %166 = arith.truncf %165 : vector<32x64xf32> to vector<32x64xbf16>
    %c496 = arith.constant 496 : index
    %c0_67 = arith.constant 0 : index
    %167 = vector.load %arg1[%c496, %c0_67] : memref<1296x128xbf16, #tpu.memory_space<vmem>>, vector<64x32xbf16>
    %cst_68 = arith.constant dense<0.000000e+00> : vector<32x32xf32>
    %168 = tpu.matmul %166, %167, %cst_68 {dimension_numbers = #tpu.dot_dimension_numbers<[1], [0], [0], [1], [0, 0, 1, 1], [], []>} : vector<32x64xbf16>, vector<64x32xbf16>, vector<32x32xf32> -> vector<32x32xf32>
    %c208_69 = arith.constant 208 : index
    %c0_70 = arith.constant 0 : index
    %169 = vector.load %arg2[%c208_69, %c0_70] : memref<504x128xf32, #tpu.memory_space<vmem>>, vector<1x32xf32>
    %170 = vector.broadcast %169 : vector<1x32xf32> to vector<32x32xf32>
    %171 = arith.addf %168, %170 : vector<32x32xf32>
    %172 = arith.addf %157, %171 : vector<32x32xf32>
    %c232 = arith.constant 232 : index
    %c0_71 = arith.constant 0 : index
    %173 = vector.load %arg2[%c232, %c0_71] : memref<504x128xf32, #tpu.memory_space<vmem>>, vector<1x32xf32>
    %c240_72 = arith.constant 240 : index
    %c0_73 = arith.constant 0 : index
    %174 = vector.load %arg2[%c240_72, %c0_73] : memref<504x128xf32, #tpu.memory_space<vmem>>, vector<1x32xf32>
    %cst_74 = arith.constant dense<0.000000e+00> : vector<32xf32>
    %175 = vector.multi_reduction <add>, %172, %cst_74 [1] : vector<32x32xf32> to vector<32xf32>
    %176 = vector.shape_cast %175 : vector<32xf32> to vector<32x1xf32>
    %cst_75 = arith.constant 3.200000e+01 : f32
    %177 = vector.broadcast %cst_75 : f32 to vector<32x1xf32>
    %178 = arith.divf %176, %177 : vector<32x1xf32>
    %179 = vector.broadcast %178 : vector<32x1xf32> to vector<32x32xf32>
    %180 = arith.subf %172, %179 : vector<32x32xf32>
    %181 = arith.mulf %180, %180 : vector<32x32xf32>
    %cst_76 = arith.constant dense<0.000000e+00> : vector<32xf32>
    %182 = vector.multi_reduction <add>, %181, %cst_76 [1] : vector<32x32xf32> to vector<32xf32>
    %183 = vector.shape_cast %182 : vector<32xf32> to vector<32x1xf32>
    %cst_77 = arith.constant 3.200000e+01 : f32
    %184 = vector.broadcast %cst_77 : f32 to vector<32x1xf32>
    %185 = arith.divf %183, %184 : vector<32x1xf32>
    %186 = vector.broadcast %178 : vector<32x1xf32> to vector<32x32xf32>
    %187 = arith.subf %172, %186 : vector<32x32xf32>
    %cst_78 = arith.constant 9.99999974E-6 : f32
    %188 = vector.broadcast %cst_78 : f32 to vector<32x1xf32>
    %189 = arith.addf %185, %188 : vector<32x1xf32>
    %190 = math.rsqrt %189 : vector<32x1xf32>
    %191 = vector.broadcast %190 : vector<32x1xf32> to vector<32x32xf32>
    %192 = arith.mulf %187, %191 : vector<32x32xf32>
    %193 = vector.broadcast %173 : vector<1x32xf32> to vector<32x32xf32>
    %194 = arith.mulf %192, %193 : vector<32x32xf32>
    %195 = vector.broadcast %174 : vector<1x32xf32> to vector<32x32xf32>
    %196 = arith.addf %194, %195 : vector<32x32xf32>
    %197 = arith.addf %196, %15 : vector<32x32xf32>
    %198 = arith.truncf %197 : vector<32x32xf32> to vector<32x32xbf16>
    %199 = arith.truncf %196 : vector<32x32xf32> to vector<32x32xbf16>
    %cst_79 = arith.constant 0.000000e+00 : f32
    %200 = vector.broadcast %cst_79 : f32 to vector<16x32xf32>
    %201 = arith.addf %200, %16 : vector<16x32xf32>
    %202 = arith.truncf %201 : vector<16x32xf32> to vector<16x32xbf16>
    %203 = arith.truncf %200 : vector<16x32xf32> to vector<16x32xbf16>
    %c560 = arith.constant 560 : index
    %c0_80 = arith.constant 0 : index
    %204 = vector.load %arg1[%c560, %c0_80] : memref<1296x128xbf16, #tpu.memory_space<vmem>>, vector<32x32xbf16>
    %cst_81 = arith.constant dense<0.000000e+00> : vector<16x32xf32>
    %205 = tpu.matmul %202, %204, %cst_81 {dimension_numbers = #tpu.dot_dimension_numbers<[1], [0], [0], [1], [0, 0, 1, 1], [], []>} : vector<16x32xbf16>, vector<32x32xbf16>, vector<16x32xf32> -> vector<16x32xf32>
    %c248 = arith.constant 248 : index
    %c0_82 = arith.constant 0 : index
    %206 = vector.load %arg2[%c248, %c0_82] : memref<504x128xf32, #tpu.memory_space<vmem>>, vector<1x32xf32>
    %207 = vector.broadcast %206 : vector<1x32xf32> to vector<16x32xf32>
    %208 = arith.addf %205, %207 : vector<16x32xf32>
    %209 = arith.truncf %208 : vector<16x32xf32> to vector<16x32xbf16>
    %cst_83 = arith.constant dense<0.000000e+00> : vector<16x16xf32>
    %210 = tpu.matmul %209, %202, %cst_83 {dimension_numbers = #tpu.dot_dimension_numbers<[1], [1], [0], [0], [0, 0, 1, 0], [], []>} : vector<16x32xbf16>, vector<16x32xbf16>, vector<16x16xf32> -> vector<16x16xf32>
    %211 = arith.addf %210, %18 : vector<16x16xf32>
    %cst_84 = arith.constant dense<0xFF800000> : vector<16xf32>
    %212 = vector.multi_reduction <maximumf>, %211, %cst_84 [1] : vector<16x16xf32> to vector<16xf32>
    %213 = vector.shape_cast %212 : vector<16xf32> to vector<16x1xf32>
    %214 = vector.broadcast %213 : vector<16x1xf32> to vector<16x16xf32>
    %215 = arith.subf %211, %214 : vector<16x16xf32>
    %216 = math.exp %215 : vector<16x16xf32>
    %cst_85 = arith.constant dense<0.000000e+00> : vector<16xf32>
    %217 = vector.multi_reduction <add>, %216, %cst_85 [1] : vector<16x16xf32> to vector<16xf32>
    %218 = vector.shape_cast %217 : vector<16xf32> to vector<16x1xf32>
    %219 = tpu.reciprocal %218 {approx = true} : vector<16x1xf32> -> vector<16x1xf32>
    %220 = vector.broadcast %219 : vector<16x1xf32> to vector<16x16xf32>
    %221 = arith.mulf %216, %220 : vector<16x16xf32>
    %222 = arith.truncf %221 : vector<16x16xf32> to vector<16x16xbf16>
    %c592 = arith.constant 592 : index
    %c0_86 = arith.constant 0 : index
    %223 = vector.load %arg1[%c592, %c0_86] : memref<1296x128xbf16, #tpu.memory_space<vmem>>, vector<32x32xbf16>
    %cst_87 = arith.constant dense<0.000000e+00> : vector<16x32xf32>
    %224 = tpu.matmul %203, %223, %cst_87 {dimension_numbers = #tpu.dot_dimension_numbers<[1], [0], [0], [1], [0, 0, 1, 1], [], []>} : vector<16x32xbf16>, vector<32x32xbf16>, vector<16x32xf32> -> vector<16x32xf32>
    %c256 = arith.constant 256 : index
    %c0_88 = arith.constant 0 : index
    %225 = vector.load %arg2[%c256, %c0_88] : memref<504x128xf32, #tpu.memory_space<vmem>>, vector<1x32xf32>
    %226 = vector.broadcast %225 : vector<1x32xf32> to vector<16x32xf32>
    %227 = arith.addf %224, %226 : vector<16x32xf32>
    %228 = arith.truncf %227 : vector<16x32xf32> to vector<16x32xbf16>
    %cst_89 = arith.constant dense<0.000000e+00> : vector<16x32xf32>
    %229 = tpu.matmul %222, %228, %cst_89 {dimension_numbers = #tpu.dot_dimension_numbers<[1], [0], [0], [1], [0, 0, 1, 1], [], []>} : vector<16x16xbf16>, vector<16x32xbf16>, vector<16x32xf32> -> vector<16x32xf32>
    %c624 = arith.constant 624 : index
    %c0_90 = arith.constant 0 : index
    %230 = vector.load %arg1[%c624, %c0_90] : memref<1296x128xbf16, #tpu.memory_space<vmem>>, vector<32x32xbf16>
    %cst_91 = arith.constant dense<0.000000e+00> : vector<16x32xf32>
    %231 = tpu.matmul %202, %230, %cst_91 {dimension_numbers = #tpu.dot_dimension_numbers<[1], [0], [0], [1], [0, 0, 1, 1], [], []>} : vector<16x32xbf16>, vector<32x32xbf16>, vector<16x32xf32> -> vector<16x32xf32>
    %c264 = arith.constant 264 : index
    %c0_92 = arith.constant 0 : index
    %232 = vector.load %arg2[%c264, %c0_92] : memref<504x128xf32, #tpu.memory_space<vmem>>, vector<1x32xf32>
    %233 = vector.broadcast %232 : vector<1x32xf32> to vector<16x32xf32>
    %234 = arith.addf %231, %233 : vector<16x32xf32>
    %235 = arith.truncf %234 : vector<16x32xf32> to vector<16x32xbf16>
    %cst_93 = arith.constant dense<0.000000e+00> : vector<16x16xf32>
    %236 = tpu.matmul %235, %202, %cst_93 {dimension_numbers = #tpu.dot_dimension_numbers<[1], [1], [0], [0], [0, 0, 1, 0], [], []>} : vector<16x32xbf16>, vector<16x32xbf16>, vector<16x16xf32> -> vector<16x16xf32>
    %237 = arith.addf %236, %18 : vector<16x16xf32>
    %cst_94 = arith.constant dense<0xFF800000> : vector<16xf32>
    %238 = vector.multi_reduction <maximumf>, %237, %cst_94 [1] : vector<16x16xf32> to vector<16xf32>
    %239 = vector.shape_cast %238 : vector<16xf32> to vector<16x1xf32>
    %240 = vector.broadcast %239 : vector<16x1xf32> to vector<16x16xf32>
    %241 = arith.subf %237, %240 : vector<16x16xf32>
    %242 = math.exp %241 : vector<16x16xf32>
    %cst_95 = arith.constant dense<0.000000e+00> : vector<16xf32>
    %243 = vector.multi_reduction <add>, %242, %cst_95 [1] : vector<16x16xf32> to vector<16xf32>
    %244 = vector.shape_cast %243 : vector<16xf32> to vector<16x1xf32>
    %245 = tpu.reciprocal %244 {approx = true} : vector<16x1xf32> -> vector<16x1xf32>
    %246 = vector.broadcast %245 : vector<16x1xf32> to vector<16x16xf32>
    %247 = arith.mulf %242, %246 : vector<16x16xf32>
    %248 = arith.truncf %247 : vector<16x16xf32> to vector<16x16xbf16>
    %c656 = arith.constant 656 : index
    %c0_96 = arith.constant 0 : index
    %249 = vector.load %arg1[%c656, %c0_96] : memref<1296x128xbf16, #tpu.memory_space<vmem>>, vector<32x32xbf16>
    %cst_97 = arith.constant dense<0.000000e+00> : vector<16x32xf32>
    %250 = tpu.matmul %203, %249, %cst_97 {dimension_numbers = #tpu.dot_dimension_numbers<[1], [0], [0], [1], [0, 0, 1, 1], [], []>} : vector<16x32xbf16>, vector<32x32xbf16>, vector<16x32xf32> -> vector<16x32xf32>
    %c272_98 = arith.constant 272 : index
    %c0_99 = arith.constant 0 : index
    %251 = vector.load %arg2[%c272_98, %c0_99] : memref<504x128xf32, #tpu.memory_space<vmem>>, vector<1x32xf32>
    %252 = vector.broadcast %251 : vector<1x32xf32> to vector<16x32xf32>
    %253 = arith.addf %250, %252 : vector<16x32xf32>
    %254 = arith.truncf %253 : vector<16x32xf32> to vector<16x32xbf16>
    %cst_100 = arith.constant dense<0.000000e+00> : vector<16x32xf32>
    %255 = tpu.matmul %248, %254, %cst_100 {dimension_numbers = #tpu.dot_dimension_numbers<[1], [0], [0], [1], [0, 0, 1, 1], [], []>} : vector<16x16xbf16>, vector<16x32xbf16>, vector<16x32xf32> -> vector<16x32xf32>
    %256 = arith.addf %229, %255 : vector<16x32xf32>
    %c688 = arith.constant 688 : index
    %c0_101 = arith.constant 0 : index
    %257 = vector.load %arg1[%c688, %c0_101] : memref<1296x128xbf16, #tpu.memory_space<vmem>>, vector<32x32xbf16>
    %cst_102 = arith.constant dense<0.000000e+00> : vector<16x32xf32>
    %258 = tpu.matmul %202, %257, %cst_102 {dimension_numbers = #tpu.dot_dimension_numbers<[1], [0], [0], [1], [0, 0, 1, 1], [], []>} : vector<16x32xbf16>, vector<32x32xbf16>, vector<16x32xf32> -> vector<16x32xf32>
    %c280 = arith.constant 280 : index
    %c0_103 = arith.constant 0 : index
    %259 = vector.load %arg2[%c280, %c0_103] : memref<504x128xf32, #tpu.memory_space<vmem>>, vector<1x32xf32>
    %260 = vector.broadcast %259 : vector<1x32xf32> to vector<16x32xf32>
    %261 = arith.addf %258, %260 : vector<16x32xf32>
    %262 = arith.truncf %261 : vector<16x32xf32> to vector<16x32xbf16>
    %cst_104 = arith.constant dense<0.000000e+00> : vector<16x16xf32>
    %263 = tpu.matmul %262, %202, %cst_104 {dimension_numbers = #tpu.dot_dimension_numbers<[1], [1], [0], [0], [0, 0, 1, 0], [], []>} : vector<16x32xbf16>, vector<16x32xbf16>, vector<16x16xf32> -> vector<16x16xf32>
    %264 = arith.addf %263, %18 : vector<16x16xf32>
    %cst_105 = arith.constant dense<0xFF800000> : vector<16xf32>
    %265 = vector.multi_reduction <maximumf>, %264, %cst_105 [1] : vector<16x16xf32> to vector<16xf32>
    %266 = vector.shape_cast %265 : vector<16xf32> to vector<16x1xf32>
    %267 = vector.broadcast %266 : vector<16x1xf32> to vector<16x16xf32>
    %268 = arith.subf %264, %267 : vector<16x16xf32>
    %269 = math.exp %268 : vector<16x16xf32>
    %cst_106 = arith.constant dense<0.000000e+00> : vector<16xf32>
    %270 = vector.multi_reduction <add>, %269, %cst_106 [1] : vector<16x16xf32> to vector<16xf32>
    %271 = vector.shape_cast %270 : vector<16xf32> to vector<16x1xf32>
    %272 = tpu.reciprocal %271 {approx = true} : vector<16x1xf32> -> vector<16x1xf32>
    %273 = vector.broadcast %272 : vector<16x1xf32> to vector<16x16xf32>
    %274 = arith.mulf %269, %273 : vector<16x16xf32>
    %275 = arith.truncf %274 : vector<16x16xf32> to vector<16x16xbf16>
    %c720 = arith.constant 720 : index
    %c0_107 = arith.constant 0 : index
    %276 = vector.load %arg1[%c720, %c0_107] : memref<1296x128xbf16, #tpu.memory_space<vmem>>, vector<32x32xbf16>
    %cst_108 = arith.constant dense<0.000000e+00> : vector<16x32xf32>
    %277 = tpu.matmul %203, %276, %cst_108 {dimension_numbers = #tpu.dot_dimension_numbers<[1], [0], [0], [1], [0, 0, 1, 1], [], []>} : vector<16x32xbf16>, vector<32x32xbf16>, vector<16x32xf32> -> vector<16x32xf32>
    %c288 = arith.constant 288 : index
    %c0_109 = arith.constant 0 : index
    %278 = vector.load %arg2[%c288, %c0_109] : memref<504x128xf32, #tpu.memory_space<vmem>>, vector<1x32xf32>
    %279 = vector.broadcast %278 : vector<1x32xf32> to vector<16x32xf32>
    %280 = arith.addf %277, %279 : vector<16x32xf32>
    %281 = arith.truncf %280 : vector<16x32xf32> to vector<16x32xbf16>
    %cst_110 = arith.constant dense<0.000000e+00> : vector<16x32xf32>
    %282 = tpu.matmul %275, %281, %cst_110 {dimension_numbers = #tpu.dot_dimension_numbers<[1], [0], [0], [1], [0, 0, 1, 1], [], []>} : vector<16x16xbf16>, vector<16x32xbf16>, vector<16x32xf32> -> vector<16x32xf32>
    %283 = arith.addf %256, %282 : vector<16x32xf32>
    %c752 = arith.constant 752 : index
    %c0_111 = arith.constant 0 : index
    %284 = vector.load %arg1[%c752, %c0_111] : memref<1296x128xbf16, #tpu.memory_space<vmem>>, vector<32x32xbf16>
    %cst_112 = arith.constant dense<0.000000e+00> : vector<16x32xf32>
    %285 = tpu.matmul %202, %284, %cst_112 {dimension_numbers = #tpu.dot_dimension_numbers<[1], [0], [0], [1], [0, 0, 1, 1], [], []>} : vector<16x32xbf16>, vector<32x32xbf16>, vector<16x32xf32> -> vector<16x32xf32>
    %c296 = arith.constant 296 : index
    %c0_113 = arith.constant 0 : index
    %286 = vector.load %arg2[%c296, %c0_113] : memref<504x128xf32, #tpu.memory_space<vmem>>, vector<1x32xf32>
    %287 = vector.broadcast %286 : vector<1x32xf32> to vector<16x32xf32>
    %288 = arith.addf %285, %287 : vector<16x32xf32>
    %289 = arith.truncf %288 : vector<16x32xf32> to vector<16x32xbf16>
    %cst_114 = arith.constant dense<0.000000e+00> : vector<16x16xf32>
    %290 = tpu.matmul %289, %202, %cst_114 {dimension_numbers = #tpu.dot_dimension_numbers<[1], [1], [0], [0], [0, 0, 1, 0], [], []>} : vector<16x32xbf16>, vector<16x32xbf16>, vector<16x16xf32> -> vector<16x16xf32>
    %291 = arith.addf %290, %18 : vector<16x16xf32>
    %cst_115 = arith.constant dense<0xFF800000> : vector<16xf32>
    %292 = vector.multi_reduction <maximumf>, %291, %cst_115 [1] : vector<16x16xf32> to vector<16xf32>
    %293 = vector.shape_cast %292 : vector<16xf32> to vector<16x1xf32>
    %294 = vector.broadcast %293 : vector<16x1xf32> to vector<16x16xf32>
    %295 = arith.subf %291, %294 : vector<16x16xf32>
    %296 = math.exp %295 : vector<16x16xf32>
    %cst_116 = arith.constant dense<0.000000e+00> : vector<16xf32>
    %297 = vector.multi_reduction <add>, %296, %cst_116 [1] : vector<16x16xf32> to vector<16xf32>
    %298 = vector.shape_cast %297 : vector<16xf32> to vector<16x1xf32>
    %299 = tpu.reciprocal %298 {approx = true} : vector<16x1xf32> -> vector<16x1xf32>
    %300 = vector.broadcast %299 : vector<16x1xf32> to vector<16x16xf32>
    %301 = arith.mulf %296, %300 : vector<16x16xf32>
    %302 = arith.truncf %301 : vector<16x16xf32> to vector<16x16xbf16>
    %c784 = arith.constant 784 : index
    %c0_117 = arith.constant 0 : index
    %303 = vector.load %arg1[%c784, %c0_117] : memref<1296x128xbf16, #tpu.memory_space<vmem>>, vector<32x32xbf16>
    %cst_118 = arith.constant dense<0.000000e+00> : vector<16x32xf32>
    %304 = tpu.matmul %203, %303, %cst_118 {dimension_numbers = #tpu.dot_dimension_numbers<[1], [0], [0], [1], [0, 0, 1, 1], [], []>} : vector<16x32xbf16>, vector<32x32xbf16>, vector<16x32xf32> -> vector<16x32xf32>
    %c304_119 = arith.constant 304 : index
    %c0_120 = arith.constant 0 : index
    %305 = vector.load %arg2[%c304_119, %c0_120] : memref<504x128xf32, #tpu.memory_space<vmem>>, vector<1x32xf32>
    %306 = vector.broadcast %305 : vector<1x32xf32> to vector<16x32xf32>
    %307 = arith.addf %304, %306 : vector<16x32xf32>
    %308 = arith.truncf %307 : vector<16x32xf32> to vector<16x32xbf16>
    %cst_121 = arith.constant dense<0.000000e+00> : vector<16x32xf32>
    %309 = tpu.matmul %302, %308, %cst_121 {dimension_numbers = #tpu.dot_dimension_numbers<[1], [0], [0], [1], [0, 0, 1, 1], [], []>} : vector<16x16xbf16>, vector<16x32xbf16>, vector<16x32xf32> -> vector<16x32xf32>
    %310 = arith.addf %283, %309 : vector<16x32xf32>
    %c312 = arith.constant 312 : index
    %c0_122 = arith.constant 0 : index
    %311 = vector.load %arg2[%c312, %c0_122] : memref<504x128xf32, #tpu.memory_space<vmem>>, vector<1x32xf32>
    %312 = vector.broadcast %311 : vector<1x32xf32> to vector<16x32xf32>
    %313 = arith.addf %310, %312 : vector<16x32xf32>
    %314 = arith.addf %200, %313 : vector<16x32xf32>
    %c408 = arith.constant 408 : index
    %c0_123 = arith.constant 0 : index
    %315 = vector.load %arg2[%c408, %c0_123] : memref<504x128xf32, #tpu.memory_space<vmem>>, vector<1x32xf32>
    %c416 = arith.constant 416 : index
    %c0_124 = arith.constant 0 : index
    %316 = vector.load %arg2[%c416, %c0_124] : memref<504x128xf32, #tpu.memory_space<vmem>>, vector<1x32xf32>
    %cst_125 = arith.constant dense<0.000000e+00> : vector<16xf32>
    %317 = vector.multi_reduction <add>, %314, %cst_125 [1] : vector<16x32xf32> to vector<16xf32>
    %318 = vector.shape_cast %317 : vector<16xf32> to vector<16x1xf32>
    %cst_126 = arith.constant 3.200000e+01 : f32
    %319 = vector.broadcast %cst_126 : f32 to vector<16x1xf32>
    %320 = arith.divf %318, %319 : vector<16x1xf32>
    %321 = vector.broadcast %320 : vector<16x1xf32> to vector<16x32xf32>
    %322 = arith.subf %314, %321 : vector<16x32xf32>
    %323 = arith.mulf %322, %322 : vector<16x32xf32>
    %cst_127 = arith.constant dense<0.000000e+00> : vector<16xf32>
    %324 = vector.multi_reduction <add>, %323, %cst_127 [1] : vector<16x32xf32> to vector<16xf32>
    %325 = vector.shape_cast %324 : vector<16xf32> to vector<16x1xf32>
    %cst_128 = arith.constant 3.200000e+01 : f32
    %326 = vector.broadcast %cst_128 : f32 to vector<16x1xf32>
    %327 = arith.divf %325, %326 : vector<16x1xf32>
    %328 = vector.broadcast %320 : vector<16x1xf32> to vector<16x32xf32>
    %329 = arith.subf %314, %328 : vector<16x32xf32>
    %cst_129 = arith.constant 9.99999974E-6 : f32
    %330 = vector.broadcast %cst_129 : f32 to vector<16x1xf32>
    %331 = arith.addf %327, %330 : vector<16x1xf32>
    %332 = math.rsqrt %331 : vector<16x1xf32>
    %333 = vector.broadcast %332 : vector<16x1xf32> to vector<16x32xf32>
    %334 = arith.mulf %329, %333 : vector<16x32xf32>
    %335 = vector.broadcast %315 : vector<1x32xf32> to vector<16x32xf32>
    %336 = arith.mulf %334, %335 : vector<16x32xf32>
    %337 = vector.broadcast %316 : vector<1x32xf32> to vector<16x32xf32>
    %338 = arith.addf %336, %337 : vector<16x32xf32>
    %339 = arith.addf %338, %16 : vector<16x32xf32>
    %340 = arith.truncf %339 : vector<16x32xf32> to vector<16x32xbf16>
    %c816 = arith.constant 816 : index
    %c0_130 = arith.constant 0 : index
    %341 = vector.load %arg1[%c816, %c0_130] : memref<1296x128xbf16, #tpu.memory_space<vmem>>, vector<32x32xbf16>
    %cst_131 = arith.constant dense<0.000000e+00> : vector<16x32xf32>
    %342 = tpu.matmul %340, %341, %cst_131 {dimension_numbers = #tpu.dot_dimension_numbers<[1], [0], [0], [1], [0, 0, 1, 1], [], []>} : vector<16x32xbf16>, vector<32x32xbf16>, vector<16x32xf32> -> vector<16x32xf32>
    %c320 = arith.constant 320 : index
    %c0_132 = arith.constant 0 : index
    %343 = vector.load %arg2[%c320, %c0_132] : memref<504x128xf32, #tpu.memory_space<vmem>>, vector<1x32xf32>
    %344 = vector.broadcast %343 : vector<1x32xf32> to vector<16x32xf32>
    %345 = arith.addf %342, %344 : vector<16x32xf32>
    %346 = arith.truncf %345 : vector<16x32xf32> to vector<16x32xbf16>
    %cst_133 = arith.constant dense<0.000000e+00> : vector<16x32xf32>
    %347 = tpu.matmul %346, %198, %cst_133 {dimension_numbers = #tpu.dot_dimension_numbers<[1], [1], [0], [0], [0, 0, 1, 0], [], []>} : vector<16x32xbf16>, vector<32x32xbf16>, vector<16x32xf32> -> vector<16x32xf32>
    %348 = arith.addf %347, %19 : vector<16x32xf32>
    %cst_134 = arith.constant dense<0xFF800000> : vector<16xf32>
    %349 = vector.multi_reduction <maximumf>, %348, %cst_134 [1] : vector<16x32xf32> to vector<16xf32>
    %350 = vector.shape_cast %349 : vector<16xf32> to vector<16x1xf32>
    %351 = vector.broadcast %350 : vector<16x1xf32> to vector<16x32xf32>
    %352 = arith.subf %348, %351 : vector<16x32xf32>
    %353 = math.exp %352 : vector<16x32xf32>
    %cst_135 = arith.constant dense<0.000000e+00> : vector<16xf32>
    %354 = vector.multi_reduction <add>, %353, %cst_135 [1] : vector<16x32xf32> to vector<16xf32>
    %355 = vector.shape_cast %354 : vector<16xf32> to vector<16x1xf32>
    %356 = tpu.reciprocal %355 {approx = true} : vector<16x1xf32> -> vector<16x1xf32>
    %357 = vector.broadcast %356 : vector<16x1xf32> to vector<16x32xf32>
    %358 = arith.mulf %353, %357 : vector<16x32xf32>
    %359 = arith.truncf %358 : vector<16x32xf32> to vector<16x32xbf16>
    %c848 = arith.constant 848 : index
    %c0_136 = arith.constant 0 : index
    %360 = vector.load %arg1[%c848, %c0_136] : memref<1296x128xbf16, #tpu.memory_space<vmem>>, vector<32x32xbf16>
    %cst_137 = arith.constant dense<0.000000e+00> : vector<32x32xf32>
    %361 = tpu.matmul %199, %360, %cst_137 {dimension_numbers = #tpu.dot_dimension_numbers<[1], [0], [0], [1], [0, 0, 1, 1], [], []>} : vector<32x32xbf16>, vector<32x32xbf16>, vector<32x32xf32> -> vector<32x32xf32>
    %c328 = arith.constant 328 : index
    %c0_138 = arith.constant 0 : index
    %362 = vector.load %arg2[%c328, %c0_138] : memref<504x128xf32, #tpu.memory_space<vmem>>, vector<1x32xf32>
    %363 = vector.broadcast %362 : vector<1x32xf32> to vector<32x32xf32>
    %364 = arith.addf %361, %363 : vector<32x32xf32>
    %365 = arith.truncf %364 : vector<32x32xf32> to vector<32x32xbf16>
    %cst_139 = arith.constant dense<0.000000e+00> : vector<16x32xf32>
    %366 = tpu.matmul %359, %365, %cst_139 {dimension_numbers = #tpu.dot_dimension_numbers<[1], [0], [0], [1], [0, 0, 1, 1], [], []>} : vector<16x32xbf16>, vector<32x32xbf16>, vector<16x32xf32> -> vector<16x32xf32>
    %c880 = arith.constant 880 : index
    %c0_140 = arith.constant 0 : index
    %367 = vector.load %arg1[%c880, %c0_140] : memref<1296x128xbf16, #tpu.memory_space<vmem>>, vector<32x32xbf16>
    %cst_141 = arith.constant dense<0.000000e+00> : vector<16x32xf32>
    %368 = tpu.matmul %340, %367, %cst_141 {dimension_numbers = #tpu.dot_dimension_numbers<[1], [0], [0], [1], [0, 0, 1, 1], [], []>} : vector<16x32xbf16>, vector<32x32xbf16>, vector<16x32xf32> -> vector<16x32xf32>
    %c336_142 = arith.constant 336 : index
    %c0_143 = arith.constant 0 : index
    %369 = vector.load %arg2[%c336_142, %c0_143] : memref<504x128xf32, #tpu.memory_space<vmem>>, vector<1x32xf32>
    %370 = vector.broadcast %369 : vector<1x32xf32> to vector<16x32xf32>
    %371 = arith.addf %368, %370 : vector<16x32xf32>
    %372 = arith.truncf %371 : vector<16x32xf32> to vector<16x32xbf16>
    %cst_144 = arith.constant dense<0.000000e+00> : vector<16x32xf32>
    %373 = tpu.matmul %372, %198, %cst_144 {dimension_numbers = #tpu.dot_dimension_numbers<[1], [1], [0], [0], [0, 0, 1, 0], [], []>} : vector<16x32xbf16>, vector<32x32xbf16>, vector<16x32xf32> -> vector<16x32xf32>
    %374 = arith.addf %373, %19 : vector<16x32xf32>
    %cst_145 = arith.constant dense<0xFF800000> : vector<16xf32>
    %375 = vector.multi_reduction <maximumf>, %374, %cst_145 [1] : vector<16x32xf32> to vector<16xf32>
    %376 = vector.shape_cast %375 : vector<16xf32> to vector<16x1xf32>
    %377 = vector.broadcast %376 : vector<16x1xf32> to vector<16x32xf32>
    %378 = arith.subf %374, %377 : vector<16x32xf32>
    %379 = math.exp %378 : vector<16x32xf32>
    %cst_146 = arith.constant dense<0.000000e+00> : vector<16xf32>
    %380 = vector.multi_reduction <add>, %379, %cst_146 [1] : vector<16x32xf32> to vector<16xf32>
    %381 = vector.shape_cast %380 : vector<16xf32> to vector<16x1xf32>
    %382 = tpu.reciprocal %381 {approx = true} : vector<16x1xf32> -> vector<16x1xf32>
    %383 = vector.broadcast %382 : vector<16x1xf32> to vector<16x32xf32>
    %384 = arith.mulf %379, %383 : vector<16x32xf32>
    %385 = arith.truncf %384 : vector<16x32xf32> to vector<16x32xbf16>
    %c912 = arith.constant 912 : index
    %c0_147 = arith.constant 0 : index
    %386 = vector.load %arg1[%c912, %c0_147] : memref<1296x128xbf16, #tpu.memory_space<vmem>>, vector<32x32xbf16>
    %cst_148 = arith.constant dense<0.000000e+00> : vector<32x32xf32>
    %387 = tpu.matmul %199, %386, %cst_148 {dimension_numbers = #tpu.dot_dimension_numbers<[1], [0], [0], [1], [0, 0, 1, 1], [], []>} : vector<32x32xbf16>, vector<32x32xbf16>, vector<32x32xf32> -> vector<32x32xf32>
    %c344 = arith.constant 344 : index
    %c0_149 = arith.constant 0 : index
    %388 = vector.load %arg2[%c344, %c0_149] : memref<504x128xf32, #tpu.memory_space<vmem>>, vector<1x32xf32>
    %389 = vector.broadcast %388 : vector<1x32xf32> to vector<32x32xf32>
    %390 = arith.addf %387, %389 : vector<32x32xf32>
    %391 = arith.truncf %390 : vector<32x32xf32> to vector<32x32xbf16>
    %cst_150 = arith.constant dense<0.000000e+00> : vector<16x32xf32>
    %392 = tpu.matmul %385, %391, %cst_150 {dimension_numbers = #tpu.dot_dimension_numbers<[1], [0], [0], [1], [0, 0, 1, 1], [], []>} : vector<16x32xbf16>, vector<32x32xbf16>, vector<16x32xf32> -> vector<16x32xf32>
    %393 = arith.addf %366, %392 : vector<16x32xf32>
    %c944 = arith.constant 944 : index
    %c0_151 = arith.constant 0 : index
    %394 = vector.load %arg1[%c944, %c0_151] : memref<1296x128xbf16, #tpu.memory_space<vmem>>, vector<32x32xbf16>
    %cst_152 = arith.constant dense<0.000000e+00> : vector<16x32xf32>
    %395 = tpu.matmul %340, %394, %cst_152 {dimension_numbers = #tpu.dot_dimension_numbers<[1], [0], [0], [1], [0, 0, 1, 1], [], []>} : vector<16x32xbf16>, vector<32x32xbf16>, vector<16x32xf32> -> vector<16x32xf32>
    %c352 = arith.constant 352 : index
    %c0_153 = arith.constant 0 : index
    %396 = vector.load %arg2[%c352, %c0_153] : memref<504x128xf32, #tpu.memory_space<vmem>>, vector<1x32xf32>
    %397 = vector.broadcast %396 : vector<1x32xf32> to vector<16x32xf32>
    %398 = arith.addf %395, %397 : vector<16x32xf32>
    %399 = arith.truncf %398 : vector<16x32xf32> to vector<16x32xbf16>
    %cst_154 = arith.constant dense<0.000000e+00> : vector<16x32xf32>
    %400 = tpu.matmul %399, %198, %cst_154 {dimension_numbers = #tpu.dot_dimension_numbers<[1], [1], [0], [0], [0, 0, 1, 0], [], []>} : vector<16x32xbf16>, vector<32x32xbf16>, vector<16x32xf32> -> vector<16x32xf32>
    %401 = arith.addf %400, %19 : vector<16x32xf32>
    %cst_155 = arith.constant dense<0xFF800000> : vector<16xf32>
    %402 = vector.multi_reduction <maximumf>, %401, %cst_155 [1] : vector<16x32xf32> to vector<16xf32>
    %403 = vector.shape_cast %402 : vector<16xf32> to vector<16x1xf32>
    %404 = vector.broadcast %403 : vector<16x1xf32> to vector<16x32xf32>
    %405 = arith.subf %401, %404 : vector<16x32xf32>
    %406 = math.exp %405 : vector<16x32xf32>
    %cst_156 = arith.constant dense<0.000000e+00> : vector<16xf32>
    %407 = vector.multi_reduction <add>, %406, %cst_156 [1] : vector<16x32xf32> to vector<16xf32>
    %408 = vector.shape_cast %407 : vector<16xf32> to vector<16x1xf32>
    %409 = tpu.reciprocal %408 {approx = true} : vector<16x1xf32> -> vector<16x1xf32>
    %410 = vector.broadcast %409 : vector<16x1xf32> to vector<16x32xf32>
    %411 = arith.mulf %406, %410 : vector<16x32xf32>
    %412 = arith.truncf %411 : vector<16x32xf32> to vector<16x32xbf16>
    %c976 = arith.constant 976 : index
    %c0_157 = arith.constant 0 : index
    %413 = vector.load %arg1[%c976, %c0_157] : memref<1296x128xbf16, #tpu.memory_space<vmem>>, vector<32x32xbf16>
    %cst_158 = arith.constant dense<0.000000e+00> : vector<32x32xf32>
    %414 = tpu.matmul %199, %413, %cst_158 {dimension_numbers = #tpu.dot_dimension_numbers<[1], [0], [0], [1], [0, 0, 1, 1], [], []>} : vector<32x32xbf16>, vector<32x32xbf16>, vector<32x32xf32> -> vector<32x32xf32>
    %c360 = arith.constant 360 : index
    %c0_159 = arith.constant 0 : index
    %415 = vector.load %arg2[%c360, %c0_159] : memref<504x128xf32, #tpu.memory_space<vmem>>, vector<1x32xf32>
    %416 = vector.broadcast %415 : vector<1x32xf32> to vector<32x32xf32>
    %417 = arith.addf %414, %416 : vector<32x32xf32>
    %418 = arith.truncf %417 : vector<32x32xf32> to vector<32x32xbf16>
    %cst_160 = arith.constant dense<0.000000e+00> : vector<16x32xf32>
    %419 = tpu.matmul %412, %418, %cst_160 {dimension_numbers = #tpu.dot_dimension_numbers<[1], [0], [0], [1], [0, 0, 1, 1], [], []>} : vector<16x32xbf16>, vector<32x32xbf16>, vector<16x32xf32> -> vector<16x32xf32>
    %420 = arith.addf %393, %419 : vector<16x32xf32>
    %c1008 = arith.constant 1008 : index
    %c0_161 = arith.constant 0 : index
    %421 = vector.load %arg1[%c1008, %c0_161] : memref<1296x128xbf16, #tpu.memory_space<vmem>>, vector<32x32xbf16>
    %cst_162 = arith.constant dense<0.000000e+00> : vector<16x32xf32>
    %422 = tpu.matmul %340, %421, %cst_162 {dimension_numbers = #tpu.dot_dimension_numbers<[1], [0], [0], [1], [0, 0, 1, 1], [], []>} : vector<16x32xbf16>, vector<32x32xbf16>, vector<16x32xf32> -> vector<16x32xf32>
    %c368_163 = arith.constant 368 : index
    %c0_164 = arith.constant 0 : index
    %423 = vector.load %arg2[%c368_163, %c0_164] : memref<504x128xf32, #tpu.memory_space<vmem>>, vector<1x32xf32>
    %424 = vector.broadcast %423 : vector<1x32xf32> to vector<16x32xf32>
    %425 = arith.addf %422, %424 : vector<16x32xf32>
    %426 = arith.truncf %425 : vector<16x32xf32> to vector<16x32xbf16>
    %cst_165 = arith.constant dense<0.000000e+00> : vector<16x32xf32>
    %427 = tpu.matmul %426, %198, %cst_165 {dimension_numbers = #tpu.dot_dimension_numbers<[1], [1], [0], [0], [0, 0, 1, 0], [], []>} : vector<16x32xbf16>, vector<32x32xbf16>, vector<16x32xf32> -> vector<16x32xf32>
    %428 = arith.addf %427, %19 : vector<16x32xf32>
    %cst_166 = arith.constant dense<0xFF800000> : vector<16xf32>
    %429 = vector.multi_reduction <maximumf>, %428, %cst_166 [1] : vector<16x32xf32> to vector<16xf32>
    %430 = vector.shape_cast %429 : vector<16xf32> to vector<16x1xf32>
    %431 = vector.broadcast %430 : vector<16x1xf32> to vector<16x32xf32>
    %432 = arith.subf %428, %431 : vector<16x32xf32>
    %433 = math.exp %432 : vector<16x32xf32>
    %cst_167 = arith.constant dense<0.000000e+00> : vector<16xf32>
    %434 = vector.multi_reduction <add>, %433, %cst_167 [1] : vector<16x32xf32> to vector<16xf32>
    %435 = vector.shape_cast %434 : vector<16xf32> to vector<16x1xf32>
    %436 = tpu.reciprocal %435 {approx = true} : vector<16x1xf32> -> vector<16x1xf32>
    %437 = vector.broadcast %436 : vector<16x1xf32> to vector<16x32xf32>
    %438 = arith.mulf %433, %437 : vector<16x32xf32>
    %439 = arith.truncf %438 : vector<16x32xf32> to vector<16x32xbf16>
    %c1040 = arith.constant 1040 : index
    %c0_168 = arith.constant 0 : index
    %440 = vector.load %arg1[%c1040, %c0_168] : memref<1296x128xbf16, #tpu.memory_space<vmem>>, vector<32x32xbf16>
    %cst_169 = arith.constant dense<0.000000e+00> : vector<32x32xf32>
    %441 = tpu.matmul %199, %440, %cst_169 {dimension_numbers = #tpu.dot_dimension_numbers<[1], [0], [0], [1], [0, 0, 1, 1], [], []>} : vector<32x32xbf16>, vector<32x32xbf16>, vector<32x32xf32> -> vector<32x32xf32>
    %c376 = arith.constant 376 : index
    %c0_170 = arith.constant 0 : index
    %442 = vector.load %arg2[%c376, %c0_170] : memref<504x128xf32, #tpu.memory_space<vmem>>, vector<1x32xf32>
    %443 = vector.broadcast %442 : vector<1x32xf32> to vector<32x32xf32>
    %444 = arith.addf %441, %443 : vector<32x32xf32>
    %445 = arith.truncf %444 : vector<32x32xf32> to vector<32x32xbf16>
    %cst_171 = arith.constant dense<0.000000e+00> : vector<16x32xf32>
    %446 = tpu.matmul %439, %445, %cst_171 {dimension_numbers = #tpu.dot_dimension_numbers<[1], [0], [0], [1], [0, 0, 1, 1], [], []>} : vector<16x32xbf16>, vector<32x32xbf16>, vector<16x32xf32> -> vector<16x32xf32>
    %447 = arith.addf %420, %446 : vector<16x32xf32>
    %c384 = arith.constant 384 : index
    %c0_172 = arith.constant 0 : index
    %448 = vector.load %arg2[%c384, %c0_172] : memref<504x128xf32, #tpu.memory_space<vmem>>, vector<1x32xf32>
    %449 = vector.broadcast %448 : vector<1x32xf32> to vector<16x32xf32>
    %450 = arith.addf %447, %449 : vector<16x32xf32>
    %451 = arith.addf %338, %450 : vector<16x32xf32>
    %c424 = arith.constant 424 : index
    %c0_173 = arith.constant 0 : index
    %452 = vector.load %arg2[%c424, %c0_173] : memref<504x128xf32, #tpu.memory_space<vmem>>, vector<1x32xf32>
    %c432_174 = arith.constant 432 : index
    %c0_175 = arith.constant 0 : index
    %453 = vector.load %arg2[%c432_174, %c0_175] : memref<504x128xf32, #tpu.memory_space<vmem>>, vector<1x32xf32>
    %cst_176 = arith.constant dense<0.000000e+00> : vector<16xf32>
    %454 = vector.multi_reduction <add>, %451, %cst_176 [1] : vector<16x32xf32> to vector<16xf32>
    %455 = vector.shape_cast %454 : vector<16xf32> to vector<16x1xf32>
    %cst_177 = arith.constant 3.200000e+01 : f32
    %456 = vector.broadcast %cst_177 : f32 to vector<16x1xf32>
    %457 = arith.divf %455, %456 : vector<16x1xf32>
    %458 = vector.broadcast %457 : vector<16x1xf32> to vector<16x32xf32>
    %459 = arith.subf %451, %458 : vector<16x32xf32>
    %460 = arith.mulf %459, %459 : vector<16x32xf32>
    %cst_178 = arith.constant dense<0.000000e+00> : vector<16xf32>
    %461 = vector.multi_reduction <add>, %460, %cst_178 [1] : vector<16x32xf32> to vector<16xf32>
    %462 = vector.shape_cast %461 : vector<16xf32> to vector<16x1xf32>
    %cst_179 = arith.constant 3.200000e+01 : f32
    %463 = vector.broadcast %cst_179 : f32 to vector<16x1xf32>
    %464 = arith.divf %462, %463 : vector<16x1xf32>
    %465 = vector.broadcast %457 : vector<16x1xf32> to vector<16x32xf32>
    %466 = arith.subf %451, %465 : vector<16x32xf32>
    %cst_180 = arith.constant 9.99999974E-6 : f32
    %467 = vector.broadcast %cst_180 : f32 to vector<16x1xf32>
    %468 = arith.addf %464, %467 : vector<16x1xf32>
    %469 = math.rsqrt %468 : vector<16x1xf32>
    %470 = vector.broadcast %469 : vector<16x1xf32> to vector<16x32xf32>
    %471 = arith.mulf %466, %470 : vector<16x32xf32>
    %472 = vector.broadcast %452 : vector<1x32xf32> to vector<16x32xf32>
    %473 = arith.mulf %471, %472 : vector<16x32xf32>
    %474 = vector.broadcast %453 : vector<1x32xf32> to vector<16x32xf32>
    %475 = arith.addf %473, %474 : vector<16x32xf32>
    %476 = arith.truncf %475 : vector<16x32xf32> to vector<16x32xbf16>
    %c1072 = arith.constant 1072 : index
    %c0_181 = arith.constant 0 : index
    %477 = vector.load %arg1[%c1072, %c0_181] : memref<1296x128xbf16, #tpu.memory_space<vmem>>, vector<32x64xbf16>
    %cst_182 = arith.constant dense<0.000000e+00> : vector<16x64xf32>
    %478 = tpu.matmul %476, %477, %cst_182 {dimension_numbers = #tpu.dot_dimension_numbers<[1], [0], [0], [1], [0, 0, 1, 1], [], []>} : vector<16x32xbf16>, vector<32x64xbf16>, vector<16x64xf32> -> vector<16x64xf32>
    %c392 = arith.constant 392 : index
    %c0_183 = arith.constant 0 : index
    %479 = vector.load %arg2[%c392, %c0_183] : memref<504x128xf32, #tpu.memory_space<vmem>>, vector<1x64xf32>
    %480 = vector.broadcast %479 : vector<1x64xf32> to vector<16x64xf32>
    %481 = arith.addf %478, %480 : vector<16x64xf32>
    %cst_184 = arith.constant 0.000000e+00 : f32
    %482 = vector.broadcast %cst_184 : f32 to vector<16x64xf32>
    %483 = arith.maximumf %481, %482 : vector<16x64xf32>
    %484 = arith.truncf %483 : vector<16x64xf32> to vector<16x64xbf16>
    %c1104 = arith.constant 1104 : index
    %c0_185 = arith.constant 0 : index
    %485 = vector.load %arg1[%c1104, %c0_185] : memref<1296x128xbf16, #tpu.memory_space<vmem>>, vector<64x32xbf16>
    %cst_186 = arith.constant dense<0.000000e+00> : vector<16x32xf32>
    %486 = tpu.matmul %484, %485, %cst_186 {dimension_numbers = #tpu.dot_dimension_numbers<[1], [0], [0], [1], [0, 0, 1, 1], [], []>} : vector<16x64xbf16>, vector<64x32xbf16>, vector<16x32xf32> -> vector<16x32xf32>
    %c400_187 = arith.constant 400 : index
    %c0_188 = arith.constant 0 : index
    %487 = vector.load %arg2[%c400_187, %c0_188] : memref<504x128xf32, #tpu.memory_space<vmem>>, vector<1x32xf32>
    %488 = vector.broadcast %487 : vector<1x32xf32> to vector<16x32xf32>
    %489 = arith.addf %486, %488 : vector<16x32xf32>
    %490 = arith.addf %475, %489 : vector<16x32xf32>
    %c440 = arith.constant 440 : index
    %c0_189 = arith.constant 0 : index
    %491 = vector.load %arg2[%c440, %c0_189] : memref<504x128xf32, #tpu.memory_space<vmem>>, vector<1x32xf32>
    %c448 = arith.constant 448 : index
    %c0_190 = arith.constant 0 : index
    %492 = vector.load %arg2[%c448, %c0_190] : memref<504x128xf32, #tpu.memory_space<vmem>>, vector<1x32xf32>
    %cst_191 = arith.constant dense<0.000000e+00> : vector<16xf32>
    %493 = vector.multi_reduction <add>, %490, %cst_191 [1] : vector<16x32xf32> to vector<16xf32>
    %494 = vector.shape_cast %493 : vector<16xf32> to vector<16x1xf32>
    %cst_192 = arith.constant 3.200000e+01 : f32
    %495 = vector.broadcast %cst_192 : f32 to vector<16x1xf32>
    %496 = arith.divf %494, %495 : vector<16x1xf32>
    %497 = vector.broadcast %496 : vector<16x1xf32> to vector<16x32xf32>
    %498 = arith.subf %490, %497 : vector<16x32xf32>
    %499 = arith.mulf %498, %498 : vector<16x32xf32>
    %cst_193 = arith.constant dense<0.000000e+00> : vector<16xf32>
    %500 = vector.multi_reduction <add>, %499, %cst_193 [1] : vector<16x32xf32> to vector<16xf32>
    %501 = vector.shape_cast %500 : vector<16xf32> to vector<16x1xf32>
    %cst_194 = arith.constant 3.200000e+01 : f32
    %502 = vector.broadcast %cst_194 : f32 to vector<16x1xf32>
    %503 = arith.divf %501, %502 : vector<16x1xf32>
    %504 = vector.broadcast %496 : vector<16x1xf32> to vector<16x32xf32>
    %505 = arith.subf %490, %504 : vector<16x32xf32>
    %cst_195 = arith.constant 9.99999974E-6 : f32
    %506 = vector.broadcast %cst_195 : f32 to vector<16x1xf32>
    %507 = arith.addf %503, %506 : vector<16x1xf32>
    %508 = math.rsqrt %507 : vector<16x1xf32>
    %509 = vector.broadcast %508 : vector<16x1xf32> to vector<16x32xf32>
    %510 = arith.mulf %505, %509 : vector<16x32xf32>
    %511 = vector.broadcast %491 : vector<1x32xf32> to vector<16x32xf32>
    %512 = arith.mulf %510, %511 : vector<16x32xf32>
    %513 = vector.broadcast %492 : vector<1x32xf32> to vector<16x32xf32>
    %514 = arith.addf %512, %513 : vector<16x32xf32>
    %c456 = arith.constant 456 : index
    %c0_196 = arith.constant 0 : index
    %515 = vector.load %arg2[%c456, %c0_196] : memref<504x128xf32, #tpu.memory_space<vmem>>, vector<1x32xf32>
    %c464_197 = arith.constant 464 : index
    %c0_198 = arith.constant 0 : index
    %516 = vector.load %arg2[%c464_197, %c0_198] : memref<504x128xf32, #tpu.memory_space<vmem>>, vector<1x32xf32>
    %cst_199 = arith.constant dense<0.000000e+00> : vector<16xf32>
    %517 = vector.multi_reduction <add>, %514, %cst_199 [1] : vector<16x32xf32> to vector<16xf32>
    %518 = vector.shape_cast %517 : vector<16xf32> to vector<16x1xf32>
    %cst_200 = arith.constant 3.200000e+01 : f32
    %519 = vector.broadcast %cst_200 : f32 to vector<16x1xf32>
    %520 = arith.divf %518, %519 : vector<16x1xf32>
    %521 = vector.broadcast %520 : vector<16x1xf32> to vector<16x32xf32>
    %522 = arith.subf %514, %521 : vector<16x32xf32>
    %523 = arith.mulf %522, %522 : vector<16x32xf32>
    %cst_201 = arith.constant dense<0.000000e+00> : vector<16xf32>
    %524 = vector.multi_reduction <add>, %523, %cst_201 [1] : vector<16x32xf32> to vector<16xf32>
    %525 = vector.shape_cast %524 : vector<16xf32> to vector<16x1xf32>
    %cst_202 = arith.constant 3.200000e+01 : f32
    %526 = vector.broadcast %cst_202 : f32 to vector<16x1xf32>
    %527 = arith.divf %525, %526 : vector<16x1xf32>
    %528 = vector.broadcast %520 : vector<16x1xf32> to vector<16x32xf32>
    %529 = arith.subf %514, %528 : vector<16x32xf32>
    %cst_203 = arith.constant 9.99999974E-6 : f32
    %530 = vector.broadcast %cst_203 : f32 to vector<16x1xf32>
    %531 = arith.addf %527, %530 : vector<16x1xf32>
    %532 = math.rsqrt %531 : vector<16x1xf32>
    %533 = vector.broadcast %532 : vector<16x1xf32> to vector<16x32xf32>
    %534 = arith.mulf %529, %533 : vector<16x32xf32>
    %535 = vector.broadcast %515 : vector<1x32xf32> to vector<16x32xf32>
    %536 = arith.mulf %534, %535 : vector<16x32xf32>
    %537 = vector.broadcast %516 : vector<1x32xf32> to vector<16x32xf32>
    %538 = arith.addf %536, %537 : vector<16x32xf32>
    %539 = arith.truncf %538 : vector<16x32xf32> to vector<16x32xbf16>
    %c1168 = arith.constant 1168 : index
    %c0_204 = arith.constant 0 : index
    %540 = vector.load %arg1[%c1168, %c0_204] : memref<1296x128xbf16, #tpu.memory_space<vmem>>, vector<32x128xbf16>
    %cst_205 = arith.constant dense<0.000000e+00> : vector<16x128xf32>
    %541 = tpu.matmul %539, %540, %cst_205 {dimension_numbers = #tpu.dot_dimension_numbers<[1], [0], [0], [1], [0, 0, 1, 1], [], []>} : vector<16x32xbf16>, vector<32x128xbf16>, vector<16x128xf32> -> vector<16x128xf32>
    %c472 = arith.constant 472 : index
    %c0_206 = arith.constant 0 : index
    %542 = vector.load %arg2[%c472, %c0_206] : memref<504x128xf32, #tpu.memory_space<vmem>>, vector<1x128xf32>
    %543 = vector.broadcast %542 : vector<1x128xf32> to vector<16x128xf32>
    %544 = arith.addf %541, %543 : vector<16x128xf32>
    %c1200 = arith.constant 1200 : index
    %c0_207 = arith.constant 0 : index
    %545 = vector.load %arg1[%c1200, %c0_207] : memref<1296x128xbf16, #tpu.memory_space<vmem>>, vector<32x32xbf16>
    %cst_208 = arith.constant dense<0.000000e+00> : vector<16x32xf32>
    %546 = tpu.matmul %539, %545, %cst_208 {dimension_numbers = #tpu.dot_dimension_numbers<[1], [0], [0], [1], [0, 0, 1, 1], [], []>} : vector<16x32xbf16>, vector<32x32xbf16>, vector<16x32xf32> -> vector<16x32xf32>
    %c480 = arith.constant 480 : index
    %c0_209 = arith.constant 0 : index
    %547 = vector.load %arg2[%c480, %c0_209] : memref<504x128xf32, #tpu.memory_space<vmem>>, vector<1x32xf32>
    %548 = vector.broadcast %547 : vector<1x32xf32> to vector<16x32xf32>
    %549 = arith.addf %546, %548 : vector<16x32xf32>
    %cst_210 = arith.constant 0.000000e+00 : f32
    %550 = vector.broadcast %cst_210 : f32 to vector<16x32xf32>
    %551 = arith.maximumf %549, %550 : vector<16x32xf32>
    %552 = arith.truncf %551 : vector<16x32xf32> to vector<16x32xbf16>
    %c1232 = arith.constant 1232 : index
    %c0_211 = arith.constant 0 : index
    %553 = vector.load %arg1[%c1232, %c0_211] : memref<1296x128xbf16, #tpu.memory_space<vmem>>, vector<32x32xbf16>
    %cst_212 = arith.constant dense<0.000000e+00> : vector<16x32xf32>
    %554 = tpu.matmul %552, %553, %cst_212 {dimension_numbers = #tpu.dot_dimension_numbers<[1], [0], [0], [1], [0, 0, 1, 1], [], []>} : vector<16x32xbf16>, vector<32x32xbf16>, vector<16x32xf32> -> vector<16x32xf32>
    %c488 = arith.constant 488 : index
    %c0_213 = arith.constant 0 : index
    %555 = vector.load %arg2[%c488, %c0_213] : memref<504x128xf32, #tpu.memory_space<vmem>>, vector<1x32xf32>
    %556 = vector.broadcast %555 : vector<1x32xf32> to vector<16x32xf32>
    %557 = arith.addf %554, %556 : vector<16x32xf32>
    %cst_214 = arith.constant 0.000000e+00 : f32
    %558 = vector.broadcast %cst_214 : f32 to vector<16x32xf32>
    %559 = arith.maximumf %557, %558 : vector<16x32xf32>
    %560 = arith.truncf %559 : vector<16x32xf32> to vector<16x32xbf16>
    %c1264 = arith.constant 1264 : index
    %c0_215 = arith.constant 0 : index
    %561 = vector.load %arg1[%c1264, %c0_215] : memref<1296x128xbf16, #tpu.memory_space<vmem>>, vector<32x128xbf16>
    %cst_216 = arith.constant dense<0.000000e+00> : vector<16x128xf32>
    %562 = tpu.matmul %560, %561, %cst_216 {dimension_numbers = #tpu.dot_dimension_numbers<[1], [0], [0], [1], [0, 0, 1, 1], [], []>} : vector<16x32xbf16>, vector<32x128xbf16>, vector<16x128xf32> -> vector<16x128xf32>
    %c496_217 = arith.constant 496 : index
    %c0_218 = arith.constant 0 : index
    %563 = vector.load %arg2[%c496_217, %c0_218] : memref<504x128xf32, #tpu.memory_space<vmem>>, vector<1x128xf32>
    %564 = vector.broadcast %563 : vector<1x128xf32> to vector<16x128xf32>
    %565 = arith.addf %562, %564 : vector<16x128xf32>
    %cst_219 = arith.constant 0.000000e+00 : f32
    %566 = vector.broadcast %cst_219 : f32 to vector<16x128xf32>
    %567 = arith.subf %566, %565 : vector<16x128xf32>
    %568 = math.exp %567 : vector<16x128xf32>
    %cst_220 = arith.constant 1.000000e+00 : f32
    %569 = vector.broadcast %cst_220 : f32 to vector<16x128xf32>
    %570 = arith.addf %569, %568 : vector<16x128xf32>
    %cst_221 = arith.constant 1.000000e+00 : f32
    %571 = vector.broadcast %cst_221 : f32 to vector<16x128xf32>
    %572 = arith.divf %571, %570 : vector<16x128xf32>
    %c0_222 = arith.constant 0 : index
    %c0_223 = arith.constant 0 : index
    %573 = vector.load %arg3[%c0_222, %c0_223] : memref<16x256xf32, #tpu.memory_space<vmem>>, vector<16x128xf32>
    tpu.vector_store %arg3[%c0_222, %c0_223], %544 {strides = array<i32>} : memref<16x256xf32, #tpu.memory_space<vmem>>, vector<16x128xf32>,
    %c0_224 = arith.constant 0 : index
    %c128_225 = arith.constant 128 : index
    %574 = vector.load %arg3[%c0_224, %c128_225] : memref<16x256xf32, #tpu.memory_space<vmem>>, vector<16x128xf32>
    tpu.vector_store %arg3[%c0_224, %c128_225], %572 {strides = array<i32>} : memref<16x256xf32, #tpu.memory_space<vmem>>, vector<16x128xf32>,
    return
  }
}

</mosaic_0001>

<llo_original>
// kernel: vision_detr_forward.1
$region0: #{vision_detr_forward.1}
  #allocation0 [shape = 'u32[]', space=smem, size = 0x4, offset = 0x4, fixed_abs, tag = 'smem constant byte address 0x4 - core index']
  #allocation1 [shape = 'u32[144,128]{1,0:T(1,128)}', space=vmem, size = 0x12000, scoped, tag = 'internal scratch']
  %s0 = inlined_call_operand.vmem [shape: f32[32,192], index: 0, kind: input, shape index: {}]
  %s1 = inlined_call_operand.vmem [shape: bf16[1296,128], index: 1, kind: input, shape index: {}]
  %s2 = inlined_call_operand.vmem [shape: f32[504,128], index: 2, kind: input, shape index: {}]
  %s3 = inlined_call_operand.vmem [shape: f32[16,256], index: 3, kind: output, shape index: {}]
  %s4 = sld [smem:[#allocation0]]
  $region22: #{vision_detr_forward.1} parent=0
    _
  %s6 = ssub.s32 1, %s4
  %s7 = scalar_select 0, %s6, %s4
  // Predicated region
  $region2: #{vision_detr_forward.1} parent=0 // pred_check
    _
  $region3: #{vision_detr_forward.1} parent=0 // pred_check_branch
    %9 = sbr.rel (0) target = $region5
  $region4: #{vision_detr_forward.1} parent=0 // pred_region
    _
  $region5: #{vision_detr_forward.1} parent=0 // pred_fallthru
    _
  // Predicated region
  $region6: #{vision_detr_forward.1} parent=0 // pred_check
    _
  $region7: #{vision_detr_forward.1} parent=0 // pred_check_branch
    %11 = sbr.rel (0) target = $region9
  $region8: #{vision_detr_forward.1} parent=0 // pred_region
    _
  $region9: #{vision_detr_forward.1} parent=0 // pred_fallthru
    _
  // Predicated region
  $region10: #{vision_detr_forward.1} parent=0 // pred_check
    _
  $region11: #{vision_detr_forward.1} parent=0 // pred_check_branch
    %13 = sbr.rel (0) target = $region13
  $region12: #{vision_detr_forward.1} parent=0 // pred_region
    _
  $region13: #{vision_detr_forward.1} parent=0 // pred_fallthru
    _
  %v15 = vld [vmem:[%s0] sm:$0xff]
  %v16 = vld [vmem:[%s0 + $0x8] sm:$0xff]
  %v17 = vld [vmem:[%s0 + $0x10] sm:$0xff]
  %v18 = vld [vmem:[%s0 + $0x18] sm:$0xff]
  %v19 = vld [vmem:[%s0 + $0x20] sm:$0xff]
  %v20 = vld [vmem:[%s0 + $0x28] sm:$0xff]
  %v21 = vld [vmem:[%s0 + $0x30] sm:$0xff]
  %v22 = vld [vmem:[%s0 + $0x38] sm:$0xff]
  %v23 = vpack.c.bf16 %v17, %v15
  %v24 = vpack.c.bf16 %v18, %v16
  %v25 = vpack.c.bf16 %v21, %v19
  %v26 = vpack.c.bf16 %v22, %v20
  %v27 = vld [vmem:[%s1] sm:$0xf]
  %v28 = vld [vmem:[%s1 + $0x4] sm:$0xf]
  %v29 = vld [vmem:[%s1 + $0x8] sm:$0xf]
  %v30 = vld [vmem:[%s1 + $0xc] sm:$0xf]
  %v31 = vld [vmem:[%s1 + $0x10] sm:$0xf]
  %v32 = vld [vmem:[%s1 + $0x14] sm:$0xf]
  %v33 = vld [vmem:[%s1 + $0x18] sm:$0xf]
  %v34 = vld [vmem:[%s1 + $0x1c] sm:$0xf]
  %v35 = vld [vmem:[%s1 + $0x20] sm:$0xf]
  %v36 = vld [vmem:[%s1 + $0x24] sm:$0xf]
  %v37 = vld [vmem:[%s1 + $0x28] sm:$0xf]
  %v38 = vld [vmem:[%s1 + $0x2c] sm:$0xf]
  %v39 = vld [vmem:[%s1 + $0x30] sm:$0xf]
  %v40 = vld [vmem:[%s1 + $0x34] sm:$0xf]
  %v41 = vld [vmem:[%s1 + $0x38] sm:$0xf]
  %v42 = vld [vmem:[%s1 + $0x3c] sm:$0xf]
  %v43 = vld [vmem:[%s1 + $0x40] sm:$0xf]
  %v44 = vld [vmem:[%s1 + $0x44] sm:$0xf]
  %v45 = vld [vmem:[%s1 + $0x48] sm:$0xf]
  %v46 = vld [vmem:[%s1 + $0x4c] sm:$0xf]
  %v47 = vld [vmem:[%s1 + $0x50] sm:$0xf]
  %v48 = vld [vmem:[%s1 + $0x54] sm:$0xf]
  %v49 = vld [vmem:[%s1 + $0x58] sm:$0xf]
  %v50 = vld [vmem:[%s1 + $0x5c] sm:$0xf]
  %v51 = vld [vmem:[%s2] sm:$0x1]
  %v52 = vlaneseq
  %v53 = vshrl.u32 %v52, 7
  %v54 = vsub.s32 0, %v53
  %v55 = vrot.slane %v51, %v54
  %v80 = vunpack.c.l.b16 %v27
  %v81 = vunpack.c.l.b16 %v28
  %v82 = vunpack.c.l.b16 %v29
  %v83 = vunpack.c.l.b16 %v30
  %v84 = vunpack.c.l.b16 %v31
  %v85 = vunpack.c.l.b16 %v32
  %v86 = vunpack.c.l.b16 %v33
  %v87 = vunpack.c.l.b16 %v34
  %v88 = vunpack.c.l.b16 %v35
  %v89 = vunpack.c.l.b16 %v36
  %v90 = vunpack.c.l.b16 %v37
  %v91 = vunpack.c.l.b16 %v38
  %v92 = vunpack.c.l.b16 %v39
  %v93 = vunpack.c.l.b16 %v40
  %v94 = vunpack.c.l.b16 %v41
  %v95 = vunpack.c.l.b16 %v42
  %v96 = vunpack.c.l.b16 %v43
  %v97 = vunpack.c.l.b16 %v44
  %v98 = vunpack.c.l.b16 %v45
  %v99 = vunpack.c.l.b16 %v46
  %v100 = vunpack.c.l.b16 %v47
  %v101 = vunpack.c.l.b16 %v48
  %v102 = vunpack.c.l.b16 %v49
  %v103 = vunpack.c.l.b16 %v50
  %v104 = vpack.c.b16 %v81, %v80
  %v105 = vpack.c.b16 %v83, %v82
  %v106 = vpack.c.b16 %v85, %v84
  %v107 = vpack.c.b16 %v87, %v86
  %v108 = vpack.c.b16 %v89, %v88
  %v109 = vpack.c.b16 %v91, %v90
  %v110 = vpack.c.b16 %v93, %v92
  %v111 = vpack.c.b16 %v95, %v94
  %v112 = vpack.c.b16 %v97, %v96
  %v113 = vpack.c.b16 %v99, %v98
  %v114 = vpack.c.b16 %v101, %v100
  %v115 = vpack.c.b16 %v103, %v102
  %vm128 = vcmask 523264
  %v130 = vsel %vm128, %v24, 0
  %v133 = vsel %vm128, %v26, 0
  %135 = vmatprep.subr.bf16.mxu0 0
  %136 = vmatpush1.bf16.msra.mxu0 %v104
  %137 = vmatprep.subr.bf16.mxu0 0
  %138 = vmatpush1.bf16.msra.mxu0 %v105
  %139 = vmatprep.subr.bf16.mxu0 0
  %140 = vmatpush1.bf16.msra.mxu0 %v106
  %141 = vmatprep.subr.bf16.mxu0 0
  %142 = vmatpush1.bf16.msra.mxu0 %v107
  %143 = vmatprep.subr.bf16.mxu0 0
  %144 = vmatpush1.bf16.msra.mxu0 %v108
  %145 = vmatprep.subr.bf16.mxu0 0
  %146 = vmatpush1.bf16.msra.mxu0 %v109
  %147 = vmatprep.subr.bf16.mxu0 0
  %148 = vmatpush1.bf16.msra.mxu0 %v110
  %149 = vmatprep.subr.bf16.mxu0 0
  %150 = vmatpush1.bf16.msra.mxu0 %v111
  %151 = vmatprep.subr.bf16.mxu0 0
  %152 = vmatpush1.bf16.msra.mxu0 %v112
  %153 = vmatprep.subr.bf16.mxu0 0
  %154 = vmatpush1.bf16.msra.mxu0 %v113
  %155 = vmatprep.subr.bf16.mxu0 0
  %156 = vmatpush1.bf16.msra.mxu0 %v114
  %157 = vmatprep.subr.bf16.mxu0 0
  %158 = vmatpush1.bf16.msra.mxu0 %v115
  %159 = vmatprep.subr.bf16.mxu0 0
  %160 = vmatpush1.bf16.msra.mxu0 0
  %161 = vmatprep.subr.bf16.mxu0 0
  %162 = vmatpush1.bf16.msra.mxu0 0
  %163 = vmatprep.subr.bf16.mxu0 0
  %164 = vmatpush1.bf16.msra.mxu0 0
  %165 = vmatprep.subr.bf16.mxu0 0
  %166 = vmatpush1.bf16.msra.mxu0 0
  %167 = vmatprep.mubr.bf16.mxu0 %v130
  %168 = vmatmul.mubr.bf16.gmra.mrb[0].mxu0 %v23
  %v169 = vpop.f32.mrb[0].mxu0
  %v170 = vadd.f32 %v55, %v169
  %v171 = vpop.f32.mrb[0].mxu0
  %v172 = vpop.f32.mrb[0].mxu0
  %v173 = vadd.f32 %v55, %v172
  %v174 = vpop.f32.mrb[0].mxu0
  %175 = vmatprep.mubr.bf16.mxu0 %v133
  %176 = vmatmul.mubr.bf16.gmra.mrb[0].mxu0 %v25
  %v177 = vpop.f32.mrb[0].mxu0
  %v178 = vadd.f32 %v55, %v177
  %v179 = vpop.f32.mrb[0].mxu0
  %v180 = vpop.f32.mrb[0].mxu0
  %v181 = vadd.f32 %v55, %v180
  %v182 = vpop.f32.mrb[0].mxu0
  %183 = vdwg.mxu0
  %v184 = vmax.f32 %v170, 0.0
  %v185 = vmax.f32 %v173, 0.0
  %v186 = vmax.f32 %v178, 0.0
  %v187 = vmax.f32 %v181, 0.0
  %v188 = vpack.c.bf16 %v185, %v184
  %v189 = vpack.c.bf16 %v187, %v186
  %v190 = vld [vmem:[%s1 + $0x60] sm:$0xf]
  %v191 = vld [vmem:[%s1 + $0x64] sm:$0xf]
  %v192 = vld [vmem:[%s2 + $0x8] sm:$0x1]
  %v193 = vlaneseq
  %v194 = vshrl.u32 %v193, 7
  %v195 = vsub.s32 0, %v194
  %v196 = vrot.slane %v192, %v195
  %v199 = vunpack.c.l.b16 %v190
  %v200 = vunpack.c.l.b16 %v191
  %v201 = vpack.c.b16 %v200, %v199
  %vm203 = vcmask 130048
  %v205 = vsel %vm203, %v188, 0
  %v208 = vsel %vm203, %v189, 0
  %210 = vmatprep.subr.bf16.mxu0 0
  %211 = vmatpush1.bf16.msra.mxu0 %v201
  %212 = vmatprep.subr.bf16.mxu0 0
  %213 = vmatpush1.bf16.msra.mxu0 0
  %214 = vmatprep.subr.bf16.mxu0 0
  %215 = vmatpush1.bf16.msra.mxu0 0
  %216 = vmatprep.subr.bf16.mxu0 0
  %217 = vmatpush1.bf16.msra.mxu0 0
  %218 = vmatprep.subr.bf16.mxu0 0
  %219 = vmatpush1.bf16.msra.mxu0 0
  %220 = vmatprep.subr.bf16.mxu0 0
  %221 = vmatpush1.bf16.msra.mxu0 0
  %222 = vmatprep.subr.bf16.mxu0 0
  %223 = vmatpush1.bf16.msra.mxu0 0
  %224 = vmatprep.subr.bf16.mxu0 0
  %225 = vmatpush1.bf16.msra.mxu0 0
  %226 = vmatprep.subr.bf16.mxu0 0
  %227 = vmatpush1.bf16.msra.mxu0 0
  %228 = vmatprep.subr.bf16.mxu0 0
  %229 = vmatpush1.bf16.msra.mxu0 0
  %230 = vmatprep.subr.bf16.mxu0 0
  %231 = vmatpush1.bf16.msra.mxu0 0
  %232 = vmatprep.subr.bf16.mxu0 0
  %233 = vmatpush1.bf16.msra.mxu0 0
  %234 = vmatprep.subr.bf16.mxu0 0
  %235 = vmatpush1.bf16.msra.mxu0 0
  %236 = vmatprep.subr.bf16.mxu0 0
  %237 = vmatpush1.bf16.msra.mxu0 0
  %238 = vmatprep.subr.bf16.mxu0 0
  %239 = vmatpush1.bf16.msra.mxu0 0
  %240 = vmatprep.subr.bf16.mxu0 0
  %241 = vmatpush1.bf16.msra.mxu0 0
  %242 = vmatprep.mubr.bf16.mxu0 0
  %243 = vmatmul.mubr.bf16.gmra.mrb[0].mxu0 %v205
  %v244 = vpop.f32.mrb[0].mxu0
  %v245 = vadd.f32 %v196, %v244
  %v246 = vpop.f32.mrb[0].mxu0
  %v247 = vpop.f32.mrb[0].mxu0
  %v248 = vadd.f32 %v196, %v247
  %v249 = vpop.f32.mrb[0].mxu0
  %250 = vmatprep.mubr.bf16.mxu0 0
  %251 = vmatmul.mubr.bf16.gmra.mrb[0].mxu0 %v208
  %v252 = vpop.f32.mrb[0].mxu0
  %v253 = vadd.f32 %v196, %v252
  %v254 = vpop.f32.mrb[0].mxu0
  %v255 = vpop.f32.mrb[0].mxu0
  %v256 = vadd.f32 %v196, %v255
  %v257 = vpop.f32.mrb[0].mxu0
  %258 = vdwg.mxu0
  %v259 = vld [vmem:[%s2 + $0x10] sm:$0xff]
  %v260 = vld [vmem:[%s2 + $0x18] sm:$0xff]
  %v261 = vld [vmem:[%s2 + $0x20] sm:$0xff]
  %v262 = vld [vmem:[%s2 + $0x28] sm:$0xff]
  %v263 = vld [vmem:[%s2 + $0x30] sm:$0xff]
  %v264 = vld [vmem:[%s2 + $0x38] sm:$0xff]
  %v265 = vld [vmem:[%s2 + $0x40] sm:$0xff]
  %v266 = vld [vmem:[%s2 + $0x48] sm:$0xff]
  %v267 = vld [vmem:[%s2 + $0x50] sm:$0xff]
  %v268 = vld [vmem:[%s2 + $0x58] sm:$0xff]
  %v269 = vld [vmem:[%s2 + $0x60] sm:$0xff]
  %v270 = vld [vmem:[%s2 + $0x68] sm:$0xff]
  %v271 = vld [vmem:[%s2 + $0x70] sm:$0xff]
  %v272 = vld [vmem:[%s2 + $0x78] sm:$0xff]
  %v273 = vadd.f32 %v245, %v259
  %v274 = vadd.f32 %v248, %v260
  %v275 = vadd.f32 %v253, %v261
  %v276 = vadd.f32 %v256, %v262
  %v277 = vpack.c.bf16 %v274, %v273
  %v278 = vpack.c.bf16 %v276, %v275
  %v279 = vpack.c.bf16 %v248, %v245
  %v280 = vpack.c.bf16 %v256, %v253
  %v281 = vld [vmem:[%s1 + $0x68] sm:$0xf]
  %v282 = vld [vmem:[%s1 + $0x6c] sm:$0xf]
  %v283 = vld [vmem:[%s1 + $0x70] sm:$0xf]
  %v284 = vld [vmem:[%s1 + $0x74] sm:$0xf]
  %v285 = vld [vmem:[%s2 + $0x80] sm:$0x1]
  %v286 = vlaneseq
  %v287 = vshrl.u32 %v286, 7
  %v288 = vsub.s32 0, %v287
  %v289 = vrot.slane %v285, %v288
  %v294 = vunpack.c.l.b16 %v281
  %v295 = vunpack.c.l.b16 %v282
  %v296 = vunpack.c.l.b16 %v283
  %v297 = vunpack.c.l.b16 %v284
  %v298 = vpack.c.b16 %v295, %v294
  %v299 = vpack.c.b16 %v297, %v296
  %vm302 = vcmask 261120
  %v304 = vsel %vm302, %v277, 0
  %v307 = vsel %vm302, %v278, 0
  %309 = vmatprep.subr.bf16.mxu0 0
  %310 = vmatpush1.bf16.msra.mxu0 %v298
  %311 = vmatprep.subr.bf16.mxu0 0
  %312 = vmatpush1.bf16.msra.mxu0 %v299
  %313 = vmatprep.subr.bf16.mxu0 0
  %314 = vmatpush1.bf16.msra.mxu0 0
  %315 = vmatprep.subr.bf16.mxu0 0
  %316 = vmatpush1.bf16.msra.mxu0 0
  %317 = vmatprep.subr.bf16.mxu0 0
  %318 = vmatpush1.bf16.msra.mxu0 0
  %319 = vmatprep.subr.bf16.mxu0 0
  %320 = vmatpush1.bf16.msra.mxu0 0
  %321 = vmatprep.subr.bf16.mxu0 0
  %322 = vmatpush1.bf16.msra.mxu0 0
  %323 = vmatprep.subr.bf16.mxu0 0
  %324 = vmatpush1.bf16.msra.mxu0 0
  %325 = vmatprep.subr.bf16.mxu0 0
  %326 = vmatpush1.bf16.msra.mxu0 0
  %327 = vmatprep.subr.bf16.mxu0 0
  %328 = vmatpush1.bf16.msra.mxu0 0
  %329 = vmatprep.subr.bf16.mxu0 0
  %330 = vmatpush1.bf16.msra.mxu0 0
  %331 = vmatprep.subr.bf16.mxu0 0
  %332 = vmatpush1.bf16.msra.mxu0 0
  %333 = vmatprep.subr.bf16.mxu0 0
  %334 = vmatpush1.bf16.msra.mxu0 0
  %335 = vmatprep.subr.bf16.mxu0 0
  %336 = vmatpush1.bf16.msra.mxu0 0
  %337 = vmatprep.subr.bf16.mxu0 0
  %338 = vmatpush1.bf16.msra.mxu0 0
  %339 = vmatprep.subr.bf16.mxu0 0
  %340 = vmatpush1.bf16.msra.mxu0 0
  %341 = vmatprep.mubr.bf16.mxu0 0
  %342 = vmatmul.mubr.bf16.gmra.mrb[0].mxu0 %v304
  %v343 = vpop.f32.mrb[0].mxu0
  %v344 = vadd.f32 %v289, %v343
  %v345 = vpop.f32.mrb[0].mxu0
  %v346 = vpop.f32.mrb[0].mxu0
  %v347 = vadd.f32 %v289, %v346
  %v348 = vpop.f32.mrb[0].mxu0
  %349 = vmatprep.mubr.bf16.mxu0 0
  %350 = vmatmul.mubr.bf16.gmra.mrb[0].mxu0 %v307
  %v351 = vpop.f32.mrb[0].mxu0
  %v352 = vadd.f32 %v289, %v351
  %v353 = vpop.f32.mrb[0].mxu0
  %v354 = vpop.f32.mrb[0].mxu0
  %v355 = vadd.f32 %v289, %v354
  %v356 = vpop.f32.mrb[0].mxu0
  %357 = vdwg.mxu0
  %v358 = vpack.c.bf16 %v347, %v344
  %v359 = vpack.c.bf16 %v355, %v352
  %v361 = vsel %vm302, %v358, 0
  %v364 = vsel %vm302, %v359, 0
  %366 = vmatprep.subr.bf16.mxu0 0
  %367 = vmatpush1.bf16.xpose.msra.mxu0 %v304
  %368 = vmatprep.subr.bf16.mxu0 0
  %369 = vmatpush1.bf16.xpose.msra.mxu0 %v307
  %370 = vmatprep.subr.bf16.mxu0 0
  %371 = vmatpush1.bf16.xpose.msra.mxu0 0
  %372 = vmatprep.subr.bf16.mxu0 0
  %373 = vmatpush1.bf16.xpose.msra.mxu0 0
  %374 = vmatprep.subr.bf16.mxu0 0
  %375 = vmatpush1.bf16.xpose.msra.mxu0 0
  %376 = vmatprep.subr.bf16.mxu0 0
  %377 = vmatpush1.bf16.xpose.msra.mxu0 0
  %378 = vmatprep.subr.bf16.mxu0 0
  %379 = vmatpush1.bf16.xpose.msra.mxu0 0
  %380 = vmatprep.subr.bf16.mxu0 0
  %381 = vmatpush1.bf16.xpose.msra.mxu0 0
  %382 = vmatprep.subr.bf16.mxu0 0
  %383 = vmatpush1.bf16.xpose.msra.mxu0 0
  %384 = vmatprep.subr.bf16.mxu0 0
  %385 = vmatpush1.bf16.xpose.msra.mxu0 0
  %386 = vmatprep.subr.bf16.mxu0 0
  %387 = vmatpush1.bf16.xpose.msra.mxu0 0
  %388 = vmatprep.subr.bf16.mxu0 0
  %389 = vmatpush1.bf16.xpose.msra.mxu0 0
  %390 = vmatprep.subr.bf16.mxu0 0
  %391 = vmatpush1.bf16.xpose.msra.mxu0 0
  %392 = vmatprep.subr.bf16.mxu0 0
  %393 = vmatpush1.bf16.xpose.msra.mxu0 0
  %394 = vmatprep.subr.bf16.mxu0 0
  %395 = vmatpush1.bf16.xpose.msra.mxu0 0
  %396 = vmatprep.subr.bf16.mxu0 0
  %397 = vmatpush1.bf16.xpose.msra.mxu0 0
  %398 = vmatprep.mubr.bf16.mxu0 0
  %399 = vmatmul.mubr.bf16.gmra.mrb[0].mxu0 %v361
  %v400 = vpop.f32.mrb[0].mxu0
  %v401 = vadd.f32 %v265, %v400
  %v402 = vpop.f32.mrb[0].mxu0
  %v403 = vpop.f32.mrb[0].mxu0
  %v404 = vadd.f32 %v266, %v403
  %v405 = vpop.f32.mrb[0].mxu0
  %406 = vmatprep.mubr.bf16.mxu0 0
  %407 = vmatmul.mubr.bf16.gmra.mrb[0].mxu0 %v364
  %v408 = vpop.f32.mrb[0].mxu0
  %v409 = vadd.f32 %v267, %v408
  %v410 = vpop.f32.mrb[0].mxu0
  %v411 = vpop.f32.mrb[0].mxu0
  %v412 = vadd.f32 %v268, %v411
  %v413 = vpop.f32.mrb[0].mxu0
  %414 = vdwg.mxu0
  %v415 = vsel %vm302, %v401, -inf
  %416 = vmax.xlane.f32.xlu0 %v415
  %v417 = vpop.xlane.xlu0 %416
  %v418 = vsel %vm302, %v404, -inf
  %419 = vmax.xlane.f32.xlu0 %v418
  %v420 = vpop.xlane.xlu0 %419
  %v421 = vsel %vm302, %v409, -inf
  %422 = vmax.xlane.f32.xlu0 %v421
  %v423 = vpop.xlane.xlu0 %422
  %v424 = vsel %vm302, %v412, -inf
  %425 = vmax.xlane.f32.xlu0 %v424
  %v426 = vpop.xlane.xlu0 %425
  %v427 = vsub.f32 %v401, %v417
  %v428 = vsub.f32 %v404, %v420
  %v429 = vsub.f32 %v409, %v423
  %v430 = vsub.f32 %v412, %v426
  %v431 = vmul.f32 %v427, 1.442695
  %v432 = vpow.pop %v431
  %v433 = vmul.f32 %v428, 1.442695
  %v434 = vpow.pop %v433
  %v435 = vmul.f32 %v429, 1.442695
  %v436 = vpow.pop %v435
  %v437 = vmul.f32 %v430, 1.442695
  %v438 = vpow.pop %v437
  %v439 = vsel %vm302, %v432, 0.0
  %440 = vadd.xlane.f32.xlu0 %v439
  %v441 = vpop.xlane.xlu0 %440
  %v442 = vsel %vm302, %v434, 0.0
  %443 = vadd.xlane.f32.xlu0 %v442
  %v444 = vpop.xlane.xlu0 %443
  %v445 = vsel %vm302, %v436, 0.0
  %446 = vadd.xlane.f32.xlu0 %v445
  %v447 = vpop.xlane.xlu0 %446
  %v448 = vsel %vm302, %v438, 0.0
  %449 = vadd.xlane.f32.xlu0 %v448
  %v450 = vpop.xlane.xlu0 %449
  %v451 = vrcp.pop %v441
  %v452 = vrcp.pop %v444
  %v453 = vrcp.pop %v447
  %v454 = vrcp.pop %v450
  %v455 = vmul.f32 %v432, %v451
  %v456 = vmul.f32 %v434, %v452
  %v457 = vmul.f32 %v436, %v453
  %v458 = vmul.f32 %v438, %v454
  %v459 = vpack.c.bf16 %v456, %v455
  %v460 = vpack.c.bf16 %v458, %v457
  %v461 = vld [vmem:[%s1 + $0x78] sm:$0xf]
  %v462 = vld [vmem:[%s1 + $0x7c] sm:$0xf]
  %v463 = vld [vmem:[%s1 + $0x80] sm:$0xf]
  %v464 = vld [vmem:[%s1 + $0x84] sm:$0xf]
  %v465 = vld [vmem:[%s2 + $0x88] sm:$0x1]
  %v466 = vlaneseq
  %v467 = vshrl.u32 %v466, 7
  %v468 = vsub.s32 0, %v467
  %v469 = vrot.slane %v465, %v468
  %v474 = vunpack.c.l.b16 %v461
  %v475 = vunpack.c.l.b16 %v462
  %v476 = vunpack.c.l.b16 %v463
  %v477 = vunpack.c.l.b16 %v464
  %v478 = vpack.c.b16 %v475, %v474
  %v479 = vpack.c.b16 %v477, %v476
  %v483 = vsel %vm302, %v279, 0
  %v486 = vsel %vm302, %v280, 0
  %488 = vmatprep.subr.bf16.mxu0 0
  %489 = vmatpush1.bf16.msra.mxu0 %v478
  %490 = vmatprep.subr.bf16.mxu0 0
  %491 = vmatpush1.bf16.msra.mxu0 %v479
  %492 = vmatprep.subr.bf16.mxu0 0
  %493 = vmatpush1.bf16.msra.mxu0 0
  %494 = vmatprep.subr.bf16.mxu0 0
  %495 = vmatpush1.bf16.msra.mxu0 0
  %496 = vmatprep.subr.bf16.mxu0 0
  %497 = vmatpush1.bf16.msra.mxu0 0
  %498 = vmatprep.subr.bf16.mxu0 0
  %499 = vmatpush1.bf16.msra.mxu0 0
  %500 = vmatprep.subr.bf16.mxu0 0
  %501 = vmatpush1.bf16.msra.mxu0 0
  %502 = vmatprep.subr.bf16.mxu0 0
  %503 = vmatpush1.bf16.msra.mxu0 0
  %504 = vmatprep.subr.bf16.mxu0 0
  %505 = vmatpush1.bf16.msra.mxu0 0
  %506 = vmatprep.subr.bf16.mxu0 0
  %507 = vmatpush1.bf16.msra.mxu0 0
  %508 = vmatprep.subr.bf16.mxu0 0
  %509 = vmatpush1.bf16.msra.mxu0 0
  %510 = vmatprep.subr.bf16.mxu0 0
  %511 = vmatpush1.bf16.msra.mxu0 0
  %512 = vmatprep.subr.bf16.mxu0 0
  %513 = vmatpush1.bf16.msra.mxu0 0
  %514 = vmatprep.subr.bf16.mxu0 0
  %515 = vmatpush1.bf16.msra.mxu0 0
  %516 = vmatprep.subr.bf16.mxu0 0
  %517 = vmatpush1.bf16.msra.mxu0 0
  %518 = vmatprep.subr.bf16.mxu0 0
  %519 = vmatpush1.bf16.msra.mxu0 0
  %520 = vmatprep.mubr.bf16.mxu0 0
  %521 = vmatmul.mubr.bf16.gmra.mrb[0].mxu0 %v483
  %v522 = vpop.f32.mrb[0].mxu0
  %v523 = vadd.f32 %v469, %v522
  %v524 = vpop.f32.mrb[0].mxu0
  %v525 = vpop.f32.mrb[0].mxu0
  %v526 = vadd.f32 %v469, %v525
  %v527 = vpop.f32.mrb[0].mxu0
  %528 = vmatprep.mubr.bf16.mxu0 0
  %529 = vmatmul.mubr.bf16.gmra.mrb[0].mxu0 %v486
  %v530 = vpop.f32.mrb[0].mxu0
  %v531 = vadd.f32 %v469, %v530
  %v532 = vpop.f32.mrb[0].mxu0
  %v533 = vpop.f32.mrb[0].mxu0
  %v534 = vadd.f32 %v469, %v533
  %v535 = vpop.f32.mrb[0].mxu0
  %536 = vdwg.mxu0
  %v537 = vpack.c.bf16 %v526, %v523
  %v538 = vpack.c.bf16 %v534, %v531
  %v539 = vld [vmem:[%s1 + $0x88] sm:$0xf]
  %v540 = vld [vmem:[%s1 + $0x8c] sm:$0xf]
  %v541 = vld [vmem:[%s1 + $0x90] sm:$0xf]
  %v542 = vld [vmem:[%s1 + $0x94] sm:$0xf]
  %v543 = vld [vmem:[%s2 + $0x90] sm:$0x1]
  %v544 = vlaneseq
  %v545 = vshrl.u32 %v544, 7
  %v546 = vsub.s32 0, %v545
  %v547 = vrot.slane %v543, %v546
  %v552 = vunpack.c.l.b16 %v539
  %v553 = vunpack.c.l.b16 %v540
  %v554 = vunpack.c.l.b16 %v541
  %v555 = vunpack.c.l.b16 %v542
  %v556 = vpack.c.b16 %v553, %v552
  %v557 = vpack.c.b16 %v555, %v554
  %560 = vmatprep.subr.bf16.mxu0 0
  %561 = vmatpush1.bf16.msra.mxu0 %v556
  %562 = vmatprep.subr.bf16.mxu0 0
  %563 = vmatpush1.bf16.msra.mxu0 %v557
  %564 = vmatprep.subr.bf16.mxu0 0
  %565 = vmatpush1.bf16.msra.mxu0 0
  %566 = vmatprep.subr.bf16.mxu0 0
  %567 = vmatpush1.bf16.msra.mxu0 0
  %568 = vmatprep.subr.bf16.mxu0 0
  %569 = vmatpush1.bf16.msra.mxu0 0
  %570 = vmatprep.subr.bf16.mxu0 0
  %571 = vmatpush1.bf16.msra.mxu0 0
  %572 = vmatprep.subr.bf16.mxu0 0
  %573 = vmatpush1.bf16.msra.mxu0 0
  %574 = vmatprep.subr.bf16.mxu0 0
  %575 = vmatpush1.bf16.msra.mxu0 0
  %576 = vmatprep.subr.bf16.mxu0 0
  %577 = vmatpush1.bf16.msra.mxu0 0
  %578 = vmatprep.subr.bf16.mxu0 0
  %579 = vmatpush1.bf16.msra.mxu0 0
  %580 = vmatprep.subr.bf16.mxu0 0
  %581 = vmatpush1.bf16.msra.mxu0 0
  %582 = vmatprep.subr.bf16.mxu0 0
  %583 = vmatpush1.bf16.msra.mxu0 0
  %584 = vmatprep.subr.bf16.mxu0 0
  %585 = vmatpush1.bf16.msra.mxu0 0
  %586 = vmatprep.subr.bf16.mxu0 0
  %587 = vmatpush1.bf16.msra.mxu0 0
  %588 = vmatprep.subr.bf16.mxu0 0
  %589 = vmatpush1.bf16.msra.mxu0 0
  %590 = vmatprep.subr.bf16.mxu0 0
  %591 = vmatpush1.bf16.msra.mxu0 0
  %592 = vmatprep.mubr.bf16.mxu0 0
  %593 = vmatmul.mubr.bf16.gmra.mrb[0].mxu0 %v304
  %v594 = vpop.f32.mrb[0].mxu0
  %v595 = vadd.f32 %v547, %v594
  %v596 = vpop.f32.mrb[0].mxu0
  %v597 = vpop.f32.mrb[0].mxu0
  %v598 = vadd.f32 %v547, %v597
  %v599 = vpop.f32.mrb[0].mxu0
  %600 = vmatprep.mubr.bf16.mxu0 0
  %601 = vmatmul.mubr.bf16.gmra.mrb[0].mxu0 %v307
  %v602 = vpop.f32.mrb[0].mxu0
  %v603 = vadd.f32 %v547, %v602
  %v604 = vpop.f32.mrb[0].mxu0
  %v605 = vpop.f32.mrb[0].mxu0
  %v606 = vadd.f32 %v547, %v605
  %v607 = vpop.f32.mrb[0].mxu0
  %608 = vdwg.mxu0
  %v609 = vpack.c.bf16 %v598, %v595
  %v610 = vpack.c.bf16 %v606, %v603
  %v612 = vsel %vm302, %v609, 0
  %v615 = vsel %vm302, %v610, 0
  %617 = vmatprep.subr.bf16.mxu0 0
  %618 = vmatpush1.bf16.xpose.msra.mxu0 %v304
  %619 = vmatprep.subr.bf16.mxu0 0
  %620 = vmatpush1.bf16.xpose.msra.mxu0 %v307
  %621 = vmatprep.subr.bf16.mxu0 0
  %622 = vmatpush1.bf16.xpose.msra.mxu0 0
  %623 = vmatprep.subr.bf16.mxu0 0
  %624 = vmatpush1.bf16.xpose.msra.mxu0 0
  %625 = vmatprep.subr.bf16.mxu0 0
  %626 = vmatpush1.bf16.xpose.msra.mxu0 0
  %627 = vmatprep.subr.bf16.mxu0 0
  %628 = vmatpush1.bf16.xpose.msra.mxu0 0
  %629 = vmatprep.subr.bf16.mxu0 0
  %630 = vmatpush1.bf16.xpose.msra.mxu0 0
  %631 = vmatprep.subr.bf16.mxu0 0
  %632 = vmatpush1.bf16.xpose.msra.mxu0 0
  %633 = vmatprep.subr.bf16.mxu0 0
  %634 = vmatpush1.bf16.xpose.msra.mxu0 0
  %635 = vmatprep.subr.bf16.mxu0 0
  %636 = vmatpush1.bf16.xpose.msra.mxu0 0
  %637 = vmatprep.subr.bf16.mxu0 0
  %638 = vmatpush1.bf16.xpose.msra.mxu0 0
  %639 = vmatprep.subr.bf16.mxu0 0
  %640 = vmatpush1.bf16.xpose.msra.mxu0 0
  %641 = vmatprep.subr.bf16.mxu0 0
  %642 = vmatpush1.bf16.xpose.msra.mxu0 0
  %643 = vmatprep.subr.bf16.mxu0 0
  %644 = vmatpush1.bf16.xpose.msra.mxu0 0
  %645 = vmatprep.subr.bf16.mxu0 0
  %646 = vmatpush1.bf16.xpose.msra.mxu0 0
  %647 = vmatprep.subr.bf16.mxu0 0
  %648 = vmatpush1.bf16.xpose.msra.mxu0 0
  %649 = vmatprep.mubr.bf16.mxu0 0
  %650 = vmatmul.mubr.bf16.gmra.mrb[0].mxu0 %v612
  %v651 = vpop.f32.mrb[0].mxu0
  %v652 = vadd.f32 %v265, %v651
  %v653 = vpop.f32.mrb[0].mxu0
  %v654 = vpop.f32.mrb[0].mxu0
  %v655 = vadd.f32 %v266, %v654
  %v656 = vpop.f32.mrb[0].mxu0
  %657 = vmatprep.mubr.bf16.mxu0 0
  %658 = vmatmul.mubr.bf16.gmra.mrb[0].mxu0 %v615
  %v659 = vpop.f32.mrb[0].mxu0
  %v660 = vadd.f32 %v267, %v659
  %v661 = vpop.f32.mrb[0].mxu0
  %v662 = vpop.f32.mrb[0].mxu0
  %v663 = vadd.f32 %v268, %v662
  %v664 = vpop.f32.mrb[0].mxu0
  %665 = vdwg.mxu0
  %v666 = vsel %vm302, %v652, -inf
  %667 = vmax.xlane.f32.xlu0 %v666
  %v668 = vpop.xlane.xlu0 %667
  %v669 = vsel %vm302, %v655, -inf
  %670 = vmax.xlane.f32.xlu0 %v669
  %v671 = vpop.xlane.xlu0 %670
  %v672 = vsel %vm302, %v660, -inf
  %673 = vmax.xlane.f32.xlu0 %v672
  %v674 = vpop.xlane.xlu0 %673
  %v675 = vsel %vm302, %v663, -inf
  %676 = vmax.xlane.f32.xlu0 %v675
  %v677 = vpop.xlane.xlu0 %676
  %v678 = vsub.f32 %v652, %v668
  %v679 = vsub.f32 %v655, %v671
  %v680 = vsub.f32 %v660, %v674
  %v681 = vsub.f32 %v663, %v677
  %v682 = vmul.f32 %v678, 1.442695
  %v683 = vpow.pop %v682
  %v684 = vmul.f32 %v679, 1.442695
  %v685 = vpow.pop %v684
  %v686 = vmul.f32 %v680, 1.442695
  %v687 = vpow.pop %v686
  %v688 = vmul.f32 %v681, 1.442695
  %v689 = vpow.pop %v688
  %v690 = vsel %vm302, %v683, 0.0
  %691 = vadd.xlane.f32.xlu0 %v690
  %v692 = vpop.xlane.xlu0 %691
  %v693 = vsel %vm302, %v685, 0.0
  %694 = vadd.xlane.f32.xlu0 %v693
  %v695 = vpop.xlane.xlu0 %694
  %v696 = vsel %vm302, %v687, 0.0
  %697 = vadd.xlane.f32.xlu0 %v696
  %v698 = vpop.xlane.xlu0 %697
  %v699 = vsel %vm302, %v689, 0.0
  %700 = vadd.xlane.f32.xlu0 %v699
  %v701 = vpop.xlane.xlu0 %700
  %v702 = vrcp.pop %v692
  %v703 = vrcp.pop %v695
  %v704 = vrcp.pop %v698
  %v705 = vrcp.pop %v701
  %v706 = vmul.f32 %v683, %v702
  %v707 = vmul.f32 %v685, %v703
  %v708 = vmul.f32 %v687, %v704
  %v709 = vmul.f32 %v689, %v705
  %v710 = vpack.c.bf16 %v707, %v706
  %v711 = vpack.c.bf16 %v709, %v708
  %v712 = vld [vmem:[%s1 + $0x98] sm:$0xf]
  %v713 = vld [vmem:[%s1 + $0x9c] sm:$0xf]
  %v714 = vld [vmem:[%s1 + $0xa0] sm:$0xf]
  %v715 = vld [vmem:[%s1 + $0xa4] sm:$0xf]
  %v716 = vld [vmem:[%s2 + $0x98] sm:$0x1]
  %v717 = vlaneseq
  %v718 = vshrl.u32 %v717, 7
  %v719 = vsub.s32 0, %v718
  %v720 = vrot.slane %v716, %v719
  %v725 = vunpack.c.l.b16 %v712
  %v726 = vunpack.c.l.b16 %v713
  %v727 = vunpack.c.l.b16 %v714
  %v728 = vunpack.c.l.b16 %v715
  %v729 = vpack.c.b16 %v726, %v725
  %v730 = vpack.c.b16 %v728, %v727
  %733 = vmatprep.subr.bf16.mxu0 0
  %734 = vmatpush1.bf16.msra.mxu0 %v729
  %735 = vmatprep.subr.bf16.mxu0 0
  %736 = vmatpush1.bf16.msra.mxu0 %v730
  %737 = vmatprep.subr.bf16.mxu0 0
  %738 = vmatpush1.bf16.msra.mxu0 0
  %739 = vmatprep.subr.bf16.mxu0 0
  %740 = vmatpush1.bf16.msra.mxu0 0
  %741 = vmatprep.subr.bf16.mxu0 0
  %742 = vmatpush1.bf16.msra.mxu0 0
  %743 = vmatprep.subr.bf16.mxu0 0
  %744 = vmatpush1.bf16.msra.mxu0 0
  %745 = vmatprep.subr.bf16.mxu0 0
  %746 = vmatpush1.bf16.msra.mxu0 0
  %747 = vmatprep.subr.bf16.mxu0 0
  %748 = vmatpush1.bf16.msra.mxu0 0
  %749 = vmatprep.subr.bf16.mxu0 0
  %750 = vmatpush1.bf16.msra.mxu0 0
  %751 = vmatprep.subr.bf16.mxu0 0
  %752 = vmatpush1.bf16.msra.mxu0 0
  %753 = vmatprep.subr.bf16.mxu0 0
  %754 = vmatpush1.bf16.msra.mxu0 0
  %755 = vmatprep.subr.bf16.mxu0 0
  %756 = vmatpush1.bf16.msra.mxu0 0
  %757 = vmatprep.subr.bf16.mxu0 0
  %758 = vmatpush1.bf16.msra.mxu0 0
  %759 = vmatprep.subr.bf16.mxu0 0
  %760 = vmatpush1.bf16.msra.mxu0 0
  %761 = vmatprep.subr.bf16.mxu0 0
  %762 = vmatpush1.bf16.msra.mxu0 0
  %763 = vmatprep.subr.bf16.mxu0 0
  %764 = vmatpush1.bf16.msra.mxu0 0
  %765 = vmatprep.mubr.bf16.mxu0 0
  %766 = vmatmul.mubr.bf16.gmra.mrb[0].mxu0 %v483
  %v767 = vpop.f32.mrb[0].mxu0
  %v768 = vadd.f32 %v720, %v767
  %v769 = vpop.f32.mrb[0].mxu0
  %v770 = vpop.f32.mrb[0].mxu0
  %v771 = vadd.f32 %v720, %v770
  %v772 = vpop.f32.mrb[0].mxu0
  %773 = vmatprep.mubr.bf16.mxu0 0
  %774 = vmatmul.mubr.bf16.gmra.mrb[0].mxu0 %v486
  %v775 = vpop.f32.mrb[0].mxu0
  %v776 = vadd.f32 %v720, %v775
  %v777 = vpop.f32.mrb[0].mxu0
  %v778 = vpop.f32.mrb[0].mxu0
  %v779 = vadd.f32 %v720, %v778
  %v780 = vpop.f32.mrb[0].mxu0
  %781 = vdwg.mxu0
  %v782 = vpack.c.bf16 %v771, %v768
  %v783 = vpack.c.bf16 %v779, %v776
  %v785 = vsel %vm302, %v710, 0
  %v788 = vsel %vm302, %v711, 0
  %790 = vmatprep.subr.bf16.mxu0 0
  %791 = vmatpush1.bf16.msra.mxu0 %v782
  %792 = vmatprep.subr.bf16.mxu0 0
  %793 = vmatpush1.bf16.msra.mxu0 %v783
  %794 = vmatprep.subr.bf16.mxu0 0
  %795 = vmatpush1.bf16.msra.mxu0 0
  %796 = vmatprep.subr.bf16.mxu0 0
  %797 = vmatpush1.bf16.msra.mxu0 0
  %798 = vmatprep.subr.bf16.mxu0 0
  %799 = vmatpush1.bf16.msra.mxu0 0
  %800 = vmatprep.subr.bf16.mxu0 0
  %801 = vmatpush1.bf16.msra.mxu0 0
  %802 = vmatprep.subr.bf16.mxu0 0
  %803 = vmatpush1.bf16.msra.mxu0 0
  %804 = vmatprep.subr.bf16.mxu0 0
  %805 = vmatpush1.bf16.msra.mxu0 0
  %806 = vmatprep.subr.bf16.mxu0 0
  %807 = vmatpush1.bf16.msra.mxu0 0
  %808 = vmatprep.subr.bf16.mxu0 0
  %809 = vmatpush1.bf16.msra.mxu0 0
  %810 = vmatprep.subr.bf16.mxu0 0
  %811 = vmatpush1.bf16.msra.mxu0 0
  %812 = vmatprep.subr.bf16.mxu0 0
  %813 = vmatpush1.bf16.msra.mxu0 0
  %814 = vmatprep.subr.bf16.mxu0 0
  %815 = vmatpush1.bf16.msra.mxu0 0
  %816 = vmatprep.subr.bf16.mxu0 0
  %817 = vmatpush1.bf16.msra.mxu0 0
  %818 = vmatprep.subr.bf16.mxu0 0
  %819 = vmatpush1.bf16.msra.mxu0 0
  %820 = vmatprep.subr.bf16.mxu0 0
  %821 = vmatpush1.bf16.msra.mxu0 0
  %822 = vmatprep.mubr.bf16.mxu0 0
  %823 = vmatmul.mubr.bf16.gmra.mrb[0].mxu0 %v785
  %v824 = vpop.f32.mrb[0].mxu0
  %v825 = vadd.f32 0.0, %v824
  %v826 = vpop.f32.mrb[0].mxu0
  %v827 = vpop.f32.mrb[0].mxu0
  %v828 = vadd.f32 0.0, %v827
  %v829 = vpop.f32.mrb[0].mxu0
  %830 = vmatprep.mubr.bf16.mxu0 0
  %831 = vmatmul.mubr.bf16.gmra.mrb[0].mxu0 %v788
  %v832 = vpop.f32.mrb[0].mxu0
  %v833 = vadd.f32 0.0, %v832
  %v834 = vpop.f32.mrb[0].mxu0
  %v835 = vpop.f32.mrb[0].mxu0
  %v836 = vadd.f32 0.0, %v835
  %v837 = vpop.f32.mrb[0].mxu0
  %838 = vdwg.mxu0
  %v840 = vsel %vm302, %v459, 0
  %v843 = vsel %vm302, %v460, 0
  %845 = vmatprep.subr.bf16.mxu0 0
  %846 = vmatpush1.bf16.msra.mxu0 %v537
  %847 = vmatprep.subr.bf16.mxu0 0
  %848 = vmatpush1.bf16.msra.mxu0 %v538
  %849 = vmatprep.subr.bf16.mxu0 0
  %850 = vmatpush1.bf16.msra.mxu0 0
  %851 = vmatprep.subr.bf16.mxu0 0
  %852 = vmatpush1.bf16.msra.mxu0 0
  %853 = vmatprep.subr.bf16.mxu0 0
  %854 = vmatpush1.bf16.msra.mxu0 0
  %855 = vmatprep.subr.bf16.mxu0 0
  %856 = vmatpush1.bf16.msra.mxu0 0
  %857 = vmatprep.subr.bf16.mxu0 0
  %858 = vmatpush1.bf16.msra.mxu0 0
  %859 = vmatprep.subr.bf16.mxu0 0
  %860 = vmatpush1.bf16.msra.mxu0 0
  %861 = vmatprep.subr.bf16.mxu0 0
  %862 = vmatpush1.bf16.msra.mxu0 0
  %863 = vmatprep.subr.bf16.mxu0 0
  %864 = vmatpush1.bf16.msra.mxu0 0
  %865 = vmatprep.subr.bf16.mxu0 0
  %866 = vmatpush1.bf16.msra.mxu0 0
  %867 = vmatprep.subr.bf16.mxu0 0
  %868 = vmatpush1.bf16.msra.mxu0 0
  %869 = vmatprep.subr.bf16.mxu0 0
  %870 = vmatpush1.bf16.msra.mxu0 0
  %871 = vmatprep.subr.bf16.mxu0 0
  %872 = vmatpush1.bf16.msra.mxu0 0
  %873 = vmatprep.subr.bf16.mxu0 0
  %874 = vmatpush1.bf16.msra.mxu0 0
  %875 = vmatprep.subr.bf16.mxu0 0
  %876 = vmatpush1.bf16.msra.mxu0 0
  %877 = vmatprep.mubr.bf16.mxu0 0
  %878 = vmatmul.mubr.bf16.gmra.mrb[0].mxu0 %v840
  %v879 = vpop.f32.mrb[0].mxu0
  %v880 = vadd.f32 %v825, %v879
  %v881 = vpop.f32.mrb[0].mxu0
  %v882 = vpop.f32.mrb[0].mxu0
  %v883 = vadd.f32 %v828, %v882
  %v884 = vpop.f32.mrb[0].mxu0
  %885 = vmatprep.mubr.bf16.mxu0 0
  %886 = vmatmul.mubr.bf16.gmra.mrb[0].mxu0 %v843
  %v887 = vpop.f32.mrb[0].mxu0
  %v888 = vadd.f32 %v833, %v887
  %v889 = vpop.f32.mrb[0].mxu0
  %v890 = vpop.f32.mrb[0].mxu0
  %v891 = vadd.f32 %v836, %v890
  %v892 = vpop.f32.mrb[0].mxu0
  %893 = vdwg.mxu0
  %v894 = vld [vmem:[%s1 + $0xa8] sm:$0xf]
  %v895 = vld [vmem:[%s1 + $0xac] sm:$0xf]
  %v896 = vld [vmem:[%s1 + $0xb0] sm:$0xf]
  %v897 = vld [vmem:[%s1 + $0xb4] sm:$0xf]
  %v898 = vld [vmem:[%s2 + $0xa0] sm:$0x1]
  %v899 = vlaneseq
  %v900 = vshrl.u32 %v899, 7
  %v901 = vsub.s32 0, %v900
  %v902 = vrot.slane %v898, %v901
  %v907 = vunpack.c.l.b16 %v894
  %v908 = vunpack.c.l.b16 %v895
  %v909 = vunpack.c.l.b16 %v896
  %v910 = vunpack.c.l.b16 %v897
  %v911 = vpack.c.b16 %v908, %v907
  %v912 = vpack.c.b16 %v910, %v909
  %915 = vmatprep.subr.bf16.mxu0 0
  %916 = vmatpush1.bf16.msra.mxu0 %v911
  %917 = vmatprep.subr.bf16.mxu0 0
  %918 = vmatpush1.bf16.msra.mxu0 %v912
  %919 = vmatprep.subr.bf16.mxu0 0
  %920 = vmatpush1.bf16.msra.mxu0 0
  %921 = vmatprep.subr.bf16.mxu0 0
  %922 = vmatpush1.bf16.msra.mxu0 0
  %923 = vmatprep.subr.bf16.mxu0 0
  %924 = vmatpush1.bf16.msra.mxu0 0
  %925 = vmatprep.subr.bf16.mxu0 0
  %926 = vmatpush1.bf16.msra.mxu0 0
  %927 = vmatprep.subr.bf16.mxu0 0
  %928 = vmatpush1.bf16.msra.mxu0 0
  %929 = vmatprep.subr.bf16.mxu0 0
  %930 = vmatpush1.bf16.msra.mxu0 0
  %931 = vmatprep.subr.bf16.mxu0 0
  %932 = vmatpush1.bf16.msra.mxu0 0
  %933 = vmatprep.subr.bf16.mxu0 0
  %934 = vmatpush1.bf16.msra.mxu0 0
  %935 = vmatprep.subr.bf16.mxu0 0
  %936 = vmatpush1.bf16.msra.mxu0 0
  %937 = vmatprep.subr.bf16.mxu0 0
  %938 = vmatpush1.bf16.msra.mxu0 0
  %939 = vmatprep.subr.bf16.mxu0 0
  %940 = vmatpush1.bf16.msra.mxu0 0
  %941 = vmatprep.subr.bf16.mxu0 0
  %942 = vmatpush1.bf16.msra.mxu0 0
  %943 = vmatprep.subr.bf16.mxu0 0
  %944 = vmatpush1.bf16.msra.mxu0 0
  %945 = vmatprep.subr.bf16.mxu0 0
  %946 = vmatpush1.bf16.msra.mxu0 0
  %947 = vmatprep.mubr.bf16.mxu0 0
  %948 = vmatmul.mubr.bf16.gmra.mrb[0].mxu0 %v304
  %v949 = vpop.f32.mrb[0].mxu0
  %v950 = vadd.f32 %v902, %v949
  %v951 = vpop.f32.mrb[0].mxu0
  %v952 = vpop.f32.mrb[0].mxu0
  %v953 = vadd.f32 %v902, %v952
  %v954 = vpop.f32.mrb[0].mxu0
  %955 = vmatprep.mubr.bf16.mxu0 0
  %956 = vmatmul.mubr.bf16.gmra.mrb[0].mxu0 %v307
  %v957 = vpop.f32.mrb[0].mxu0
  %v958 = vadd.f32 %v902, %v957
  %v959 = vpop.f32.mrb[0].mxu0
  %v960 = vpop.f32.mrb[0].mxu0
  %v961 = vadd.f32 %v902, %v960
  %v962 = vpop.f32.mrb[0].mxu0
  %963 = vdwg.mxu0
  %v964 = vpack.c.bf16 %v953, %v950
  %v965 = vpack.c.bf16 %v961, %v958
  %v967 = vsel %vm302, %v964, 0
  %v970 = vsel %vm302, %v965, 0
  %972 = vmatprep.subr.bf16.mxu0 0
  %973 = vmatpush1.bf16.xpose.msra.mxu0 %v304
  %974 = vmatprep.subr.bf16.mxu0 0
  %975 = vmatpush1.bf16.xpose.msra.mxu0 %v307
  %976 = vmatprep.subr.bf16.mxu0 0
  %977 = vmatpush1.bf16.xpose.msra.mxu0 0
  %978 = vmatprep.subr.bf16.mxu0 0
  %979 = vmatpush1.bf16.xpose.msra.mxu0 0
  %980 = vmatprep.subr.bf16.mxu0 0
  %981 = vmatpush1.bf16.xpose.msra.mxu0 0
  %982 = vmatprep.subr.bf16.mxu0 0
  %983 = vmatpush1.bf16.xpose.msra.mxu0 0
  %984 = vmatprep.subr.bf16.mxu0 0
  %985 = vmatpush1.bf16.xpose.msra.mxu0 0
  %986 = vmatprep.subr.bf16.mxu0 0
  %987 = vmatpush1.bf16.xpose.msra.mxu0 0
  %988 = vmatprep.subr.bf16.mxu0 0
  %989 = vmatpush1.bf16.xpose.msra.mxu0 0
  %990 = vmatprep.subr.bf16.mxu0 0
  %991 = vmatpush1.bf16.xpose.msra.mxu0 0
  %992 = vmatprep.subr.bf16.mxu0 0
  %993 = vmatpush1.bf16.xpose.msra.mxu0 0
  %994 = vmatprep.subr.bf16.mxu0 0
  %995 = vmatpush1.bf16.xpose.msra.mxu0 0
  %996 = vmatprep.subr.bf16.mxu0 0
  %997 = vmatpush1.bf16.xpose.msra.mxu0 0
  %998 = vmatprep.subr.bf16.mxu0 0
  %999 = vmatpush1.bf16.xpose.msra.mxu0 0
  %1000 = vmatprep.subr.bf16.mxu0 0
  %1001 = vmatpush1.bf16.xpose.msra.mxu0 0
  %1002 = vmatprep.subr.bf16.mxu0 0
  %1003 = vmatpush1.bf16.xpose.msra.mxu0 0
  %1004 = vmatprep.mubr.bf16.mxu0 0
  %1005 = vmatmul.mubr.bf16.gmra.mrb[0].mxu0 %v967
  %v1006 = vpop.f32.mrb[0].mxu0
  %v1007 = vadd.f32 %v265, %v1006
  %v1008 = vpop.f32.mrb[0].mxu0
  %v1009 = vpop.f32.mrb[0].mxu0
  %v1010 = vadd.f32 %v266, %v1009
  %v1011 = vpop.f32.mrb[0].mxu0
  %1012 = vmatprep.mubr.bf16.mxu0 0
  %1013 = vmatmul.mubr.bf16.gmra.mrb[0].mxu0 %v970
  %v1014 = vpop.f32.mrb[0].mxu0
  %v1015 = vadd.f32 %v267, %v1014
  %v1016 = vpop.f32.mrb[0].mxu0
  %v1017 = vpop.f32.mrb[0].mxu0
  %v1018 = vadd.f32 %v268, %v1017
  %v1019 = vpop.f32.mrb[0].mxu0
  %1020 = vdwg.mxu0
  %v1021 = vsel %vm302, %v1007, -inf
  %1022 = vmax.xlane.f32.xlu0 %v1021
  %v1023 = vpop.xlane.xlu0 %1022
  %v1024 = vsel %vm302, %v1010, -inf
  %1025 = vmax.xlane.f32.xlu0 %v1024
  %v1026 = vpop.xlane.xlu0 %1025
  %v1027 = vsel %vm302, %v1015, -inf
  %1028 = vmax.xlane.f32.xlu0 %v1027
  %v1029 = vpop.xlane.xlu0 %1028
  %v1030 = vsel %vm302, %v1018, -inf
  %1031 = vmax.xlane.f32.xlu0 %v1030
  %v1032 = vpop.xlane.xlu0 %1031
  %v1033 = vsub.f32 %v1007, %v1023
  %v1034 = vsub.f32 %v1010, %v1026
  %v1035 = vsub.f32 %v1015, %v1029
  %v1036 = vsub.f32 %v1018, %v1032
  %v1037 = vmul.f32 %v1033, 1.442695
  %v1038 = vpow.pop %v1037
  %v1039 = vmul.f32 %v1034, 1.442695
  %v1040 = vpow.pop %v1039
  %v1041 = vmul.f32 %v1035, 1.442695
  %v1042 = vpow.pop %v1041
  %v1043 = vmul.f32 %v1036, 1.442695
  %v1044 = vpow.pop %v1043
  %v1045 = vsel %vm302, %v1038, 0.0
  %1046 = vadd.xlane.f32.xlu0 %v1045
  %v1047 = vpop.xlane.xlu0 %1046
  %v1048 = vsel %vm302, %v1040, 0.0
  %1049 = vadd.xlane.f32.xlu0 %v1048
  %v1050 = vpop.xlane.xlu0 %1049
  %v1051 = vsel %vm302, %v1042, 0.0
  %1052 = vadd.xlane.f32.xlu0 %v1051
  %v1053 = vpop.xlane.xlu0 %1052
  %v1054 = vsel %vm302, %v1044, 0.0
  %1055 = vadd.xlane.f32.xlu0 %v1054
  %v1056 = vpop.xlane.xlu0 %1055
  %v1057 = vrcp.pop %v1047
  %v1058 = vrcp.pop %v1050
  %v1059 = vrcp.pop %v1053
  %v1060 = vrcp.pop %v1056
  %v1061 = vmul.f32 %v1038, %v1057
  %v1062 = vmul.f32 %v1040, %v1058
  %v1063 = vmul.f32 %v1042, %v1059
  %v1064 = vmul.f32 %v1044, %v1060
  %v1065 = vpack.c.bf16 %v1062, %v1061
  %v1066 = vpack.c.bf16 %v1064, %v1063
  %v1067 = vld [vmem:[%s1 + $0xb8] sm:$0xf]
  %v1068 = vld [vmem:[%s1 + $0xbc] sm:$0xf]
  %v1069 = vld [vmem:[%s1 + $0xc0] sm:$0xf]
  %v1070 = vld [vmem:[%s1 + $0xc4] sm:$0xf]
  %v1071 = vld [vmem:[%s2 + $0xa8] sm:$0x1]
  %v1072 = vlaneseq
  %v1073 = vshrl.u32 %v1072, 7
  %v1074 = vsub.s32 0, %v1073
  %v1075 = vrot.slane %v1071, %v1074
  %v1080 = vunpack.c.l.b16 %v1067
  %v1081 = vunpack.c.l.b16 %v1068
  %v1082 = vunpack.c.l.b16 %v1069
  %v1083 = vunpack.c.l.b16 %v1070
  %v1084 = vpack.c.b16 %v1081, %v1080
  %v1085 = vpack.c.b16 %v1083, %v1082
  %1088 = vmatprep.subr.bf16.mxu0 0
  %1089 = vmatpush1.bf16.msra.mxu0 %v1084
  %1090 = vmatprep.subr.bf16.mxu0 0
  %1091 = vmatpush1.bf16.msra.mxu0 %v1085
  %1092 = vmatprep.subr.bf16.mxu0 0
  %1093 = vmatpush1.bf16.msra.mxu0 0
  %1094 = vmatprep.subr.bf16.mxu0 0
  %1095 = vmatpush1.bf16.msra.mxu0 0
  %1096 = vmatprep.subr.bf16.mxu0 0
  %1097 = vmatpush1.bf16.msra.mxu0 0
  %1098 = vmatprep.subr.bf16.mxu0 0
  %1099 = vmatpush1.bf16.msra.mxu0 0
  %1100 = vmatprep.subr.bf16.mxu0 0
  %1101 = vmatpush1.bf16.msra.mxu0 0
  %1102 = vmatprep.subr.bf16.mxu0 0
  %1103 = vmatpush1.bf16.msra.mxu0 0
  %1104 = vmatprep.subr.bf16.mxu0 0
  %1105 = vmatpush1.bf16.msra.mxu0 0
  %1106 = vmatprep.subr.bf16.mxu0 0
  %1107 = vmatpush1.bf16.msra.mxu0 0
  %1108 = vmatprep.subr.bf16.mxu0 0
  %1109 = vmatpush1.bf16.msra.mxu0 0
  %1110 = vmatprep.subr.bf16.mxu0 0
  %1111 = vmatpush1.bf16.msra.mxu0 0
  %1112 = vmatprep.subr.bf16.mxu0 0
  %1113 = vmatpush1.bf16.msra.mxu0 0
  %1114 = vmatprep.subr.bf16.mxu0 0
  %1115 = vmatpush1.bf16.msra.mxu0 0
  %1116 = vmatprep.subr.bf16.mxu0 0
  %1117 = vmatpush1.bf16.msra.mxu0 0
  %1118 = vmatprep.subr.bf16.mxu0 0
  %1119 = vmatpush1.bf16.msra.mxu0 0
  %1120 = vmatprep.mubr.bf16.mxu0 0
  %1121 = vmatmul.mubr.bf16.gmra.mrb[0].mxu0 %v483
  %v1122 = vpop.f32.mrb[0].mxu0
  %v1123 = vadd.f32 %v1075, %v1122
  %v1124 = vpop.f32.mrb[0].mxu0
  %v1125 = vpop.f32.mrb[0].mxu0
  %v1126 = vadd.f32 %v1075, %v1125
  %v1127 = vpop.f32.mrb[0].mxu0
  %1128 = vmatprep.mubr.bf16.mxu0 0
  %1129 = vmatmul.mubr.bf16.gmra.mrb[0].mxu0 %v486
  %v1130 = vpop.f32.mrb[0].mxu0
  %v1131 = vadd.f32 %v1075, %v1130
  %v1132 = vpop.f32.mrb[0].mxu0
  %v1133 = vpop.f32.mrb[0].mxu0
  %v1134 = vadd.f32 %v1075, %v1133
  %v1135 = vpop.f32.mrb[0].mxu0
  %1136 = vdwg.mxu0
  %v1137 = vpack.c.bf16 %v1126, %v1123
  %v1138 = vpack.c.bf16 %v1134, %v1131
  %v1140 = vsel %vm302, %v1065, 0
  %v1143 = vsel %vm302, %v1066, 0
  %1145 = vmatprep.subr.bf16.mxu0 0
  %1146 = vmatpush1.bf16.msra.mxu0 %v1137
  %1147 = vmatprep.subr.bf16.mxu0 0
  %1148 = vmatpush1.bf16.msra.mxu0 %v1138
  %1149 = vmatprep.subr.bf16.mxu0 0
  %1150 = vmatpush1.bf16.msra.mxu0 0
  %1151 = vmatprep.subr.bf16.mxu0 0
  %1152 = vmatpush1.bf16.msra.mxu0 0
  %1153 = vmatprep.subr.bf16.mxu0 0
  %1154 = vmatpush1.bf16.msra.mxu0 0
  %1155 = vmatprep.subr.bf16.mxu0 0
  %1156 = vmatpush1.bf16.msra.mxu0 0
  %1157 = vmatprep.subr.bf16.mxu0 0
  %1158 = vmatpush1.bf16.msra.mxu0 0
  %1159 = vmatprep.subr.bf16.mxu0 0
  %1160 = vmatpush1.bf16.msra.mxu0 0
  %1161 = vmatprep.subr.bf16.mxu0 0
  %1162 = vmatpush1.bf16.msra.mxu0 0
  %1163 = vmatprep.subr.bf16.mxu0 0
  %1164 = vmatpush1.bf16.msra.mxu0 0
  %1165 = vmatprep.subr.bf16.mxu0 0
  %1166 = vmatpush1.bf16.msra.mxu0 0
  %1167 = vmatprep.subr.bf16.mxu0 0
  %1168 = vmatpush1.bf16.msra.mxu0 0
  %1169 = vmatprep.subr.bf16.mxu0 0
  %1170 = vmatpush1.bf16.msra.mxu0 0
  %1171 = vmatprep.subr.bf16.mxu0 0
  %1172 = vmatpush1.bf16.msra.mxu0 0
  %1173 = vmatprep.subr.bf16.mxu0 0
  %1174 = vmatpush1.bf16.msra.mxu0 0
  %1175 = vmatprep.subr.bf16.mxu0 0
  %1176 = vmatpush1.bf16.msra.mxu0 0
  %1177 = vmatprep.mubr.bf16.mxu0 0
  %1178 = vmatmul.mubr.bf16.gmra.mrb[0].mxu0 %v1140
  %v1179 = vpop.f32.mrb[0].mxu0
  %v1180 = vadd.f32 0.0, %v1179
  %v1181 = vpop.f32.mrb[0].mxu0
  %v1182 = vpop.f32.mrb[0].mxu0
  %v1183 = vadd.f32 0.0, %v1182
  %v1184 = vpop.f32.mrb[0].mxu0
  %1185 = vmatprep.mubr.bf16.mxu0 0
  %1186 = vmatmul.mubr.bf16.gmra.mrb[0].mxu0 %v1143
  %v1187 = vpop.f32.mrb[0].mxu0
  %v1188 = vadd.f32 0.0, %v1187
  %v1189 = vpop.f32.mrb[0].mxu0
  %v1190 = vpop.f32.mrb[0].mxu0
  %v1191 = vadd.f32 0.0, %v1190
  %v1192 = vpop.f32.mrb[0].mxu0
  %1193 = vdwg.mxu0
  %v1194 = vadd.f32 %v880, %v1180
  %v1195 = vadd.f32 %v883, %v1183
  %v1196 = vadd.f32 %v888, %v1188
  %v1197 = vadd.f32 %v891, %v1191
  %v1198 = vld [vmem:[%s1 + $0xc8] sm:$0xf]
  %v1199 = vld [vmem:[%s1 + $0xcc] sm:$0xf]
  %v1200 = vld [vmem:[%s1 + $0xd0] sm:$0xf]
  %v1201 = vld [vmem:[%s1 + $0xd4] sm:$0xf]
  %v1202 = vld [vmem:[%s2 + $0xb0] sm:$0x1]
  %v1203 = vlaneseq
  %v1204 = vshrl.u32 %v1203, 7
  %v1205 = vsub.s32 0, %v1204
  %v1206 = vrot.slane %v1202, %v1205
  %v1211 = vunpack.c.l.b16 %v1198
  %v1212 = vunpack.c.l.b16 %v1199
  %v1213 = vunpack.c.l.b16 %v1200
  %v1214 = vunpack.c.l.b16 %v1201
  %v1215 = vpack.c.b16 %v1212, %v1211
  %v1216 = vpack.c.b16 %v1214, %v1213
  %1219 = vmatprep.subr.bf16.mxu0 0
  %1220 = vmatpush1.bf16.msra.mxu0 %v1215
  %1221 = vmatprep.subr.bf16.mxu0 0
  %1222 = vmatpush1.bf16.msra.mxu0 %v1216
  %1223 = vmatprep.subr.bf16.mxu0 0
  %1224 = vmatpush1.bf16.msra.mxu0 0
  %1225 = vmatprep.subr.bf16.mxu0 0
  %1226 = vmatpush1.bf16.msra.mxu0 0
  %1227 = vmatprep.subr.bf16.mxu0 0
  %1228 = vmatpush1.bf16.msra.mxu0 0
  %1229 = vmatprep.subr.bf16.mxu0 0
  %1230 = vmatpush1.bf16.msra.mxu0 0
  %1231 = vmatprep.subr.bf16.mxu0 0
  %1232 = vmatpush1.bf16.msra.mxu0 0
  %1233 = vmatprep.subr.bf16.mxu0 0
  %1234 = vmatpush1.bf16.msra.mxu0 0
  %1235 = vmatprep.subr.bf16.mxu0 0
  %1236 = vmatpush1.bf16.msra.mxu0 0
  %1237 = vmatprep.subr.bf16.mxu0 0
  %1238 = vmatpush1.bf16.msra.mxu0 0
  %1239 = vmatprep.subr.bf16.mxu0 0
  %1240 = vmatpush1.bf16.msra.mxu0 0
  %1241 = vmatprep.subr.bf16.mxu0 0
  %1242 = vmatpush1.bf16.msra.mxu0 0
  %1243 = vmatprep.subr.bf16.mxu0 0
  %1244 = vmatpush1.bf16.msra.mxu0 0
  %1245 = vmatprep.subr.bf16.mxu0 0
  %1246 = vmatpush1.bf16.msra.mxu0 0
  %1247 = vmatprep.subr.bf16.mxu0 0
  %1248 = vmatpush1.bf16.msra.mxu0 0
  %1249 = vmatprep.subr.bf16.mxu0 0
  %1250 = vmatpush1.bf16.msra.mxu0 0
  %1251 = vmatprep.mubr.bf16.mxu0 0
  %1252 = vmatmul.mubr.bf16.gmra.mrb[0].mxu0 %v304
  %v1253 = vpop.f32.mrb[0].mxu0
  %v1254 = vadd.f32 %v1206, %v1253
  %v1255 = vpop.f32.mrb[0].mxu0
  %v1256 = vpop.f32.mrb[0].mxu0
  %v1257 = vadd.f32 %v1206, %v1256
  %v1258 = vpop.f32.mrb[0].mxu0
  %1259 = vmatprep.mubr.bf16.mxu0 0
  %1260 = vmatmul.mubr.bf16.gmra.mrb[0].mxu0 %v307
  %v1261 = vpop.f32.mrb[0].mxu0
  %v1262 = vadd.f32 %v1206, %v1261
  %v1263 = vpop.f32.mrb[0].mxu0
  %v1264 = vpop.f32.mrb[0].mxu0
  %v1265 = vadd.f32 %v1206, %v1264
  %v1266 = vpop.f32.mrb[0].mxu0
  %1267 = vdwg.mxu0
  %v1268 = vpack.c.bf16 %v1257, %v1254
  %v1269 = vpack.c.bf16 %v1265, %v1262
  %v1271 = vsel %vm302, %v1268, 0
  %v1274 = vsel %vm302, %v1269, 0
  %1276 = vmatprep.subr.bf16.mxu0 0
  %1277 = vmatpush1.bf16.xpose.msra.mxu0 %v304
  %1278 = vmatprep.subr.bf16.mxu0 0
  %1279 = vmatpush1.bf16.xpose.msra.mxu0 %v307
  %1280 = vmatprep.subr.bf16.mxu0 0
  %1281 = vmatpush1.bf16.xpose.msra.mxu0 0
  %1282 = vmatprep.subr.bf16.mxu0 0
  %1283 = vmatpush1.bf16.xpose.msra.mxu0 0
  %1284 = vmatprep.subr.bf16.mxu0 0
  %1285 = vmatpush1.bf16.xpose.msra.mxu0 0
  %1286 = vmatprep.subr.bf16.mxu0 0
  %1287 = vmatpush1.bf16.xpose.msra.mxu0 0
  %1288 = vmatprep.subr.bf16.mxu0 0
  %1289 = vmatpush1.bf16.xpose.msra.mxu0 0
  %1290 = vmatprep.subr.bf16.mxu0 0
  %1291 = vmatpush1.bf16.xpose.msra.mxu0 0
  %1292 = vmatprep.subr.bf16.mxu0 0
  %1293 = vmatpush1.bf16.xpose.msra.mxu0 0
  %1294 = vmatprep.subr.bf16.mxu0 0
  %1295 = vmatpush1.bf16.xpose.msra.mxu0 0
  %1296 = vmatprep.subr.bf16.mxu0 0
  %1297 = vmatpush1.bf16.xpose.msra.mxu0 0
  %1298 = vmatprep.subr.bf16.mxu0 0
  %1299 = vmatpush1.bf16.xpose.msra.mxu0 0
  %1300 = vmatprep.subr.bf16.mxu0 0
  %1301 = vmatpush1.bf16.xpose.msra.mxu0 0
  %1302 = vmatprep.subr.bf16.mxu0 0
  %1303 = vmatpush1.bf16.xpose.msra.mxu0 0
  %1304 = vmatprep.subr.bf16.mxu0 0
  %1305 = vmatpush1.bf16.xpose.msra.mxu0 0
  %1306 = vmatprep.subr.bf16.mxu0 0
  %1307 = vmatpush1.bf16.xpose.msra.mxu0 0
  %1308 = vmatprep.mubr.bf16.mxu0 0
  %1309 = vmatmul.mubr.bf16.gmra.mrb[0].mxu0 %v1271
  %v1310 = vpop.f32.mrb[0].mxu0
  %v1311 = vadd.f32 %v265, %v1310
  %v1312 = vpop.f32.mrb[0].mxu0
  %v1313 = vpop.f32.mrb[0].mxu0
  %v1314 = vadd.f32 %v266, %v1313
  %v1315 = vpop.f32.mrb[0].mxu0
  %1316 = vmatprep.mubr.bf16.mxu0 0
  %1317 = vmatmul.mubr.bf16.gmra.mrb[0].mxu0 %v1274
  %v1318 = vpop.f32.mrb[0].mxu0
  %v1319 = vadd.f32 %v267, %v1318
  %v1320 = vpop.f32.mrb[0].mxu0
  %v1321 = vpop.f32.mrb[0].mxu0
  %v1322 = vadd.f32 %v268, %v1321
  %v1323 = vpop.f32.mrb[0].mxu0
  %1324 = vdwg.mxu0
  %v1325 = vsel %vm302, %v1311, -inf
  %1326 = vmax.xlane.f32.xlu0 %v1325
  %v1327 = vpop.xlane.xlu0 %1326
  %v1328 = vsel %vm302, %v1314, -inf
  %1329 = vmax.xlane.f32.xlu0 %v1328
  %v1330 = vpop.xlane.xlu0 %1329
  %v1331 = vsel %vm302, %v1319, -inf
  %1332 = vmax.xlane.f32.xlu0 %v1331
  %v1333 = vpop.xlane.xlu0 %1332
  %v1334 = vsel %vm302, %v1322, -inf
  %1335 = vmax.xlane.f32.xlu0 %v1334
  %v1336 = vpop.xlane.xlu0 %1335
  %v1337 = vsub.f32 %v1311, %v1327
  %v1338 = vsub.f32 %v1314, %v1330
  %v1339 = vsub.f32 %v1319, %v1333
  %v1340 = vsub.f32 %v1322, %v1336
  %v1341 = vmul.f32 %v1337, 1.442695
  %v1342 = vpow.pop %v1341
  %v1343 = vmul.f32 %v1338, 1.442695
  %v1344 = vpow.pop %v1343
  %v1345 = vmul.f32 %v1339, 1.442695
  %v1346 = vpow.pop %v1345
  %v1347 = vmul.f32 %v1340, 1.442695
  %v1348 = vpow.pop %v1347
  %v1349 = vsel %vm302, %v1342, 0.0
  %1350 = vadd.xlane.f32.xlu0 %v1349
  %v1351 = vpop.xlane.xlu0 %1350
  %v1352 = vsel %vm302, %v1344, 0.0
  %1353 = vadd.xlane.f32.xlu0 %v1352
  %v1354 = vpop.xlane.xlu0 %1353
  %v1355 = vsel %vm302, %v1346, 0.0
  %1356 = vadd.xlane.f32.xlu0 %v1355
  %v1357 = vpop.xlane.xlu0 %1356
  %v1358 = vsel %vm302, %v1348, 0.0
  %1359 = vadd.xlane.f32.xlu0 %v1358
  %v1360 = vpop.xlane.xlu0 %1359
  %v1361 = vrcp.pop %v1351
  %v1362 = vrcp.pop %v1354
  %v1363 = vrcp.pop %v1357
  %v1364 = vrcp.pop %v1360
  %v1365 = vmul.f32 %v1342, %v1361
  %v1366 = vmul.f32 %v1344, %v1362
  %v1367 = vmul.f32 %v1346, %v1363
  %v1368 = vmul.f32 %v1348, %v1364
  %v1369 = vpack.c.bf16 %v1366, %v1365
  %v1370 = vpack.c.bf16 %v1368, %v1367
  %v1371 = vld [vmem:[%s1 + $0xd8] sm:$0xf]
  %v1372 = vld [vmem:[%s1 + $0xdc] sm:$0xf]
  %v1373 = vld [vmem:[%s1 + $0xe0] sm:$0xf]
  %v1374 = vld [vmem:[%s1 + $0xe4] sm:$0xf]
  %v1375 = vld [vmem:[%s2 + $0xb8] sm:$0x1]
  %v1376 = vlaneseq
  %v1377 = vshrl.u32 %v1376, 7
  %v1378 = vsub.s32 0, %v1377
  %v1379 = vrot.slane %v1375, %v1378
  %v1384 = vunpack.c.l.b16 %v1371
  %v1385 = vunpack.c.l.b16 %v1372
  %v1386 = vunpack.c.l.b16 %v1373
  %v1387 = vunpack.c.l.b16 %v1374
  %v1388 = vpack.c.b16 %v1385, %v1384
  %v1389 = vpack.c.b16 %v1387, %v1386
  %1392 = vmatprep.subr.bf16.mxu0 0
  %1393 = vmatpush1.bf16.msra.mxu0 %v1388
  %1394 = vmatprep.subr.bf16.mxu0 0
  %1395 = vmatpush1.bf16.msra.mxu0 %v1389
  %1396 = vmatprep.subr.bf16.mxu0 0
  %1397 = vmatpush1.bf16.msra.mxu0 0
  %1398 = vmatprep.subr.bf16.mxu0 0
  %1399 = vmatpush1.bf16.msra.mxu0 0
  %1400 = vmatprep.subr.bf16.mxu0 0
  %1401 = vmatpush1.bf16.msra.mxu0 0
  %1402 = vmatprep.subr.bf16.mxu0 0
  %1403 = vmatpush1.bf16.msra.mxu0 0
  %1404 = vmatprep.subr.bf16.mxu0 0
  %1405 = vmatpush1.bf16.msra.mxu0 0
  %1406 = vmatprep.subr.bf16.mxu0 0
  %1407 = vmatpush1.bf16.msra.mxu0 0
  %1408 = vmatprep.subr.bf16.mxu0 0
  %1409 = vmatpush1.bf16.msra.mxu0 0
  %1410 = vmatprep.subr.bf16.mxu0 0
  %1411 = vmatpush1.bf16.msra.mxu0 0
  %1412 = vmatprep.subr.bf16.mxu0 0
  %1413 = vmatpush1.bf16.msra.mxu0 0
  %1414 = vmatprep.subr.bf16.mxu0 0
  %1415 = vmatpush1.bf16.msra.mxu0 0
  %1416 = vmatprep.subr.bf16.mxu0 0
  %1417 = vmatpush1.bf16.msra.mxu0 0
  %1418 = vmatprep.subr.bf16.mxu0 0
  %1419 = vmatpush1.bf16.msra.mxu0 0
  %1420 = vmatprep.subr.bf16.mxu0 0
  %1421 = vmatpush1.bf16.msra.mxu0 0
  %1422 = vmatprep.subr.bf16.mxu0 0
  %1423 = vmatpush1.bf16.msra.mxu0 0
  %1424 = vmatprep.mubr.bf16.mxu0 0
  %1425 = vmatmul.mubr.bf16.gmra.mrb[0].mxu0 %v483
  %v1426 = vpop.f32.mrb[0].mxu0
  %v1427 = vadd.f32 %v1379, %v1426
  %v1428 = vpop.f32.mrb[0].mxu0
  %v1429 = vpop.f32.mrb[0].mxu0
  %v1430 = vadd.f32 %v1379, %v1429
  %v1431 = vpop.f32.mrb[0].mxu0
  %1432 = vmatprep.mubr.bf16.mxu0 0
  %1433 = vmatmul.mubr.bf16.gmra.mrb[0].mxu0 %v486
  %v1434 = vpop.f32.mrb[0].mxu0
  %v1435 = vadd.f32 %v1379, %v1434
  %v1436 = vpop.f32.mrb[0].mxu0
  %v1437 = vpop.f32.mrb[0].mxu0
  %v1438 = vadd.f32 %v1379, %v1437
  %v1439 = vpop.f32.mrb[0].mxu0
  %1440 = vdwg.mxu0
  %v1441 = vpack.c.bf16 %v1430, %v1427
  %v1442 = vpack.c.bf16 %v1438, %v1435
  %v1444 = vsel %vm302, %v1369, 0
  %v1447 = vsel %vm302, %v1370, 0
  %1449 = vmatprep.subr.bf16.mxu0 0
  %1450 = vmatpush1.bf16.msra.mxu0 %v1441
  %1451 = vmatprep.subr.bf16.mxu0 0
  %1452 = vmatpush1.bf16.msra.mxu0 %v1442
  %1453 = vmatprep.subr.bf16.mxu0 0
  %1454 = vmatpush1.bf16.msra.mxu0 0
  %1455 = vmatprep.subr.bf16.mxu0 0
  %1456 = vmatpush1.bf16.msra.mxu0 0
  %1457 = vmatprep.subr.bf16.mxu0 0
  %1458 = vmatpush1.bf16.msra.mxu0 0
  %1459 = vmatprep.subr.bf16.mxu0 0
  %1460 = vmatpush1.bf16.msra.mxu0 0
  %1461 = vmatprep.subr.bf16.mxu0 0
  %1462 = vmatpush1.bf16.msra.mxu0 0
  %1463 = vmatprep.subr.bf16.mxu0 0
  %1464 = vmatpush1.bf16.msra.mxu0 0
  %1465 = vmatprep.subr.bf16.mxu0 0
  %1466 = vmatpush1.bf16.msra.mxu0 0
  %1467 = vmatprep.subr.bf16.mxu0 0
  %1468 = vmatpush1.bf16.msra.mxu0 0
  %1469 = vmatprep.subr.bf16.mxu0 0
  %1470 = vmatpush1.bf16.msra.mxu0 0
  %1471 = vmatprep.subr.bf16.mxu0 0
  %1472 = vmatpush1.bf16.msra.mxu0 0
  %1473 = vmatprep.subr.bf16.mxu0 0
  %1474 = vmatpush1.bf16.msra.mxu0 0
  %1475 = vmatprep.subr.bf16.mxu0 0
  %1476 = vmatpush1.bf16.msra.mxu0 0
  %1477 = vmatprep.subr.bf16.mxu0 0
  %1478 = vmatpush1.bf16.msra.mxu0 0
  %1479 = vmatprep.subr.bf16.mxu0 0
  %1480 = vmatpush1.bf16.msra.mxu0 0
  %1481 = vmatprep.mubr.bf16.mxu0 0
  %1482 = vmatmul.mubr.bf16.gmra.mrb[0].mxu0 %v1444
  %v1483 = vpop.f32.mrb[0].mxu0
  %v1484 = vadd.f32 0.0, %v1483
  %v1485 = vpop.f32.mrb[0].mxu0
  %v1486 = vpop.f32.mrb[0].mxu0
  %v1487 = vadd.f32 0.0, %v1486
  %v1488 = vpop.f32.mrb[0].mxu0
  %1489 = vmatprep.mubr.bf16.mxu0 0
  %1490 = vmatmul.mubr.bf16.gmra.mrb[0].mxu0 %v1447
  %v1491 = vpop.f32.mrb[0].mxu0
  %v1492 = vadd.f32 0.0, %v1491
  %v1493 = vpop.f32.mrb[0].mxu0
  %v1494 = vpop.f32.mrb[0].mxu0
  %v1495 = vadd.f32 0.0, %v1494
  %v1496 = vpop.f32.mrb[0].mxu0
  %1497 = vdwg.mxu0
  %v1498 = vadd.f32 %v1194, %v1484
  %v1499 = vadd.f32 %v1195, %v1487
  %v1500 = vadd.f32 %v1196, %v1492
  %v1501 = vadd.f32 %v1197, %v1495
  %v1502 = vld [vmem:[%s2 + $0xc0] sm:$0x1]
  %v1503 = vlaneseq
  %v1504 = vshrl.u32 %v1503, 7
  %v1505 = vsub.s32 0, %v1504
  %v1506 = vrot.slane %v1502, %v1505
  %v1507 = vadd.f32 %v1498, %v1506
  %v1508 = vadd.f32 %v1499, %v1506
  %v1509 = vadd.f32 %v1500, %v1506
  %v1510 = vadd.f32 %v1501, %v1506
  %v1511 = vadd.f32 %v245, %v1507
  %v1512 = vadd.f32 %v248, %v1508
  %v1513 = vadd.f32 %v253, %v1509
  %v1514 = vadd.f32 %v256, %v1510
  %v1515 = vld [vmem:[%s2 + $0xd8] sm:$0x1]
  %v1516 = vld [vmem:[%s2 + $0xe0] sm:$0x1]
  %v1517 = vsel %vm302, %v1511, 0.0
  %1518 = vadd.xlane.f32.xlu0 %v1517
  %v1519 = vpop.xlane.xlu0 %1518
  %v1520 = vsel %vm302, %v1512, 0.0
  %1521 = vadd.xlane.f32.xlu0 %v1520
  %v1522 = vpop.xlane.xlu0 %1521
  %v1523 = vsel %vm302, %v1513, 0.0
  %1524 = vadd.xlane.f32.xlu0 %v1523
  %v1525 = vpop.xlane.xlu0 %1524
  %v1526 = vsel %vm302, %v1514, 0.0
  %1527 = vadd.xlane.f32.xlu0 %v1526
  %v1528 = vpop.xlane.xlu0 %1527
  %v1529 = vrcp.pop 32.0
  %v1530 = vmul.f32 %v1519, %v1529
  %v1531 = vmul.f32 %v1522, %v1529
  %v1532 = vmul.f32 %v1525, %v1529
  %v1533 = vmul.f32 %v1528, %v1529
  %v1534 = vsub.f32 %v1511, %v1530
  %v1535 = vsub.f32 %v1512, %v1531
  %v1536 = vsub.f32 %v1513, %v1532
  %v1537 = vsub.f32 %v1514, %v1533
  %v1538 = vmul.f32 %v1534, %v1534
  %v1539 = vmul.f32 %v1535, %v1535
  %v1540 = vmul.f32 %v1536, %v1536
  %v1541 = vmul.f32 %v1537, %v1537
  %v1542 = vsel %vm302, %v1538, 0.0
  %1543 = vadd.xlane.f32.xlu0 %v1542
  %v1544 = vpop.xlane.xlu0 %1543
  %v1545 = vsel %vm302, %v1539, 0.0
  %1546 = vadd.xlane.f32.xlu0 %v1545
  %v1547 = vpop.xlane.xlu0 %1546
  %v1548 = vsel %vm302, %v1540, 0.0
  %1549 = vadd.xlane.f32.xlu0 %v1548
  %v1550 = vpop.xlane.xlu0 %1549
  %v1551 = vsel %vm302, %v1541, 0.0
  %1552 = vadd.xlane.f32.xlu0 %v1551
  %v1553 = vpop.xlane.xlu0 %1552
  %v1554 = vmul.f32 %v1544, %v1529
  %v1555 = vmul.f32 %v1547, %v1529
  %v1556 = vmul.f32 %v1550, %v1529
  %v1557 = vmul.f32 %v1553, %v1529
  %v1558 = vadd.f32 %v1554, 1e-05
  %v1559 = vadd.f32 %v1555, 1e-05
  %v1560 = vadd.f32 %v1556, 1e-05
  %v1561 = vadd.f32 %v1557, 1e-05
  %v1562 = vrsqrt.pop %v1558
  %v1563 = vrsqrt.pop %v1559
  %v1564 = vrsqrt.pop %v1560
  %v1565 = vrsqrt.pop %v1561
  %v1566 = vmul.f32 %v1534, %v1562
  %v1567 = vmul.f32 %v1535, %v1563
  %v1568 = vmul.f32 %v1536, %v1564
  %v1569 = vmul.f32 %v1537, %v1565
  %v1570 = vlaneseq
  %v1571 = vshrl.u32 %v1570, 7
  %v1572 = vsub.s32 0, %v1571
  %v1573 = vrot.slane %v1515, %v1572
  %v1574 = vmul.f32 %v1566, %v1573
  %v1575 = vmul.f32 %v1567, %v1573
  %v1576 = vmul.f32 %v1568, %v1573
  %v1577 = vmul.f32 %v1569, %v1573
  %v1578 = vlaneseq
  %v1579 = vshrl.u32 %v1578, 7
  %v1580 = vsub.s32 0, %v1579
  %v1581 = vrot.slane %v1516, %v1580
  %v1582 = vadd.f32 %v1574, %v1581
  %v1583 = vadd.f32 %v1575, %v1581
  %v1584 = vadd.f32 %v1576, %v1581
  %v1585 = vadd.f32 %v1577, %v1581
  %v1586 = vpack.c.bf16 %v1583, %v1582
  %v1587 = vpack.c.bf16 %v1585, %v1584
  %v1588 = vld [vmem:[%s1 + $0xe8] sm:$0xf]
  %v1589 = vld [vmem:[%s1 + $0xec] sm:$0xf]
  %v1590 = vld [vmem:[%s1 + $0xf0] sm:$0xf]
  %v1591 = vld [vmem:[%s1 + $0xf4] sm:$0xf]
  %v1592 = vld [vmem:[%s2 + $0xc8] sm:$0x1]
  %v1593 = vlaneseq
  %v1594 = vshrl.u32 %v1593, 7
  %v1595 = vsub.s32 0, %v1594
  %v1596 = vrot.slane %v1592, %v1595
  %v1601 = vunpack.c.l.b16 %v1588
  %v1602 = vunpack.c.l.b16 %v1589
  %v1603 = vunpack.c.l.b16 %v1590
  %v1604 = vunpack.c.l.b16 %v1591
  %v1605 = vpack.c.b16 %v1602, %v1601
  %v1606 = vpack.c.b16 %v1604, %v1603
  %v1610 = vsel %vm302, %v1586, 0
  %v1613 = vsel %vm302, %v1587, 0
  %1615 = vmatprep.subr.bf16.mxu0 0
  %1616 = vmatpush1.bf16.msra.mxu0 %v1605
  %1617 = vmatprep.subr.bf16.mxu0 0
  %1618 = vmatpush1.bf16.msra.mxu0 %v1606
  %1619 = vmatprep.subr.bf16.mxu0 0
  %1620 = vmatpush1.bf16.msra.mxu0 0
  %1621 = vmatprep.subr.bf16.mxu0 0
  %1622 = vmatpush1.bf16.msra.mxu0 0
  %1623 = vmatprep.subr.bf16.mxu0 0
  %1624 = vmatpush1.bf16.msra.mxu0 0
  %1625 = vmatprep.subr.bf16.mxu0 0
  %1626 = vmatpush1.bf16.msra.mxu0 0
  %1627 = vmatprep.subr.bf16.mxu0 0
  %1628 = vmatpush1.bf16.msra.mxu0 0
  %1629 = vmatprep.subr.bf16.mxu0 0
  %1630 = vmatpush1.bf16.msra.mxu0 0
  %1631 = vmatprep.subr.bf16.mxu0 0
  %1632 = vmatpush1.bf16.msra.mxu0 0
  %1633 = vmatprep.subr.bf16.mxu0 0
  %1634 = vmatpush1.bf16.msra.mxu0 0
  %1635 = vmatprep.subr.bf16.mxu0 0
  %1636 = vmatpush1.bf16.msra.mxu0 0
  %1637 = vmatprep.subr.bf16.mxu0 0
  %1638 = vmatpush1.bf16.msra.mxu0 0
  %1639 = vmatprep.subr.bf16.mxu0 0
  %1640 = vmatpush1.bf16.msra.mxu0 0
  %1641 = vmatprep.subr.bf16.mxu0 0
  %1642 = vmatpush1.bf16.msra.mxu0 0
  %1643 = vmatprep.subr.bf16.mxu0 0
  %1644 = vmatpush1.bf16.msra.mxu0 0
  %1645 = vmatprep.subr.bf16.mxu0 0
  %1646 = vmatpush1.bf16.msra.mxu0 0
  %1647 = vmatprep.mubr.bf16.mxu0 0
  %1648 = vmatmul.mubr.bf16.gmra.mrb[0].mxu0 %v1610
  %v1649 = vpop.f32.mrb[0].mxu0
  %v1650 = vadd.f32 %v1596, %v1649
  %v1651 = vpop.f32.mrb[0].mxu0
  %v1652 = vpop.f32.mrb[0].mxu0
  %v1653 = vadd.f32 %v1596, %v1652
  %v1654 = vpop.f32.mrb[0].mxu0
  %1655 = vmatprep.mubr.bf16.mxu0 0
  %1656 = vmatmul.mubr.bf16.gmra.mrb[0].mxu0 %v1613
  %v1657 = vpop.f32.mrb[0].mxu0
  %v1658 = vadd.f32 %v1596, %v1657
  %v1659 = vpop.f32.mrb[0].mxu0
  %v1660 = vpop.f32.mrb[0].mxu0
  %v1661 = vadd.f32 %v1596, %v1660
  %v1662 = vpop.f32.mrb[0].mxu0
  %1663 = vdwg.mxu0
  %v1664 = vmax.f32 %v1650, 0.0
  %v1665 = vmax.f32 %v1653, 0.0
  %v1666 = vmax.f32 %v1658, 0.0
  %v1667 = vmax.f32 %v1661, 0.0
  %v1668 = vpack.c.bf16 %v1665, %v1664
  %v1669 = vpack.c.bf16 %v1667, %v1666
  %v1670 = vld [vmem:[%s1 + $0xf8] sm:$0xf]
  %v1671 = vld [vmem:[%s1 + $0xfc] sm:$0xf]
  %v1672 = vld [vmem:[%s1 + $0x100] sm:$0xf]
  %v1673 = vld [vmem:[%s1 + $0x104] sm:$0xf]
  %v1674 = vld [vmem:[%s1 + $0x108] sm:$0xf]
  %v1675 = vld [vmem:[%s1 + $0x10c] sm:$0xf]
  %v1676 = vld [vmem:[%s1 + $0x110] sm:$0xf]
  %v1677 = vld [vmem:[%s1 + $0x114] sm:$0xf]
  %v1678 = vld [vmem:[%s2 + $0xd0] sm:$0x1]
  %v1679 = vlaneseq
  %v1680 = vshrl.u32 %v1679, 7
  %v1681 = vsub.s32 0, %v1680
  %v1682 = vrot.slane %v1678, %v1681
  %v1691 = vunpack.c.l.b16 %v1670
  %v1692 = vunpack.c.l.b16 %v1671
  %v1693 = vunpack.c.l.b16 %v1672
  %v1694 = vunpack.c.l.b16 %v1673
  %v1695 = vunpack.c.l.b16 %v1674
  %v1696 = vunpack.c.l.b16 %v1675
  %v1697 = vunpack.c.l.b16 %v1676
  %v1698 = vunpack.c.l.b16 %v1677
  %v1699 = vpack.c.b16 %v1692, %v1691
  %v1700 = vpack.c.b16 %v1694, %v1693
  %v1701 = vpack.c.b16 %v1696, %v1695
  %v1702 = vpack.c.b16 %v1698, %v1697
  %v1708 = vsel %vm128, %v1668, 0
  %v1711 = vsel %vm128, %v1669, 0
  %1713 = vmatprep.subr.bf16.mxu0 0
  %1714 = vmatpush1.bf16.msra.mxu0 %v1699
  %1715 = vmatprep.subr.bf16.mxu0 0
  %1716 = vmatpush1.bf16.msra.mxu0 %v1700
  %1717 = vmatprep.subr.bf16.mxu0 0
  %1718 = vmatpush1.bf16.msra.mxu0 %v1701
  %1719 = vmatprep.subr.bf16.mxu0 0
  %1720 = vmatpush1.bf16.msra.mxu0 %v1702
  %1721 = vmatprep.subr.bf16.mxu0 0
  %1722 = vmatpush1.bf16.msra.mxu0 0
  %1723 = vmatprep.subr.bf16.mxu0 0
  %1724 = vmatpush1.bf16.msra.mxu0 0
  %1725 = vmatprep.subr.bf16.mxu0 0
  %1726 = vmatpush1.bf16.msra.mxu0 0
  %1727 = vmatprep.subr.bf16.mxu0 0
  %1728 = vmatpush1.bf16.msra.mxu0 0
  %1729 = vmatprep.subr.bf16.mxu0 0
  %1730 = vmatpush1.bf16.msra.mxu0 0
  %1731 = vmatprep.subr.bf16.mxu0 0
  %1732 = vmatpush1.bf16.msra.mxu0 0
  %1733 = vmatprep.subr.bf16.mxu0 0
  %1734 = vmatpush1.bf16.msra.mxu0 0
  %1735 = vmatprep.subr.bf16.mxu0 0
  %1736 = vmatpush1.bf16.msra.mxu0 0
  %1737 = vmatprep.subr.bf16.mxu0 0
  %1738 = vmatpush1.bf16.msra.mxu0 0
  %1739 = vmatprep.subr.bf16.mxu0 0
  %1740 = vmatpush1.bf16.msra.mxu0 0
  %1741 = vmatprep.subr.bf16.mxu0 0
  %1742 = vmatpush1.bf16.msra.mxu0 0
  %1743 = vmatprep.subr.bf16.mxu0 0
  %1744 = vmatpush1.bf16.msra.mxu0 0
  %1745 = vmatprep.mubr.bf16.mxu0 0
  %1746 = vmatmul.mubr.bf16.gmra.mrb[0].mxu0 %v1708
  %v1747 = vpop.f32.mrb[0].mxu0
  %v1748 = vadd.f32 %v1682, %v1747
  %v1749 = vpop.f32.mrb[0].mxu0
  %v1750 = vpop.f32.mrb[0].mxu0
  %v1751 = vadd.f32 %v1682, %v1750
  %v1752 = vpop.f32.mrb[0].mxu0
  %1753 = vmatprep.mubr.bf16.mxu0 0
  %1754 = vmatmul.mubr.bf16.gmra.mrb[0].mxu0 %v1711
  %v1755 = vpop.f32.mrb[0].mxu0
  %v1756 = vadd.f32 %v1682, %v1755
  %v1757 = vpop.f32.mrb[0].mxu0
  %v1758 = vpop.f32.mrb[0].mxu0
  %v1759 = vadd.f32 %v1682, %v1758
  %v1760 = vpop.f32.mrb[0].mxu0
  %1761 = vdwg.mxu0
  %v1762 = vadd.f32 %v1582, %v1748
  %v1763 = vadd.f32 %v1583, %v1751
  %v1764 = vadd.f32 %v1584, %v1756
  %v1765 = vadd.f32 %v1585, %v1759
  %v1766 = vld [vmem:[%s2 + $0xe8] sm:$0x1]
  %v1767 = vld [vmem:[%s2 + $0xf0] sm:$0x1]
  %v1768 = vsel %vm302, %v1762, 0.0
  %1769 = vadd.xlane.f32.xlu0 %v1768
  %v1770 = vpop.xlane.xlu0 %1769
  %v1771 = vsel %vm302, %v1763, 0.0
  %1772 = vadd.xlane.f32.xlu0 %v1771
  %v1773 = vpop.xlane.xlu0 %1772
  %v1774 = vsel %vm302, %v1764, 0.0
  %1775 = vadd.xlane.f32.xlu0 %v1774
  %v1776 = vpop.xlane.xlu0 %1775
  %v1777 = vsel %vm302, %v1765, 0.0
  %1778 = vadd.xlane.f32.xlu0 %v1777
  %v1779 = vpop.xlane.xlu0 %1778
  %v1780 = vmul.f32 %v1770, %v1529
  %v1781 = vmul.f32 %v1773, %v1529
  %v1782 = vmul.f32 %v1776, %v1529
  %v1783 = vmul.f32 %v1779, %v1529
  %v1784 = vsub.f32 %v1762, %v1780
  %v1785 = vsub.f32 %v1763, %v1781
  %v1786 = vsub.f32 %v1764, %v1782
  %v1787 = vsub.f32 %v1765, %v1783
  %v1788 = vmul.f32 %v1784, %v1784
  %v1789 = vmul.f32 %v1785, %v1785
  %v1790 = vmul.f32 %v1786, %v1786
  %v1791 = vmul.f32 %v1787, %v1787
  %v1792 = vsel %vm302, %v1788, 0.0
  %1793 = vadd.xlane.f32.xlu0 %v1792
  %v1794 = vpop.xlane.xlu0 %1793
  %v1795 = vsel %vm302, %v1789, 0.0
  %1796 = vadd.xlane.f32.xlu0 %v1795
  %v1797 = vpop.xlane.xlu0 %1796
  %v1798 = vsel %vm302, %v1790, 0.0
  %1799 = vadd.xlane.f32.xlu0 %v1798
  %v1800 = vpop.xlane.xlu0 %1799
  %v1801 = vsel %vm302, %v1791, 0.0
  %1802 = vadd.xlane.f32.xlu0 %v1801
  %v1803 = vpop.xlane.xlu0 %1802
  %v1804 = vmul.f32 %v1794, %v1529
  %v1805 = vmul.f32 %v1797, %v1529
  %v1806 = vmul.f32 %v1800, %v1529
  %v1807 = vmul.f32 %v1803, %v1529
  %v1808 = vadd.f32 %v1804, 1e-05
  %v1809 = vadd.f32 %v1805, 1e-05
  %v1810 = vadd.f32 %v1806, 1e-05
  %v1811 = vadd.f32 %v1807, 1e-05
  %v1812 = vrsqrt.pop %v1808
  %v1813 = vrsqrt.pop %v1809
  %v1814 = vrsqrt.pop %v1810
  %v1815 = vrsqrt.pop %v1811
  %v1816 = vmul.f32 %v1784, %v1812
  %v1817 = vmul.f32 %v1785, %v1813
  %v1818 = vmul.f32 %v1786, %v1814
  %v1819 = vmul.f32 %v1787, %v1815
  %v1820 = vlaneseq
  %v1821 = vshrl.u32 %v1820, 7
  %v1822 = vsub.s32 0, %v1821
  %v1823 = vrot.slane %v1766, %v1822
  %v1824 = vmul.f32 %v1816, %v1823
  %v1825 = vmul.f32 %v1817, %v1823
  %v1826 = vmul.f32 %v1818, %v1823
  %v1827 = vmul.f32 %v1819, %v1823
  %v1828 = vlaneseq
  %v1829 = vshrl.u32 %v1828, 7
  %v1830 = vsub.s32 0, %v1829
  %v1831 = vrot.slane %v1767, %v1830
  %v1832 = vadd.f32 %v1824, %v1831
  %v1833 = vadd.f32 %v1825, %v1831
  %v1834 = vadd.f32 %v1826, %v1831
  %v1835 = vadd.f32 %v1827, %v1831
  %v1836 = vadd.f32 %v1832, %v259
  %v1837 = vadd.f32 %v1833, %v260
  %v1838 = vadd.f32 %v1834, %v261
  %v1839 = vadd.f32 %v1835, %v262
  %v1840 = vpack.c.bf16 %v1837, %v1836
  %v1841 = vpack.c.bf16 %v1839, %v1838
  %v1842 = vpack.c.bf16 %v1833, %v1832
  %v1843 = vpack.c.bf16 %v1835, %v1834
  %v1844 = vadd.f32 %v263, 0.0
  %v1845 = vadd.f32 %v264, 0.0
  %v1846 = vpack.c.bf16 %v1845, %v1844
  %v1847 = vld [vmem:[%s1 + $0x118] sm:$0xf]
  %v1848 = vld [vmem:[%s1 + $0x11c] sm:$0xf]
  %v1849 = vld [vmem:[%s1 + $0x120] sm:$0xf]
  %v1850 = vld [vmem:[%s1 + $0x124] sm:$0xf]
  %v1851 = vld [vmem:[%s2 + $0xf8] sm:$0x1]
  %v1852 = vlaneseq
  %v1853 = vshrl.u32 %v1852, 7
  %v1854 = vsub.s32 0, %v1853
  %v1855 = vrot.slane %v1851, %v1854
  %v1860 = vunpack.c.l.b16 %v1847
  %v1861 = vunpack.c.l.b16 %v1848
  %v1862 = vunpack.c.l.b16 %v1849
  %v1863 = vunpack.c.l.b16 %v1850
  %v1864 = vpack.c.b16 %v1861, %v1860
  %v1865 = vpack.c.b16 %v1863, %v1862
  %v1869 = vsel %vm302, %v1846, 0
  %1871 = vmatprep.subr.bf16.mxu0 0
  %1872 = vmatpush1.bf16.msra.mxu0 %v1864
  %1873 = vmatprep.subr.bf16.mxu0 0
  %1874 = vmatpush1.bf16.msra.mxu0 %v1865
  %1875 = vmatprep.subr.bf16.mxu0 0
  %1876 = vmatpush1.bf16.msra.mxu0 0
  %1877 = vmatprep.subr.bf16.mxu0 0
  %1878 = vmatpush1.bf16.msra.mxu0 0
  %1879 = vmatprep.subr.bf16.mxu0 0
  %1880 = vmatpush1.bf16.msra.mxu0 0
  %1881 = vmatprep.subr.bf16.mxu0 0
  %1882 = vmatpush1.bf16.msra.mxu0 0
  %1883 = vmatprep.subr.bf16.mxu0 0
  %1884 = vmatpush1.bf16.msra.mxu0 0
  %1885 = vmatprep.subr.bf16.mxu0 0
  %1886 = vmatpush1.bf16.msra.mxu0 0
  %1887 = vmatprep.subr.bf16.mxu0 0
  %1888 = vmatpush1.bf16.msra.mxu0 0
  %1889 = vmatprep.subr.bf16.mxu0 0
  %1890 = vmatpush1.bf16.msra.mxu0 0
  %1891 = vmatprep.subr.bf16.mxu0 0
  %1892 = vmatpush1.bf16.msra.mxu0 0
  %1893 = vmatprep.subr.bf16.mxu0 0
  %1894 = vmatpush1.bf16.msra.mxu0 0
  %1895 = vmatprep.subr.bf16.mxu0 0
  %1896 = vmatpush1.bf16.msra.mxu0 0
  %1897 = vmatprep.subr.bf16.mxu0 0
  %1898 = vmatpush1.bf16.msra.mxu0 0
  %1899 = vmatprep.subr.bf16.mxu0 0
  %1900 = vmatpush1.bf16.msra.mxu0 0
  %1901 = vmatprep.subr.bf16.mxu0 0
  %1902 = vmatpush1.bf16.msra.mxu0 0
  %1903 = vmatprep.mubr.bf16.mxu0 0
  %1904 = vmatmul.mubr.bf16.gmra.mrb[0].mxu0 %v1869
  %v1905 = vpop.f32.mrb[0].mxu0
  %v1906 = vadd.f32 %v1855, %v1905
  %v1907 = vpop.f32.mrb[0].mxu0
  %v1908 = vpop.f32.mrb[0].mxu0
  %v1909 = vadd.f32 %v1855, %v1908
  %v1910 = vpop.f32.mrb[0].mxu0
  %1911 = vdwg.mxu0
  %v1912 = vpack.c.bf16 %v1909, %v1906
  %v1914 = vsel %vm302, %v1912, 0
  %1916 = vmatprep.subr.bf16.mxu0 0
  %1917 = vmatpush1.bf16.xpose.msra.mxu0 %v1869
  %1918 = vmatprep.subr.bf16.mxu0 0
  %1919 = vmatpush1.bf16.xpose.msra.mxu0 0
  %1920 = vmatprep.subr.bf16.mxu0 0
  %1921 = vmatpush1.bf16.xpose.msra.mxu0 0
  %1922 = vmatprep.subr.bf16.mxu0 0
  %1923 = vmatpush1.bf16.xpose.msra.mxu0 0
  %1924 = vmatprep.subr.bf16.mxu0 0
  %1925 = vmatpush1.bf16.xpose.msra.mxu0 0
  %1926 = vmatprep.subr.bf16.mxu0 0
  %1927 = vmatpush1.bf16.xpose.msra.mxu0 0
  %1928 = vmatprep.subr.bf16.mxu0 0
  %1929 = vmatpush1.bf16.xpose.msra.mxu0 0
  %1930 = vmatprep.subr.bf16.mxu0 0
  %1931 = vmatpush1.bf16.xpose.msra.mxu0 0
  %1932 = vmatprep.subr.bf16.mxu0 0
  %1933 = vmatpush1.bf16.xpose.msra.mxu0 0
  %1934 = vmatprep.subr.bf16.mxu0 0
  %1935 = vmatpush1.bf16.xpose.msra.mxu0 0
  %1936 = vmatprep.subr.bf16.mxu0 0
  %1937 = vmatpush1.bf16.xpose.msra.mxu0 0
  %1938 = vmatprep.subr.bf16.mxu0 0
  %1939 = vmatpush1.bf16.xpose.msra.mxu0 0
  %1940 = vmatprep.subr.bf16.mxu0 0
  %1941 = vmatpush1.bf16.xpose.msra.mxu0 0
  %1942 = vmatprep.subr.bf16.mxu0 0
  %1943 = vmatpush1.bf16.xpose.msra.mxu0 0
  %1944 = vmatprep.subr.bf16.mxu0 0
  %1945 = vmatpush1.bf16.xpose.msra.mxu0 0
  %1946 = vmatprep.subr.bf16.mxu0 0
  %1947 = vmatpush1.bf16.xpose.msra.mxu0 0
  %1948 = vmatprep.mubr.bf16.mxu0 0
  %1949 = vmatmul.mubr.bf16.gmra.mrb[0].mxu0 %v1914
  %v1950 = vpop.f32.mrb[0].mxu0
  %v1951 = vadd.f32 %v269, %v1950
  %v1952 = vpop.f32.mrb[0].mxu0
  %v1953 = vpop.f32.mrb[0].mxu0
  %v1954 = vadd.f32 %v270, %v1953
  %v1955 = vpop.f32.mrb[0].mxu0
  %1956 = vdwg.mxu0
  %v1957 = vsel %vm203, %v1951, -inf
  %1958 = vmax.xlane.f32.xlu0 %v1957
  %v1959 = vpop.xlane.xlu0 %1958
  %v1960 = vsel %vm203, %v1954, -inf
  %1961 = vmax.xlane.f32.xlu0 %v1960
  %v1962 = vpop.xlane.xlu0 %1961
  %v1963 = vsub.f32 %v1951, %v1959
  %v1964 = vsub.f32 %v1954, %v1962
  %v1965 = vmul.f32 %v1963, 1.442695
  %v1966 = vpow.pop %v1965
  %v1967 = vmul.f32 %v1964, 1.442695
  %v1968 = vpow.pop %v1967
  %v1969 = vsel %vm203, %v1966, 0.0
  %1970 = vadd.xlane.f32.xlu0 %v1969
  %v1971 = vpop.xlane.xlu0 %1970
  %v1972 = vsel %vm203, %v1968, 0.0
  %1973 = vadd.xlane.f32.xlu0 %v1972
  %v1974 = vpop.xlane.xlu0 %1973
  %v1975 = vrcp.pop %v1971
  %v1976 = vrcp.pop %v1974
  %v1977 = vmul.f32 %v1966, %v1975
  %v1978 = vmul.f32 %v1968, %v1976
  %v1979 = vpack.c.bf16 %v1978, %v1977
  %v1980 = vld [vmem:[%s1 + $0x128] sm:$0xf]
  %v1981 = vld [vmem:[%s1 + $0x12c] sm:$0xf]
  %v1982 = vld [vmem:[%s1 + $0x130] sm:$0xf]
  %v1983 = vld [vmem:[%s1 + $0x134] sm:$0xf]
  %v1984 = vld [vmem:[%s2 + $0x100] sm:$0x1]
  %v1985 = vlaneseq
  %v1986 = vshrl.u32 %v1985, 7
  %v1987 = vsub.s32 0, %v1986
  %v1988 = vrot.slane %v1984, %v1987
  %v1993 = vunpack.c.l.b16 %v1980
  %v1994 = vunpack.c.l.b16 %v1981
  %v1995 = vunpack.c.l.b16 %v1982
  %v1996 = vunpack.c.l.b16 %v1983
  %v1997 = vpack.c.b16 %v1994, %v1993
  %v1998 = vpack.c.b16 %v1996, %v1995
  %v2002 = vsel %vm302, 0, 0
  %2004 = vmatprep.subr.bf16.mxu0 0
  %2005 = vmatpush1.bf16.msra.mxu0 %v1997
  %2006 = vmatprep.subr.bf16.mxu0 0
  %2007 = vmatpush1.bf16.msra.mxu0 %v1998
  %2008 = vmatprep.subr.bf16.mxu0 0
  %2009 = vmatpush1.bf16.msra.mxu0 0
  %2010 = vmatprep.subr.bf16.mxu0 0
  %2011 = vmatpush1.bf16.msra.mxu0 0
  %2012 = vmatprep.subr.bf16.mxu0 0
  %2013 = vmatpush1.bf16.msra.mxu0 0
  %2014 = vmatprep.subr.bf16.mxu0 0
  %2015 = vmatpush1.bf16.msra.mxu0 0
  %2016 = vmatprep.subr.bf16.mxu0 0
  %2017 = vmatpush1.bf16.msra.mxu0 0
  %2018 = vmatprep.subr.bf16.mxu0 0
  %2019 = vmatpush1.bf16.msra.mxu0 0
  %2020 = vmatprep.subr.bf16.mxu0 0
  %2021 = vmatpush1.bf16.msra.mxu0 0
  %2022 = vmatprep.subr.bf16.mxu0 0
  %2023 = vmatpush1.bf16.msra.mxu0 0
  %2024 = vmatprep.subr.bf16.mxu0 0
  %2025 = vmatpush1.bf16.msra.mxu0 0
  %2026 = vmatprep.subr.bf16.mxu0 0
  %2027 = vmatpush1.bf16.msra.mxu0 0
  %2028 = vmatprep.subr.bf16.mxu0 0
  %2029 = vmatpush1.bf16.msra.mxu0 0
  %2030 = vmatprep.subr.bf16.mxu0 0
  %2031 = vmatpush1.bf16.msra.mxu0 0
  %2032 = vmatprep.subr.bf16.mxu0 0
  %2033 = vmatpush1.bf16.msra.mxu0 0
  %2034 = vmatprep.subr.bf16.mxu0 0
  %2035 = vmatpush1.bf16.msra.mxu0 0
  %2036 = vmatprep.mubr.bf16.mxu0 0
  %2037 = vmatmul.mubr.bf16.gmra.mrb[0].mxu0 %v2002
  %v2038 = vpop.f32.mrb[0].mxu0
  %v2039 = vadd.f32 %v1988, %v2038
  %v2040 = vpop.f32.mrb[0].mxu0
  %v2041 = vpop.f32.mrb[0].mxu0
  %v2042 = vadd.f32 %v1988, %v2041
  %v2043 = vpop.f32.mrb[0].mxu0
  %2044 = vdwg.mxu0
  %v2045 = vpack.c.bf16 %v2042, %v2039
  %v2046 = vld [vmem:[%s1 + $0x138] sm:$0xf]
  %v2047 = vld [vmem:[%s1 + $0x13c] sm:$0xf]
  %v2048 = vld [vmem:[%s1 + $0x140] sm:$0xf]
  %v2049 = vld [vmem:[%s1 + $0x144] sm:$0xf]
  %v2050 = vld [vmem:[%s2 + $0x108] sm:$0x1]
  %v2051 = vlaneseq
  %v2052 = vshrl.u32 %v2051, 7
  %v2053 = vsub.s32 0, %v2052
  %v2054 = vrot.slane %v2050, %v2053
  %v2059 = vunpack.c.l.b16 %v2046
  %v2060 = vunpack.c.l.b16 %v2047
  %v2061 = vunpack.c.l.b16 %v2048
  %v2062 = vunpack.c.l.b16 %v2049
  %v2063 = vpack.c.b16 %v2060, %v2059
  %v2064 = vpack.c.b16 %v2062, %v2061
  %2067 = vmatprep.subr.bf16.mxu0 0
  %2068 = vmatpush1.bf16.msra.mxu0 %v2063
  %2069 = vmatprep.subr.bf16.mxu0 0
  %2070 = vmatpush1.bf16.msra.mxu0 %v2064
  %2071 = vmatprep.subr.bf16.mxu0 0
  %2072 = vmatpush1.bf16.msra.mxu0 0
  %2073 = vmatprep.subr.bf16.mxu0 0
  %2074 = vmatpush1.bf16.msra.mxu0 0
  %2075 = vmatprep.subr.bf16.mxu0 0
  %2076 = vmatpush1.bf16.msra.mxu0 0
  %2077 = vmatprep.subr.bf16.mxu0 0
  %2078 = vmatpush1.bf16.msra.mxu0 0
  %2079 = vmatprep.subr.bf16.mxu0 0
  %2080 = vmatpush1.bf16.msra.mxu0 0
  %2081 = vmatprep.subr.bf16.mxu0 0
  %2082 = vmatpush1.bf16.msra.mxu0 0
  %2083 = vmatprep.subr.bf16.mxu0 0
  %2084 = vmatpush1.bf16.msra.mxu0 0
  %2085 = vmatprep.subr.bf16.mxu0 0
  %2086 = vmatpush1.bf16.msra.mxu0 0
  %2087 = vmatprep.subr.bf16.mxu0 0
  %2088 = vmatpush1.bf16.msra.mxu0 0
  %2089 = vmatprep.subr.bf16.mxu0 0
  %2090 = vmatpush1.bf16.msra.mxu0 0
  %2091 = vmatprep.subr.bf16.mxu0 0
  %2092 = vmatpush1.bf16.msra.mxu0 0
  %2093 = vmatprep.subr.bf16.mxu0 0
  %2094 = vmatpush1.bf16.msra.mxu0 0
  %2095 = vmatprep.subr.bf16.mxu0 0
  %2096 = vmatpush1.bf16.msra.mxu0 0
  %2097 = vmatprep.subr.bf16.mxu0 0
  %2098 = vmatpush1.bf16.msra.mxu0 0
  %2099 = vmatprep.mubr.bf16.mxu0 0
  %2100 = vmatmul.mubr.bf16.gmra.mrb[0].mxu0 %v1869
  %v2101 = vpop.f32.mrb[0].mxu0
  %v2102 = vadd.f32 %v2054, %v2101
  %v2103 = vpop.f32.mrb[0].mxu0
  %v2104 = vpop.f32.mrb[0].mxu0
  %v2105 = vadd.f32 %v2054, %v2104
  %v2106 = vpop.f32.mrb[0].mxu0
  %2107 = vdwg.mxu0
  %v2108 = vpack.c.bf16 %v2105, %v2102
  %v2110 = vsel %vm302, %v2108, 0
  %2112 = vmatprep.subr.bf16.mxu0 0
  %2113 = vmatpush1.bf16.xpose.msra.mxu0 %v1869
  %2114 = vmatprep.subr.bf16.mxu0 0
  %2115 = vmatpush1.bf16.xpose.msra.mxu0 0
  %2116 = vmatprep.subr.bf16.mxu0 0
  %2117 = vmatpush1.bf16.xpose.msra.mxu0 0
  %2118 = vmatprep.subr.bf16.mxu0 0
  %2119 = vmatpush1.bf16.xpose.msra.mxu0 0
  %2120 = vmatprep.subr.bf16.mxu0 0
  %2121 = vmatpush1.bf16.xpose.msra.mxu0 0
  %2122 = vmatprep.subr.bf16.mxu0 0
  %2123 = vmatpush1.bf16.xpose.msra.mxu0 0
  %2124 = vmatprep.subr.bf16.mxu0 0
  %2125 = vmatpush1.bf16.xpose.msra.mxu0 0
  %2126 = vmatprep.subr.bf16.mxu0 0
  %2127 = vmatpush1.bf16.xpose.msra.mxu0 0
  %2128 = vmatprep.subr.bf16.mxu0 0
  %2129 = vmatpush1.bf16.xpose.msra.mxu0 0
  %2130 = vmatprep.subr.bf16.mxu0 0
  %2131 = vmatpush1.bf16.xpose.msra.mxu0 0
  %2132 = vmatprep.subr.bf16.mxu0 0
  %2133 = vmatpush1.bf16.xpose.msra.mxu0 0
  %2134 = vmatprep.subr.bf16.mxu0 0
  %2135 = vmatpush1.bf16.xpose.msra.mxu0 0
  %2136 = vmatprep.subr.bf16.mxu0 0
  %2137 = vmatpush1.bf16.xpose.msra.mxu0 0
  %2138 = vmatprep.subr.bf16.mxu0 0
  %2139 = vmatpush1.bf16.xpose.msra.mxu0 0
  %2140 = vmatprep.subr.bf16.mxu0 0
  %2141 = vmatpush1.bf16.xpose.msra.mxu0 0
  %2142 = vmatprep.subr.bf16.mxu0 0
  %2143 = vmatpush1.bf16.xpose.msra.mxu0 0
  %2144 = vmatprep.mubr.bf16.mxu0 0
  %2145 = vmatmul.mubr.bf16.gmra.mrb[0].mxu0 %v2110
  %v2146 = vpop.f32.mrb[0].mxu0
  %v2147 = vadd.f32 %v269, %v2146
  %v2148 = vpop.f32.mrb[0].mxu0
  %v2149 = vpop.f32.mrb[0].mxu0
  %v2150 = vadd.f32 %v270, %v2149
  %v2151 = vpop.f32.mrb[0].mxu0
  %2152 = vdwg.mxu0
  %v2153 = vsel %vm203, %v2147, -inf
  %2154 = vmax.xlane.f32.xlu0 %v2153
  %v2155 = vpop.xlane.xlu0 %2154
  %v2156 = vsel %vm203, %v2150, -inf
  %2157 = vmax.xlane.f32.xlu0 %v2156
  %v2158 = vpop.xlane.xlu0 %2157
  %v2159 = vsub.f32 %v2147, %v2155
  %v2160 = vsub.f32 %v2150, %v2158
  %v2161 = vmul.f32 %v2159, 1.442695
  %v2162 = vpow.pop %v2161
  %v2163 = vmul.f32 %v2160, 1.442695
  %v2164 = vpow.pop %v2163
  %v2165 = vsel %vm203, %v2162, 0.0
  %2166 = vadd.xlane.f32.xlu0 %v2165
  %v2167 = vpop.xlane.xlu0 %2166
  %v2168 = vsel %vm203, %v2164, 0.0
  %2169 = vadd.xlane.f32.xlu0 %v2168
  %v2170 = vpop.xlane.xlu0 %2169
  %v2171 = vrcp.pop %v2167
  %v2172 = vrcp.pop %v2170
  %v2173 = vmul.f32 %v2162, %v2171
  %v2174 = vmul.f32 %v2164, %v2172
  %v2175 = vpack.c.bf16 %v2174, %v2173
  %v2176 = vld [vmem:[%s1 + $0x148] sm:$0xf]
  %v2177 = vld [vmem:[%s1 + $0x14c] sm:$0xf]
  %v2178 = vld [vmem:[%s1 + $0x150] sm:$0xf]
  %v2179 = vld [vmem:[%s1 + $0x154] sm:$0xf]
  %v2180 = vld [vmem:[%s2 + $0x110] sm:$0x1]
  %v2181 = vlaneseq
  %v2182 = vshrl.u32 %v2181, 7
  %v2183 = vsub.s32 0, %v2182
  %v2184 = vrot.slane %v2180, %v2183
  %v2189 = vunpack.c.l.b16 %v2176
  %v2190 = vunpack.c.l.b16 %v2177
  %v2191 = vunpack.c.l.b16 %v2178
  %v2192 = vunpack.c.l.b16 %v2179
  %v2193 = vpack.c.b16 %v2190, %v2189
  %v2194 = vpack.c.b16 %v2192, %v2191
  %2197 = vmatprep.subr.bf16.mxu0 0
  %2198 = vmatpush1.bf16.msra.mxu0 %v2193
  %2199 = vmatprep.subr.bf16.mxu0 0
  %2200 = vmatpush1.bf16.msra.mxu0 %v2194
  %2201 = vmatprep.subr.bf16.mxu0 0
  %2202 = vmatpush1.bf16.msra.mxu0 0
  %2203 = vmatprep.subr.bf16.mxu0 0
  %2204 = vmatpush1.bf16.msra.mxu0 0
  %2205 = vmatprep.subr.bf16.mxu0 0
  %2206 = vmatpush1.bf16.msra.mxu0 0
  %2207 = vmatprep.subr.bf16.mxu0 0
  %2208 = vmatpush1.bf16.msra.mxu0 0
  %2209 = vmatprep.subr.bf16.mxu0 0
  %2210 = vmatpush1.bf16.msra.mxu0 0
  %2211 = vmatprep.subr.bf16.mxu0 0
  %2212 = vmatpush1.bf16.msra.mxu0 0
  %2213 = vmatprep.subr.bf16.mxu0 0
  %2214 = vmatpush1.bf16.msra.mxu0 0
  %2215 = vmatprep.subr.bf16.mxu0 0
  %2216 = vmatpush1.bf16.msra.mxu0 0
  %2217 = vmatprep.subr.bf16.mxu0 0
  %2218 = vmatpush1.bf16.msra.mxu0 0
  %2219 = vmatprep.subr.bf16.mxu0 0
  %2220 = vmatpush1.bf16.msra.mxu0 0
  %2221 = vmatprep.subr.bf16.mxu0 0
  %2222 = vmatpush1.bf16.msra.mxu0 0
  %2223 = vmatprep.subr.bf16.mxu0 0
  %2224 = vmatpush1.bf16.msra.mxu0 0
  %2225 = vmatprep.subr.bf16.mxu0 0
  %2226 = vmatpush1.bf16.msra.mxu0 0
  %2227 = vmatprep.subr.bf16.mxu0 0
  %2228 = vmatpush1.bf16.msra.mxu0 0
  %2229 = vmatprep.mubr.bf16.mxu0 0
  %2230 = vmatmul.mubr.bf16.gmra.mrb[0].mxu0 %v2002
  %v2231 = vpop.f32.mrb[0].mxu0
  %v2232 = vadd.f32 %v2184, %v2231
  %v2233 = vpop.f32.mrb[0].mxu0
  %v2234 = vpop.f32.mrb[0].mxu0
  %v2235 = vadd.f32 %v2184, %v2234
  %v2236 = vpop.f32.mrb[0].mxu0
  %2237 = vdwg.mxu0
  %v2238 = vpack.c.bf16 %v2235, %v2232
  %v2240 = vsel %vm203, %v2175, 0
  %2242 = vmatprep.subr.bf16.mxu0 0
  %2243 = vmatpush1.bf16.msra.mxu0 %v2238
  %2244 = vmatprep.subr.bf16.mxu0 0
  %2245 = vmatpush1.bf16.msra.mxu0 0
  %2246 = vmatprep.subr.bf16.mxu0 0
  %2247 = vmatpush1.bf16.msra.mxu0 0
  %2248 = vmatprep.subr.bf16.mxu0 0
  %2249 = vmatpush1.bf16.msra.mxu0 0
  %2250 = vmatprep.subr.bf16.mxu0 0
  %2251 = vmatpush1.bf16.msra.mxu0 0
  %2252 = vmatprep.subr.bf16.mxu0 0
  %2253 = vmatpush1.bf16.msra.mxu0 0
  %2254 = vmatprep.subr.bf16.mxu0 0
  %2255 = vmatpush1.bf16.msra.mxu0 0
  %2256 = vmatprep.subr.bf16.mxu0 0
  %2257 = vmatpush1.bf16.msra.mxu0 0
  %2258 = vmatprep.subr.bf16.mxu0 0
  %2259 = vmatpush1.bf16.msra.mxu0 0
  %2260 = vmatprep.subr.bf16.mxu0 0
  %2261 = vmatpush1.bf16.msra.mxu0 0
  %2262 = vmatprep.subr.bf16.mxu0 0
  %2263 = vmatpush1.bf16.msra.mxu0 0
  %2264 = vmatprep.subr.bf16.mxu0 0
  %2265 = vmatpush1.bf16.msra.mxu0 0
  %2266 = vmatprep.subr.bf16.mxu0 0
  %2267 = vmatpush1.bf16.msra.mxu0 0
  %2268 = vmatprep.subr.bf16.mxu0 0
  %2269 = vmatpush1.bf16.msra.mxu0 0
  %2270 = vmatprep.subr.bf16.mxu0 0
  %2271 = vmatpush1.bf16.msra.mxu0 0
  %2272 = vmatprep.subr.bf16.mxu0 0
  %2273 = vmatpush1.bf16.msra.mxu0 0
  %2274 = vmatprep.mubr.bf16.mxu0 0
  %2275 = vmatmul.mubr.bf16.gmra.mrb[0].mxu0 %v2240
  %v2276 = vpop.f32.mrb[0].mxu0
  %v2277 = vadd.f32 0.0, %v2276
  %v2278 = vpop.f32.mrb[0].mxu0
  %v2279 = vpop.f32.mrb[0].mxu0
  %v2280 = vadd.f32 0.0, %v2279
  %v2281 = vpop.f32.mrb[0].mxu0
  %2282 = vdwg.mxu0
  %v2284 = vsel %vm203, %v1979, 0
  %2286 = vmatprep.subr.bf16.mxu0 0
  %2287 = vmatpush1.bf16.msra.mxu0 %v2045
  %2288 = vmatprep.subr.bf16.mxu0 0
  %2289 = vmatpush1.bf16.msra.mxu0 0
  %2290 = vmatprep.subr.bf16.mxu0 0
  %2291 = vmatpush1.bf16.msra.mxu0 0
  %2292 = vmatprep.subr.bf16.mxu0 0
  %2293 = vmatpush1.bf16.msra.mxu0 0
  %2294 = vmatprep.subr.bf16.mxu0 0
  %2295 = vmatpush1.bf16.msra.mxu0 0
  %2296 = vmatprep.subr.bf16.mxu0 0
  %2297 = vmatpush1.bf16.msra.mxu0 0
  %2298 = vmatprep.subr.bf16.mxu0 0
  %2299 = vmatpush1.bf16.msra.mxu0 0
  %2300 = vmatprep.subr.bf16.mxu0 0
  %2301 = vmatpush1.bf16.msra.mxu0 0
  %2302 = vmatprep.subr.bf16.mxu0 0
  %2303 = vmatpush1.bf16.msra.mxu0 0
  %2304 = vmatprep.subr.bf16.mxu0 0
  %2305 = vmatpush1.bf16.msra.mxu0 0
  %2306 = vmatprep.subr.bf16.mxu0 0
  %2307 = vmatpush1.bf16.msra.mxu0 0
  %2308 = vmatprep.subr.bf16.mxu0 0
  %2309 = vmatpush1.bf16.msra.mxu0 0
  %2310 = vmatprep.subr.bf16.mxu0 0
  %2311 = vmatpush1.bf16.msra.mxu0 0
  %2312 = vmatprep.subr.bf16.mxu0 0
  %2313 = vmatpush1.bf16.msra.mxu0 0
  %2314 = vmatprep.subr.bf16.mxu0 0
  %2315 = vmatpush1.bf16.msra.mxu0 0
  %2316 = vmatprep.subr.bf16.mxu0 0
  %2317 = vmatpush1.bf16.msra.mxu0 0
  %2318 = vmatprep.mubr.bf16.mxu0 0
  %2319 = vmatmul.mubr.bf16.gmra.mrb[0].mxu0 %v2284
  %v2320 = vpop.f32.mrb[0].mxu0
  %v2321 = vadd.f32 %v2277, %v2320
  %v2322 = vpop.f32.mrb[0].mxu0
  %v2323 = vpop.f32.mrb[0].mxu0
  %v2324 = vadd.f32 %v2280, %v2323
  %v2325 = vpop.f32.mrb[0].mxu0
  %2326 = vdwg.mxu0
  %v2327 = vld [vmem:[%s1 + $0x158] sm:$0xf]
  %v2328 = vld [vmem:[%s1 + $0x15c] sm:$0xf]
  %v2329 = vld [vmem:[%s1 + $0x160] sm:$0xf]
  %v2330 = vld [vmem:[%s1 + $0x164] sm:$0xf]
  %v2331 = vld [vmem:[%s2 + $0x118] sm:$0x1]
  %v2332 = vlaneseq
  %v2333 = vshrl.u32 %v2332, 7
  %v2334 = vsub.s32 0, %v2333
  %v2335 = vrot.slane %v2331, %v2334
  %v2340 = vunpack.c.l.b16 %v2327
  %v2341 = vunpack.c.l.b16 %v2328
  %v2342 = vunpack.c.l.b16 %v2329
  %v2343 = vunpack.c.l.b16 %v2330
  %v2344 = vpack.c.b16 %v2341, %v2340
  %v2345 = vpack.c.b16 %v2343, %v2342
  %2348 = vmatprep.subr.bf16.mxu0 0
  %2349 = vmatpush1.bf16.msra.mxu0 %v2344
  %2350 = vmatprep.subr.bf16.mxu0 0
  %2351 = vmatpush1.bf16.msra.mxu0 %v2345
  %2352 = vmatprep.subr.bf16.mxu0 0
  %2353 = vmatpush1.bf16.msra.mxu0 0
  %2354 = vmatprep.subr.bf16.mxu0 0
  %2355 = vmatpush1.bf16.msra.mxu0 0
  %2356 = vmatprep.subr.bf16.mxu0 0
  %2357 = vmatpush1.bf16.msra.mxu0 0
  %2358 = vmatprep.subr.bf16.mxu0 0
  %2359 = vmatpush1.bf16.msra.mxu0 0
  %2360 = vmatprep.subr.bf16.mxu0 0
  %2361 = vmatpush1.bf16.msra.mxu0 0
  %2362 = vmatprep.subr.bf16.mxu0 0
  %2363 = vmatpush1.bf16.msra.mxu0 0
  %2364 = vmatprep.subr.bf16.mxu0 0
  %2365 = vmatpush1.bf16.msra.mxu0 0
  %2366 = vmatprep.subr.bf16.mxu0 0
  %2367 = vmatpush1.bf16.msra.mxu0 0
  %2368 = vmatprep.subr.bf16.mxu0 0
  %2369 = vmatpush1.bf16.msra.mxu0 0
  %2370 = vmatprep.subr.bf16.mxu0 0
  %2371 = vmatpush1.bf16.msra.mxu0 0
  %2372 = vmatprep.subr.bf16.mxu0 0
  %2373 = vmatpush1.bf16.msra.mxu0 0
  %2374 = vmatprep.subr.bf16.mxu0 0
  %2375 = vmatpush1.bf16.msra.mxu0 0
  %2376 = vmatprep.subr.bf16.mxu0 0
  %2377 = vmatpush1.bf16.msra.mxu0 0
  %2378 = vmatprep.subr.bf16.mxu0 0
  %2379 = vmatpush1.bf16.msra.mxu0 0
  %2380 = vmatprep.mubr.bf16.mxu0 0
  %2381 = vmatmul.mubr.bf16.gmra.mrb[0].mxu0 %v1869
  %v2382 = vpop.f32.mrb[0].mxu0
  %v2383 = vadd.f32 %v2335, %v2382
  %v2384 = vpop.f32.mrb[0].mxu0
  %v2385 = vpop.f32.mrb[0].mxu0
  %v2386 = vadd.f32 %v2335, %v2385
  %v2387 = vpop.f32.mrb[0].mxu0
  %2388 = vdwg.mxu0
  %v2389 = vpack.c.bf16 %v2386, %v2383
  %v2391 = vsel %vm302, %v2389, 0
  %2393 = vmatprep.subr.bf16.mxu0 0
  %2394 = vmatpush1.bf16.xpose.msra.mxu0 %v1869
  %2395 = vmatprep.subr.bf16.mxu0 0
  %2396 = vmatpush1.bf16.xpose.msra.mxu0 0
  %2397 = vmatprep.subr.bf16.mxu0 0
  %2398 = vmatpush1.bf16.xpose.msra.mxu0 0
  %2399 = vmatprep.subr.bf16.mxu0 0
  %2400 = vmatpush1.bf16.xpose.msra.mxu0 0
  %2401 = vmatprep.subr.bf16.mxu0 0
  %2402 = vmatpush1.bf16.xpose.msra.mxu0 0
  %2403 = vmatprep.subr.bf16.mxu0 0
  %2404 = vmatpush1.bf16.xpose.msra.mxu0 0
  %2405 = vmatprep.subr.bf16.mxu0 0
  %2406 = vmatpush1.bf16.xpose.msra.mxu0 0
  %2407 = vmatprep.subr.bf16.mxu0 0
  %2408 = vmatpush1.bf16.xpose.msra.mxu0 0
  %2409 = vmatprep.subr.bf16.mxu0 0
  %2410 = vmatpush1.bf16.xpose.msra.mxu0 0
  %2411 = vmatprep.subr.bf16.mxu0 0
  %2412 = vmatpush1.bf16.xpose.msra.mxu0 0
  %2413 = vmatprep.subr.bf16.mxu0 0
  %2414 = vmatpush1.bf16.xpose.msra.mxu0 0
  %2415 = vmatprep.subr.bf16.mxu0 0
  %2416 = vmatpush1.bf16.xpose.msra.mxu0 0
  %2417 = vmatprep.subr.bf16.mxu0 0
  %2418 = vmatpush1.bf16.xpose.msra.mxu0 0
  %2419 = vmatprep.subr.bf16.mxu0 0
  %2420 = vmatpush1.bf16.xpose.msra.mxu0 0
  %2421 = vmatprep.subr.bf16.mxu0 0
  %2422 = vmatpush1.bf16.xpose.msra.mxu0 0
  %2423 = vmatprep.subr.bf16.mxu0 0
  %2424 = vmatpush1.bf16.xpose.msra.mxu0 0
  %2425 = vmatprep.mubr.bf16.mxu0 0
  %2426 = vmatmul.mubr.bf16.gmra.mrb[0].mxu0 %v2391
  %v2427 = vpop.f32.mrb[0].mxu0
  %v2428 = vadd.f32 %v269, %v2427
  %v2429 = vpop.f32.mrb[0].mxu0
  %v2430 = vpop.f32.mrb[0].mxu0
  %v2431 = vadd.f32 %v270, %v2430
  %v2432 = vpop.f32.mrb[0].mxu0
  %2433 = vdwg.mxu0
  %v2434 = vsel %vm203, %v2428, -inf
  %2435 = vmax.xlane.f32.xlu0 %v2434
  %v2436 = vpop.xlane.xlu0 %2435
  %v2437 = vsel %vm203, %v2431, -inf
  %2438 = vmax.xlane.f32.xlu0 %v2437
  %v2439 = vpop.xlane.xlu0 %2438
  %v2440 = vsub.f32 %v2428, %v2436
  %v2441 = vsub.f32 %v2431, %v2439
  %v2442 = vmul.f32 %v2440, 1.442695
  %v2443 = vpow.pop %v2442
  %v2444 = vmul.f32 %v2441, 1.442695
  %v2445 = vpow.pop %v2444
  %v2446 = vsel %vm203, %v2443, 0.0
  %2447 = vadd.xlane.f32.xlu0 %v2446
  %v2448 = vpop.xlane.xlu0 %2447
  %v2449 = vsel %vm203, %v2445, 0.0
  %2450 = vadd.xlane.f32.xlu0 %v2449
  %v2451 = vpop.xlane.xlu0 %2450
  %v2452 = vrcp.pop %v2448
  %v2453 = vrcp.pop %v2451
  %v2454 = vmul.f32 %v2443, %v2452
  %v2455 = vmul.f32 %v2445, %v2453
  %v2456 = vpack.c.bf16 %v2455, %v2454
  %v2457 = vld [vmem:[%s1 + $0x168] sm:$0xf]
  %v2458 = vld [vmem:[%s1 + $0x16c] sm:$0xf]
  %v2459 = vld [vmem:[%s1 + $0x170] sm:$0xf]
  %v2460 = vld [vmem:[%s1 + $0x174] sm:$0xf]
  %v2461 = vld [vmem:[%s2 + $0x120] sm:$0x1]
  %v2462 = vlaneseq
  %v2463 = vshrl.u32 %v2462, 7
  %v2464 = vsub.s32 0, %v2463
  %v2465 = vrot.slane %v2461, %v2464
  %v2470 = vunpack.c.l.b16 %v2457
  %v2471 = vunpack.c.l.b16 %v2458
  %v2472 = vunpack.c.l.b16 %v2459
  %v2473 = vunpack.c.l.b16 %v2460
  %v2474 = vpack.c.b16 %v2471, %v2470
  %v2475 = vpack.c.b16 %v2473, %v2472
  %2478 = vmatprep.subr.bf16.mxu0 0
  %2479 = vmatpush1.bf16.msra.mxu0 %v2474
  %2480 = vmatprep.subr.bf16.mxu0 0
  %2481 = vmatpush1.bf16.msra.mxu0 %v2475
  %2482 = vmatprep.subr.bf16.mxu0 0
  %2483 = vmatpush1.bf16.msra.mxu0 0
  %2484 = vmatprep.subr.bf16.mxu0 0
  %2485 = vmatpush1.bf16.msra.mxu0 0
  %2486 = vmatprep.subr.bf16.mxu0 0
  %2487 = vmatpush1.bf16.msra.mxu0 0
  %2488 = vmatprep.subr.bf16.mxu0 0
  %2489 = vmatpush1.bf16.msra.mxu0 0
  %2490 = vmatprep.subr.bf16.mxu0 0
  %2491 = vmatpush1.bf16.msra.mxu0 0
  %2492 = vmatprep.subr.bf16.mxu0 0
  %2493 = vmatpush1.bf16.msra.mxu0 0
  %2494 = vmatprep.subr.bf16.mxu0 0
  %2495 = vmatpush1.bf16.msra.mxu0 0
  %2496 = vmatprep.subr.bf16.mxu0 0
  %2497 = vmatpush1.bf16.msra.mxu0 0
  %2498 = vmatprep.subr.bf16.mxu0 0
  %2499 = vmatpush1.bf16.msra.mxu0 0
  %2500 = vmatprep.subr.bf16.mxu0 0
  %2501 = vmatpush1.bf16.msra.mxu0 0
  %2502 = vmatprep.subr.bf16.mxu0 0
  %2503 = vmatpush1.bf16.msra.mxu0 0
  %2504 = vmatprep.subr.bf16.mxu0 0
  %2505 = vmatpush1.bf16.msra.mxu0 0
  %2506 = vmatprep.subr.bf16.mxu0 0
  %2507 = vmatpush1.bf16.msra.mxu0 0
  %2508 = vmatprep.subr.bf16.mxu0 0
  %2509 = vmatpush1.bf16.msra.mxu0 0
  %2510 = vmatprep.mubr.bf16.mxu0 0
  %2511 = vmatmul.mubr.bf16.gmra.mrb[0].mxu0 %v2002
  %v2512 = vpop.f32.mrb[0].mxu0
  %v2513 = vadd.f32 %v2465, %v2512
  %v2514 = vpop.f32.mrb[0].mxu0
  %v2515 = vpop.f32.mrb[0].mxu0
  %v2516 = vadd.f32 %v2465, %v2515
  %v2517 = vpop.f32.mrb[0].mxu0
  %2518 = vdwg.mxu0
  %v2519 = vpack.c.bf16 %v2516, %v2513
  %v2521 = vsel %vm203, %v2456, 0
  %2523 = vmatprep.subr.bf16.mxu0 0
  %2524 = vmatpush1.bf16.msra.mxu0 %v2519
  %2525 = vmatprep.subr.bf16.mxu0 0
  %2526 = vmatpush1.bf16.msra.mxu0 0
  %2527 = vmatprep.subr.bf16.mxu0 0
  %2528 = vmatpush1.bf16.msra.mxu0 0
  %2529 = vmatprep.subr.bf16.mxu0 0
  %2530 = vmatpush1.bf16.msra.mxu0 0
  %2531 = vmatprep.subr.bf16.mxu0 0
  %2532 = vmatpush1.bf16.msra.mxu0 0
  %2533 = vmatprep.subr.bf16.mxu0 0
  %2534 = vmatpush1.bf16.msra.mxu0 0
  %2535 = vmatprep.subr.bf16.mxu0 0
  %2536 = vmatpush1.bf16.msra.mxu0 0
  %2537 = vmatprep.subr.bf16.mxu0 0
  %2538 = vmatpush1.bf16.msra.mxu0 0
  %2539 = vmatprep.subr.bf16.mxu0 0
  %2540 = vmatpush1.bf16.msra.mxu0 0
  %2541 = vmatprep.subr.bf16.mxu0 0
  %2542 = vmatpush1.bf16.msra.mxu0 0
  %2543 = vmatprep.subr.bf16.mxu0 0
  %2544 = vmatpush1.bf16.msra.mxu0 0
  %2545 = vmatprep.subr.bf16.mxu0 0
  %2546 = vmatpush1.bf16.msra.mxu0 0
  %2547 = vmatprep.subr.bf16.mxu0 0
  %2548 = vmatpush1.bf16.msra.mxu0 0
  %2549 = vmatprep.subr.bf16.mxu0 0
  %2550 = vmatpush1.bf16.msra.mxu0 0
  %2551 = vmatprep.subr.bf16.mxu0 0
  %2552 = vmatpush1.bf16.msra.mxu0 0
  %2553 = vmatprep.subr.bf16.mxu0 0
  %2554 = vmatpush1.bf16.msra.mxu0 0
  %2555 = vmatprep.mubr.bf16.mxu0 0
  %2556 = vmatmul.mubr.bf16.gmra.mrb[0].mxu0 %v2521
  %v2557 = vpop.f32.mrb[0].mxu0
  %v2558 = vadd.f32 0.0, %v2557
  %v2559 = vpop.f32.mrb[0].mxu0
  %v2560 = vpop.f32.mrb[0].mxu0
  %v2561 = vadd.f32 0.0, %v2560
  %v2562 = vpop.f32.mrb[0].mxu0
  %2563 = vdwg.mxu0
  %v2564 = vadd.f32 %v2321, %v2558
  %v2565 = vadd.f32 %v2324, %v2561
  %v2566 = vld [vmem:[%s1 + $0x178] sm:$0xf]
  %v2567 = vld [vmem:[%s1 + $0x17c] sm:$0xf]
  %v2568 = vld [vmem:[%s1 + $0x180] sm:$0xf]
  %v2569 = vld [vmem:[%s1 + $0x184] sm:$0xf]
  %v2570 = vld [vmem:[%s2 + $0x128] sm:$0x1]
  %v2571 = vlaneseq
  %v2572 = vshrl.u32 %v2571, 7
  %v2573 = vsub.s32 0, %v2572
  %v2574 = vrot.slane %v2570, %v2573
  %v2579 = vunpack.c.l.b16 %v2566
  %v2580 = vunpack.c.l.b16 %v2567
  %v2581 = vunpack.c.l.b16 %v2568
  %v2582 = vunpack.c.l.b16 %v2569
  %v2583 = vpack.c.b16 %v2580, %v2579
  %v2584 = vpack.c.b16 %v2582, %v2581
  %2587 = vmatprep.subr.bf16.mxu0 0
  %2588 = vmatpush1.bf16.msra.mxu0 %v2583
  %2589 = vmatprep.subr.bf16.mxu0 0
  %2590 = vmatpush1.bf16.msra.mxu0 %v2584
  %2591 = vmatprep.subr.bf16.mxu0 0
  %2592 = vmatpush1.bf16.msra.mxu0 0
  %2593 = vmatprep.subr.bf16.mxu0 0
  %2594 = vmatpush1.bf16.msra.mxu0 0
  %2595 = vmatprep.subr.bf16.mxu0 0
  %2596 = vmatpush1.bf16.msra.mxu0 0
  %2597 = vmatprep.subr.bf16.mxu0 0
  %2598 = vmatpush1.bf16.msra.mxu0 0
  %2599 = vmatprep.subr.bf16.mxu0 0
  %2600 = vmatpush1.bf16.msra.mxu0 0
  %2601 = vmatprep.subr.bf16.mxu0 0
  %2602 = vmatpush1.bf16.msra.mxu0 0
  %2603 = vmatprep.subr.bf16.mxu0 0
  %2604 = vmatpush1.bf16.msra.mxu0 0
  %2605 = vmatprep.subr.bf16.mxu0 0
  %2606 = vmatpush1.bf16.msra.mxu0 0
  %2607 = vmatprep.subr.bf16.mxu0 0
  %2608 = vmatpush1.bf16.msra.mxu0 0
  %2609 = vmatprep.subr.bf16.mxu0 0
  %2610 = vmatpush1.bf16.msra.mxu0 0
  %2611 = vmatprep.subr.bf16.mxu0 0
  %2612 = vmatpush1.bf16.msra.mxu0 0
  %2613 = vmatprep.subr.bf16.mxu0 0
  %2614 = vmatpush1.bf16.msra.mxu0 0
  %2615 = vmatprep.subr.bf16.mxu0 0
  %2616 = vmatpush1.bf16.msra.mxu0 0
  %2617 = vmatprep.subr.bf16.mxu0 0
  %2618 = vmatpush1.bf16.msra.mxu0 0
  %2619 = vmatprep.mubr.bf16.mxu0 0
  %2620 = vmatmul.mubr.bf16.gmra.mrb[0].mxu0 %v1869
  %v2621 = vpop.f32.mrb[0].mxu0
  %v2622 = vadd.f32 %v2574, %v2621
  %v2623 = vpop.f32.mrb[0].mxu0
  %v2624 = vpop.f32.mrb[0].mxu0
  %v2625 = vadd.f32 %v2574, %v2624
  %v2626 = vpop.f32.mrb[0].mxu0
  %2627 = vdwg.mxu0
  %v2628 = vpack.c.bf16 %v2625, %v2622
  %v2630 = vsel %vm302, %v2628, 0
  %2632 = vmatprep.subr.bf16.mxu0 0
  %2633 = vmatpush1.bf16.xpose.msra.mxu0 %v1869
  %2634 = vmatprep.subr.bf16.mxu0 0
  %2635 = vmatpush1.bf16.xpose.msra.mxu0 0
  %2636 = vmatprep.subr.bf16.mxu0 0
  %2637 = vmatpush1.bf16.xpose.msra.mxu0 0
  %2638 = vmatprep.subr.bf16.mxu0 0
  %2639 = vmatpush1.bf16.xpose.msra.mxu0 0
  %2640 = vmatprep.subr.bf16.mxu0 0
  %2641 = vmatpush1.bf16.xpose.msra.mxu0 0
  %2642 = vmatprep.subr.bf16.mxu0 0
  %2643 = vmatpush1.bf16.xpose.msra.mxu0 0
  %2644 = vmatprep.subr.bf16.mxu0 0
  %2645 = vmatpush1.bf16.xpose.msra.mxu0 0
  %2646 = vmatprep.subr.bf16.mxu0 0
  %2647 = vmatpush1.bf16.xpose.msra.mxu0 0
  %2648 = vmatprep.subr.bf16.mxu0 0
  %2649 = vmatpush1.bf16.xpose.msra.mxu0 0
  %2650 = vmatprep.subr.bf16.mxu0 0
  %2651 = vmatpush1.bf16.xpose.msra.mxu0 0
  %2652 = vmatprep.subr.bf16.mxu0 0
  %2653 = vmatpush1.bf16.xpose.msra.mxu0 0
  %2654 = vmatprep.subr.bf16.mxu0 0
  %2655 = vmatpush1.bf16.xpose.msra.mxu0 0
  %2656 = vmatprep.subr.bf16.mxu0 0
  %2657 = vmatpush1.bf16.xpose.msra.mxu0 0
  %2658 = vmatprep.subr.bf16.mxu0 0
  %2659 = vmatpush1.bf16.xpose.msra.mxu0 0
  %2660 = vmatprep.subr.bf16.mxu0 0
  %2661 = vmatpush1.bf16.xpose.msra.mxu0 0
  %2662 = vmatprep.subr.bf16.mxu0 0
  %2663 = vmatpush1.bf16.xpose.msra.mxu0 0
  %2664 = vmatprep.mubr.bf16.mxu0 0
  %2665 = vmatmul.mubr.bf16.gmra.mrb[0].mxu0 %v2630
  %v2666 = vpop.f32.mrb[0].mxu0
  %v2667 = vadd.f32 %v269, %v2666
  %v2668 = vpop.f32.mrb[0].mxu0
  %v2669 = vpop.f32.mrb[0].mxu0
  %v2670 = vadd.f32 %v270, %v2669
  %v2671 = vpop.f32.mrb[0].mxu0
  %2672 = vdwg.mxu0
  %v2673 = vsel %vm203, %v2667, -inf
  %2674 = vmax.xlane.f32.xlu0 %v2673
  %v2675 = vpop.xlane.xlu0 %2674
  %v2676 = vsel %vm203, %v2670, -inf
  %2677 = vmax.xlane.f32.xlu0 %v2676
  %v2678 = vpop.xlane.xlu0 %2677
  %v2679 = vsub.f32 %v2667, %v2675
  %v2680 = vsub.f32 %v2670, %v2678
  %v2681 = vmul.f32 %v2679, 1.442695
  %v2682 = vpow.pop %v2681
  %v2683 = vmul.f32 %v2680, 1.442695
  %v2684 = vpow.pop %v2683
  %v2685 = vsel %vm203, %v2682, 0.0
  %2686 = vadd.xlane.f32.xlu0 %v2685
  %v2687 = vpop.xlane.xlu0 %2686
  %v2688 = vsel %vm203, %v2684, 0.0
  %2689 = vadd.xlane.f32.xlu0 %v2688
  %v2690 = vpop.xlane.xlu0 %2689
  %v2691 = vrcp.pop %v2687
  %v2692 = vrcp.pop %v2690
  %v2693 = vmul.f32 %v2682, %v2691
  %v2694 = vmul.f32 %v2684, %v2692
  %v2695 = vpack.c.bf16 %v2694, %v2693
  %v2696 = vld [vmem:[%s1 + $0x188] sm:$0xf]
  %v2697 = vld [vmem:[%s1 + $0x18c] sm:$0xf]
  %v2698 = vld [vmem:[%s1 + $0x190] sm:$0xf]
  %v2699 = vld [vmem:[%s1 + $0x194] sm:$0xf]
  %v2700 = vld [vmem:[%s2 + $0x130] sm:$0x1]
  %v2701 = vlaneseq
  %v2702 = vshrl.u32 %v2701, 7
  %v2703 = vsub.s32 0, %v2702
  %v2704 = vrot.slane %v2700, %v2703
  %v2709 = vunpack.c.l.b16 %v2696
  %v2710 = vunpack.c.l.b16 %v2697
  %v2711 = vunpack.c.l.b16 %v2698
  %v2712 = vunpack.c.l.b16 %v2699
  %v2713 = vpack.c.b16 %v2710, %v2709
  %v2714 = vpack.c.b16 %v2712, %v2711
  %2717 = vmatprep.subr.bf16.mxu0 0
  %2718 = vmatpush1.bf16.msra.mxu0 %v2713
  %2719 = vmatprep.subr.bf16.mxu0 0
  %2720 = vmatpush1.bf16.msra.mxu0 %v2714
  %2721 = vmatprep.subr.bf16.mxu0 0
  %2722 = vmatpush1.bf16.msra.mxu0 0
  %2723 = vmatprep.subr.bf16.mxu0 0
  %2724 = vmatpush1.bf16.msra.mxu0 0
  %2725 = vmatprep.subr.bf16.mxu0 0
  %2726 = vmatpush1.bf16.msra.mxu0 0
  %2727 = vmatprep.subr.bf16.mxu0 0
  %2728 = vmatpush1.bf16.msra.mxu0 0
  %2729 = vmatprep.subr.bf16.mxu0 0
  %2730 = vmatpush1.bf16.msra.mxu0 0
  %2731 = vmatprep.subr.bf16.mxu0 0
  %2732 = vmatpush1.bf16.msra.mxu0 0
  %2733 = vmatprep.subr.bf16.mxu0 0
  %2734 = vmatpush1.bf16.msra.mxu0 0
  %2735 = vmatprep.subr.bf16.mxu0 0
  %2736 = vmatpush1.bf16.msra.mxu0 0
  %2737 = vmatprep.subr.bf16.mxu0 0
  %2738 = vmatpush1.bf16.msra.mxu0 0
  %2739 = vmatprep.subr.bf16.mxu0 0
  %2740 = vmatpush1.bf16.msra.mxu0 0
  %2741 = vmatprep.subr.bf16.mxu0 0
  %2742 = vmatpush1.bf16.msra.mxu0 0
  %2743 = vmatprep.subr.bf16.mxu0 0
  %2744 = vmatpush1.bf16.msra.mxu0 0
  %2745 = vmatprep.subr.bf16.mxu0 0
  %2746 = vmatpush1.bf16.msra.mxu0 0
  %2747 = vmatprep.subr.bf16.mxu0 0
  %2748 = vmatpush1.bf16.msra.mxu0 0
  %2749 = vmatprep.mubr.bf16.mxu0 0
  %2750 = vmatmul.mubr.bf16.gmra.mrb[0].mxu0 %v2002
  %v2751 = vpop.f32.mrb[0].mxu0
  %v2752 = vadd.f32 %v2704, %v2751
  %v2753 = vpop.f32.mrb[0].mxu0
  %v2754 = vpop.f32.mrb[0].mxu0
  %v2755 = vadd.f32 %v2704, %v2754
  %v2756 = vpop.f32.mrb[0].mxu0
  %2757 = vdwg.mxu0
  %v2758 = vpack.c.bf16 %v2755, %v2752
  %v2760 = vsel %vm203, %v2695, 0
  %2762 = vmatprep.subr.bf16.mxu0 0
  %2763 = vmatpush1.bf16.msra.mxu0 %v2758
  %2764 = vmatprep.subr.bf16.mxu0 0
  %2765 = vmatpush1.bf16.msra.mxu0 0
  %2766 = vmatprep.subr.bf16.mxu0 0
  %2767 = vmatpush1.bf16.msra.mxu0 0
  %2768 = vmatprep.subr.bf16.mxu0 0
  %2769 = vmatpush1.bf16.msra.mxu0 0
  %2770 = vmatprep.subr.bf16.mxu0 0
  %2771 = vmatpush1.bf16.msra.mxu0 0
  %2772 = vmatprep.subr.bf16.mxu0 0
  %2773 = vmatpush1.bf16.msra.mxu0 0
  %2774 = vmatprep.subr.bf16.mxu0 0
  %2775 = vmatpush1.bf16.msra.mxu0 0
  %2776 = vmatprep.subr.bf16.mxu0 0
  %2777 = vmatpush1.bf16.msra.mxu0 0
  %2778 = vmatprep.subr.bf16.mxu0 0
  %2779 = vmatpush1.bf16.msra.mxu0 0
  %2780 = vmatprep.subr.bf16.mxu0 0
  %2781 = vmatpush1.bf16.msra.mxu0 0
  %2782 = vmatprep.subr.bf16.mxu0 0
  %2783 = vmatpush1.bf16.msra.mxu0 0
  %2784 = vmatprep.subr.bf16.mxu0 0
  %2785 = vmatpush1.bf16.msra.mxu0 0
  %2786 = vmatprep.subr.bf16.mxu0 0
  %2787 = vmatpush1.bf16.msra.mxu0 0
  %2788 = vmatprep.subr.bf16.mxu0 0
  %2789 = vmatpush1.bf16.msra.mxu0 0
  %2790 = vmatprep.subr.bf16.mxu0 0
  %2791 = vmatpush1.bf16.msra.mxu0 0
  %2792 = vmatprep.subr.bf16.mxu0 0
  %2793 = vmatpush1.bf16.msra.mxu0 0
  %2794 = vmatprep.mubr.bf16.mxu0 0
  %2795 = vmatmul.mubr.bf16.gmra.mrb[0].mxu0 %v2760
  %v2796 = vpop.f32.mrb[0].mxu0
  %v2797 = vadd.f32 0.0, %v2796
  %v2798 = vpop.f32.mrb[0].mxu0
  %v2799 = vpop.f32.mrb[0].mxu0
  %v2800 = vadd.f32 0.0, %v2799
  %v2801 = vpop.f32.mrb[0].mxu0
  %2802 = vdwg.mxu0
  %v2803 = vadd.f32 %v2564, %v2797
  %v2804 = vadd.f32 %v2565, %v2800
  %v2805 = vld [vmem:[%s2 + $0x138] sm:$0x1]
  %v2806 = vlaneseq
  %v2807 = vshrl.u32 %v2806, 7
  %v2808 = vsub.s32 0, %v2807
  %v2809 = vrot.slane %v2805, %v2808
  %v2810 = vadd.f32 %v2803, %v2809
  %v2811 = vadd.f32 %v2804, %v2809
  %v2812 = vadd.f32 %v2810, 0.0
  %v2813 = vadd.f32 %v2811, 0.0
  %v2814 = vld [vmem:[%s2 + $0x198] sm:$0x1]
  %v2815 = vld [vmem:[%s2 + $0x1a0] sm:$0x1]
  %v2816 = vsel %vm302, %v2812, 0.0
  %2817 = vadd.xlane.f32.xlu0 %v2816
  %v2818 = vpop.xlane.xlu0 %2817
  %v2819 = vsel %vm302, %v2813, 0.0
  %2820 = vadd.xlane.f32.xlu0 %v2819
  %v2821 = vpop.xlane.xlu0 %2820
  %v2822 = vmul.f32 %v2818, %v1529
  %v2823 = vmul.f32 %v2821, %v1529
  %v2824 = vsub.f32 %v2812, %v2822
  %v2825 = vsub.f32 %v2813, %v2823
  %v2826 = vmul.f32 %v2824, %v2824
  %v2827 = vmul.f32 %v2825, %v2825
  %v2828 = vsel %vm302, %v2826, 0.0
  %2829 = vadd.xlane.f32.xlu0 %v2828
  %v2830 = vpop.xlane.xlu0 %2829
  %v2831 = vsel %vm302, %v2827, 0.0
  %2832 = vadd.xlane.f32.xlu0 %v2831
  %v2833 = vpop.xlane.xlu0 %2832
  %v2834 = vmul.f32 %v2830, %v1529
  %v2835 = vmul.f32 %v2833, %v1529
  %v2836 = vadd.f32 %v2834, 1e-05
  %v2837 = vadd.f32 %v2835, 1e-05
  %v2838 = vrsqrt.pop %v2836
  %v2839 = vrsqrt.pop %v2837
  %v2840 = vmul.f32 %v2824, %v2838
  %v2841 = vmul.f32 %v2825, %v2839
  %v2842 = vlaneseq
  %v2843 = vshrl.u32 %v2842, 7
  %v2844 = vsub.s32 0, %v2843
  %v2845 = vrot.slane %v2814, %v2844
  %v2846 = vmul.f32 %v2840, %v2845
  %v2847 = vmul.f32 %v2841, %v2845
  %v2848 = vlaneseq
  %v2849 = vshrl.u32 %v2848, 7
  %v2850 = vsub.s32 0, %v2849
  %v2851 = vrot.slane %v2815, %v2850
  %v2852 = vadd.f32 %v2846, %v2851
  %v2853 = vadd.f32 %v2847, %v2851
  %v2854 = vadd.f32 %v2852, %v263
  %v2855 = vadd.f32 %v2853, %v264
  %v2856 = vpack.c.bf16 %v2855, %v2854
  %v2857 = vld [vmem:[%s1 + $0x198] sm:$0xf]
  %v2858 = vld [vmem:[%s1 + $0x19c] sm:$0xf]
  %v2859 = vld [vmem:[%s1 + $0x1a0] sm:$0xf]
  %v2860 = vld [vmem:[%s1 + $0x1a4] sm:$0xf]
  %v2861 = vld [vmem:[%s2 + $0x140] sm:$0x1]
  %v2862 = vlaneseq
  %v2863 = vshrl.u32 %v2862, 7
  %v2864 = vsub.s32 0, %v2863
  %v2865 = vrot.slane %v2861, %v2864
  %v2870 = vunpack.c.l.b16 %v2857
  %v2871 = vunpack.c.l.b16 %v2858
  %v2872 = vunpack.c.l.b16 %v2859
  %v2873 = vunpack.c.l.b16 %v2860
  %v2874 = vpack.c.b16 %v2871, %v2870
  %v2875 = vpack.c.b16 %v2873, %v2872
  %v2879 = vsel %vm302, %v2856, 0
  %2881 = vmatprep.subr.bf16.mxu0 0
  %2882 = vmatpush1.bf16.msra.mxu0 %v2874
  %2883 = vmatprep.subr.bf16.mxu0 0
  %2884 = vmatpush1.bf16.msra.mxu0 %v2875
  %2885 = vmatprep.subr.bf16.mxu0 0
  %2886 = vmatpush1.bf16.msra.mxu0 0
  %2887 = vmatprep.subr.bf16.mxu0 0
  %2888 = vmatpush1.bf16.msra.mxu0 0
  %2889 = vmatprep.subr.bf16.mxu0 0
  %2890 = vmatpush1.bf16.msra.mxu0 0
  %2891 = vmatprep.subr.bf16.mxu0 0
  %2892 = vmatpush1.bf16.msra.mxu0 0
  %2893 = vmatprep.subr.bf16.mxu0 0
  %2894 = vmatpush1.bf16.msra.mxu0 0
  %2895 = vmatprep.subr.bf16.mxu0 0
  %2896 = vmatpush1.bf16.msra.mxu0 0
  %2897 = vmatprep.subr.bf16.mxu0 0
  %2898 = vmatpush1.bf16.msra.mxu0 0
  %2899 = vmatprep.subr.bf16.mxu0 0
  %2900 = vmatpush1.bf16.msra.mxu0 0
  %2901 = vmatprep.subr.bf16.mxu0 0
  %2902 = vmatpush1.bf16.msra.mxu0 0
  %2903 = vmatprep.subr.bf16.mxu0 0
  %2904 = vmatpush1.bf16.msra.mxu0 0
  %2905 = vmatprep.subr.bf16.mxu0 0
  %2906 = vmatpush1.bf16.msra.mxu0 0
  %2907 = vmatprep.subr.bf16.mxu0 0
  %2908 = vmatpush1.bf16.msra.mxu0 0
  %2909 = vmatprep.subr.bf16.mxu0 0
  %2910 = vmatpush1.bf16.msra.mxu0 0
  %2911 = vmatprep.subr.bf16.mxu0 0
  %2912 = vmatpush1.bf16.msra.mxu0 0
  %2913 = vmatprep.mubr.bf16.mxu0 0
  %2914 = vmatmul.mubr.bf16.gmra.mrb[0].mxu0 %v2879
  %v2915 = vpop.f32.mrb[0].mxu0
  %v2916 = vadd.f32 %v2865, %v2915
  %v2917 = vpop.f32.mrb[0].mxu0
  %v2918 = vpop.f32.mrb[0].mxu0
  %v2919 = vadd.f32 %v2865, %v2918
  %v2920 = vpop.f32.mrb[0].mxu0
  %2921 = vdwg.mxu0
  %v2922 = vpack.c.bf16 %v2919, %v2916
  %v2924 = vsel %vm302, %v2922, 0
  %v2927 = vsel %vm302, %v1840, 0
  %v2930 = vsel %vm302, %v1841, 0
  %2932 = vmatprep.subr.bf16.mxu0 0
  %2933 = vmatpush1.bf16.xpose.msra.mxu0 %v2927
  %2934 = vmatprep.subr.bf16.mxu0 0
  %2935 = vmatpush1.bf16.xpose.msra.mxu0 %v2930
  %2936 = vmatprep.subr.bf16.mxu0 0
  %2937 = vmatpush1.bf16.xpose.msra.mxu0 0
  %2938 = vmatprep.subr.bf16.mxu0 0
  %2939 = vmatpush1.bf16.xpose.msra.mxu0 0
  %2940 = vmatprep.subr.bf16.mxu0 0
  %2941 = vmatpush1.bf16.xpose.msra.mxu0 0
  %2942 = vmatprep.subr.bf16.mxu0 0
  %2943 = vmatpush1.bf16.xpose.msra.mxu0 0
  %2944 = vmatprep.subr.bf16.mxu0 0
  %2945 = vmatpush1.bf16.xpose.msra.mxu0 0
  %2946 = vmatprep.subr.bf16.mxu0 0
  %2947 = vmatpush1.bf16.xpose.msra.mxu0 0
  %2948 = vmatprep.subr.bf16.mxu0 0
  %2949 = vmatpush1.bf16.xpose.msra.mxu0 0
  %2950 = vmatprep.subr.bf16.mxu0 0
  %2951 = vmatpush1.bf16.xpose.msra.mxu0 0
  %2952 = vmatprep.subr.bf16.mxu0 0
  %2953 = vmatpush1.bf16.xpose.msra.mxu0 0
  %2954 = vmatprep.subr.bf16.mxu0 0
  %2955 = vmatpush1.bf16.xpose.msra.mxu0 0
  %2956 = vmatprep.subr.bf16.mxu0 0
  %2957 = vmatpush1.bf16.xpose.msra.mxu0 0
  %2958 = vmatprep.subr.bf16.mxu0 0
  %2959 = vmatpush1.bf16.xpose.msra.mxu0 0
  %2960 = vmatprep.subr.bf16.mxu0 0
  %2961 = vmatpush1.bf16.xpose.msra.mxu0 0
  %2962 = vmatprep.subr.bf16.mxu0 0
  %2963 = vmatpush1.bf16.xpose.msra.mxu0 0
  %2964 = vmatprep.mubr.bf16.mxu0 0
  %2965 = vmatmul.mubr.bf16.gmra.mrb[0].mxu0 %v2924
  %v2966 = vpop.f32.mrb[0].mxu0
  %v2967 = vadd.f32 %v271, %v2966
  %v2968 = vpop.f32.mrb[0].mxu0
  %v2969 = vpop.f32.mrb[0].mxu0
  %v2970 = vadd.f32 %v272, %v2969
  %v2971 = vpop.f32.mrb[0].mxu0
  %2972 = vdwg.mxu0
  %v2973 = vsel %vm302, %v2967, -inf
  %2974 = vmax.xlane.f32.xlu0 %v2973
  %v2975 = vpop.xlane.xlu0 %2974
  %v2976 = vsel %vm302, %v2970, -inf
  %2977 = vmax.xlane.f32.xlu0 %v2976
  %v2978 = vpop.xlane.xlu0 %2977
  %v2979 = vsub.f32 %v2967, %v2975
  %v2980 = vsub.f32 %v2970, %v2978
  %v2981 = vmul.f32 %v2979, 1.442695
  %v2982 = vpow.pop %v2981
  %v2983 = vmul.f32 %v2980, 1.442695
  %v2984 = vpow.pop %v2983
  %v2985 = vsel %vm302, %v2982, 0.0
  %2986 = vadd.xlane.f32.xlu0 %v2985
  %v2987 = vpop.xlane.xlu0 %2986
  %v2988 = vsel %vm302, %v2984, 0.0
  %2989 = vadd.xlane.f32.xlu0 %v2988
  %v2990 = vpop.xlane.xlu0 %2989
  %v2991 = vrcp.pop %v2987
  %v2992 = vrcp.pop %v2990
  %v2993 = vmul.f32 %v2982, %v2991
  %v2994 = vmul.f32 %v2984, %v2992
  %v2995 = vpack.c.bf16 %v2994, %v2993
  %v2996 = vld [vmem:[%s1 + $0x1a8] sm:$0xf]
  %v2997 = vld [vmem:[%s1 + $0x1ac] sm:$0xf]
  %v2998 = vld [vmem:[%s1 + $0x1b0] sm:$0xf]
  %v2999 = vld [vmem:[%s1 + $0x1b4] sm:$0xf]
  %v3000 = vld [vmem:[%s2 + $0x148] sm:$0x1]
  %v3001 = vlaneseq
  %v3002 = vshrl.u32 %v3001, 7
  %v3003 = vsub.s32 0, %v3002
  %v3004 = vrot.slane %v3000, %v3003
  %v3009 = vunpack.c.l.b16 %v2996
  %v3010 = vunpack.c.l.b16 %v2997
  %v3011 = vunpack.c.l.b16 %v2998
  %v3012 = vunpack.c.l.b16 %v2999
  %v3013 = vpack.c.b16 %v3010, %v3009
  %v3014 = vpack.c.b16 %v3012, %v3011
  %v3018 = vsel %vm302, %v1842, 0
  %v3021 = vsel %vm302, %v1843, 0
  %3023 = vmatprep.subr.bf16.mxu0 0
  %3024 = vmatpush1.bf16.msra.mxu0 %v3013
  %3025 = vmatprep.subr.bf16.mxu0 0
  %3026 = vmatpush1.bf16.msra.mxu0 %v3014
  %3027 = vmatprep.subr.bf16.mxu0 0
  %3028 = vmatpush1.bf16.msra.mxu0 0
  %3029 = vmatprep.subr.bf16.mxu0 0
  %3030 = vmatpush1.bf16.msra.mxu0 0
  %3031 = vmatprep.subr.bf16.mxu0 0
  %3032 = vmatpush1.bf16.msra.mxu0 0
  %3033 = vmatprep.subr.bf16.mxu0 0
  %3034 = vmatpush1.bf16.msra.mxu0 0
  %3035 = vmatprep.subr.bf16.mxu0 0
  %3036 = vmatpush1.bf16.msra.mxu0 0
  %3037 = vmatprep.subr.bf16.mxu0 0
  %3038 = vmatpush1.bf16.msra.mxu0 0
  %3039 = vmatprep.subr.bf16.mxu0 0
  %3040 = vmatpush1.bf16.msra.mxu0 0
  %3041 = vmatprep.subr.bf16.mxu0 0
  %3042 = vmatpush1.bf16.msra.mxu0 0
  %3043 = vmatprep.subr.bf16.mxu0 0
  %3044 = vmatpush1.bf16.msra.mxu0 0
  %3045 = vmatprep.subr.bf16.mxu0 0
  %3046 = vmatpush1.bf16.msra.mxu0 0
  %3047 = vmatprep.subr.bf16.mxu0 0
  %3048 = vmatpush1.bf16.msra.mxu0 0
  %3049 = vmatprep.subr.bf16.mxu0 0
  %3050 = vmatpush1.bf16.msra.mxu0 0
  %3051 = vmatprep.subr.bf16.mxu0 0
  %3052 = vmatpush1.bf16.msra.mxu0 0
  %3053 = vmatprep.subr.bf16.mxu0 0
  %3054 = vmatpush1.bf16.msra.mxu0 0
  %3055 = vmatprep.mubr.bf16.mxu0 0
  %3056 = vmatmul.mubr.bf16.gmra.mrb[0].mxu0 %v3018
  %v3057 = vpop.f32.mrb[0].mxu0
  %v3058 = vadd.f32 %v3004, %v3057
  %v3059 = vpop.f32.mrb[0].mxu0
  %v3060 = vpop.f32.mrb[0].mxu0
  %v3061 = vadd.f32 %v3004, %v3060
  %v3062 = vpop.f32.mrb[0].mxu0
  %3063 = vmatprep.mubr.bf16.mxu0 0
  %3064 = vmatmul.mubr.bf16.gmra.mrb[0].mxu0 %v3021
  %v3065 = vpop.f32.mrb[0].mxu0
  %v3066 = vadd.f32 %v3004, %v3065
  %v3067 = vpop.f32.mrb[0].mxu0
  %v3068 = vpop.f32.mrb[0].mxu0
  %v3069 = vadd.f32 %v3004, %v3068
  %v3070 = vpop.f32.mrb[0].mxu0
  %3071 = vdwg.mxu0
  %v3072 = vpack.c.bf16 %v3061, %v3058
  %v3073 = vpack.c.bf16 %v3069, %v3066
  %v3074 = vld [vmem:[%s1 + $0x1b8] sm:$0xf]
  %v3075 = vld [vmem:[%s1 + $0x1bc] sm:$0xf]
  %v3076 = vld [vmem:[%s1 + $0x1c0] sm:$0xf]
  %v3077 = vld [vmem:[%s1 + $0x1c4] sm:$0xf]
  %v3078 = vld [vmem:[%s2 + $0x150] sm:$0x1]
  %v3079 = vlaneseq
  %v3080 = vshrl.u32 %v3079, 7
  %v3081 = vsub.s32 0, %v3080
  %v3082 = vrot.slane %v3078, %v3081
  %v3087 = vunpack.c.l.b16 %v3074
  %v3088 = vunpack.c.l.b16 %v3075
  %v3089 = vunpack.c.l.b16 %v3076
  %v3090 = vunpack.c.l.b16 %v3077
  %v3091 = vpack.c.b16 %v3088, %v3087
  %v3092 = vpack.c.b16 %v3090, %v3089
  %3095 = vmatprep.subr.bf16.mxu0 0
  %3096 = vmatpush1.bf16.msra.mxu0 %v3091
  %3097 = vmatprep.subr.bf16.mxu0 0
  %3098 = vmatpush1.bf16.msra.mxu0 %v3092
  %3099 = vmatprep.subr.bf16.mxu0 0
  %3100 = vmatpush1.bf16.msra.mxu0 0
  %3101 = vmatprep.subr.bf16.mxu0 0
  %3102 = vmatpush1.bf16.msra.mxu0 0
  %3103 = vmatprep.subr.bf16.mxu0 0
  %3104 = vmatpush1.bf16.msra.mxu0 0
  %3105 = vmatprep.subr.bf16.mxu0 0
  %3106 = vmatpush1.bf16.msra.mxu0 0
  %3107 = vmatprep.subr.bf16.mxu0 0
  %3108 = vmatpush1.bf16.msra.mxu0 0
  %3109 = vmatprep.subr.bf16.mxu0 0
  %3110 = vmatpush1.bf16.msra.mxu0 0
  %3111 = vmatprep.subr.bf16.mxu0 0
  %3112 = vmatpush1.bf16.msra.mxu0 0
  %3113 = vmatprep.subr.bf16.mxu0 0
  %3114 = vmatpush1.bf16.msra.mxu0 0
  %3115 = vmatprep.subr.bf16.mxu0 0
  %3116 = vmatpush1.bf16.msra.mxu0 0
  %3117 = vmatprep.subr.bf16.mxu0 0
  %3118 = vmatpush1.bf16.msra.mxu0 0
  %3119 = vmatprep.subr.bf16.mxu0 0
  %3120 = vmatpush1.bf16.msra.mxu0 0
  %3121 = vmatprep.subr.bf16.mxu0 0
  %3122 = vmatpush1.bf16.msra.mxu0 0
  %3123 = vmatprep.subr.bf16.mxu0 0
  %3124 = vmatpush1.bf16.msra.mxu0 0
  %3125 = vmatprep.subr.bf16.mxu0 0
  %3126 = vmatpush1.bf16.msra.mxu0 0
  %3127 = vmatprep.mubr.bf16.mxu0 0
  %3128 = vmatmul.mubr.bf16.gmra.mrb[0].mxu0 %v2879
  %v3129 = vpop.f32.mrb[0].mxu0
  %v3130 = vadd.f32 %v3082, %v3129
  %v3131 = vpop.f32.mrb[0].mxu0
  %v3132 = vpop.f32.mrb[0].mxu0
  %v3133 = vadd.f32 %v3082, %v3132
  %v3134 = vpop.f32.mrb[0].mxu0
  %3135 = vdwg.mxu0
  %v3136 = vpack.c.bf16 %v3133, %v3130
  %v3138 = vsel %vm302, %v3136, 0
  %3140 = vmatprep.subr.bf16.mxu0 0
  %3141 = vmatpush1.bf16.xpose.msra.mxu0 %v2927
  %3142 = vmatprep.subr.bf16.mxu0 0
  %3143 = vmatpush1.bf16.xpose.msra.mxu0 %v2930
  %3144 = vmatprep.subr.bf16.mxu0 0
  %3145 = vmatpush1.bf16.xpose.msra.mxu0 0
  %3146 = vmatprep.subr.bf16.mxu0 0
  %3147 = vmatpush1.bf16.xpose.msra.mxu0 0
  %3148 = vmatprep.subr.bf16.mxu0 0
  %3149 = vmatpush1.bf16.xpose.msra.mxu0 0
  %3150 = vmatprep.subr.bf16.mxu0 0
  %3151 = vmatpush1.bf16.xpose.msra.mxu0 0
  %3152 = vmatprep.subr.bf16.mxu0 0
  %3153 = vmatpush1.bf16.xpose.msra.mxu0 0
  %3154 = vmatprep.subr.bf16.mxu0 0
  %3155 = vmatpush1.bf16.xpose.msra.mxu0 0
  %3156 = vmatprep.subr.bf16.mxu0 0
  %3157 = vmatpush1.bf16.xpose.msra.mxu0 0
  %3158 = vmatprep.subr.bf16.mxu0 0
  %3159 = vmatpush1.bf16.xpose.msra.mxu0 0
  %3160 = vmatprep.subr.bf16.mxu0 0
  %3161 = vmatpush1.bf16.xpose.msra.mxu0 0
  %3162 = vmatprep.subr.bf16.mxu0 0
  %3163 = vmatpush1.bf16.xpose.msra.mxu0 0
  %3164 = vmatprep.subr.bf16.mxu0 0
  %3165 = vmatpush1.bf16.xpose.msra.mxu0 0
  %3166 = vmatprep.subr.bf16.mxu0 0
  %3167 = vmatpush1.bf16.xpose.msra.mxu0 0
  %3168 = vmatprep.subr.bf16.mxu0 0
  %3169 = vmatpush1.bf16.xpose.msra.mxu0 0
  %3170 = vmatprep.subr.bf16.mxu0 0
  %3171 = vmatpush1.bf16.xpose.msra.mxu0 0
  %3172 = vmatprep.mubr.bf16.mxu0 0
  %3173 = vmatmul.mubr.bf16.gmra.mrb[0].mxu0 %v3138
  %v3174 = vpop.f32.mrb[0].mxu0
  %v3175 = vadd.f32 %v271, %v3174
  %v3176 = vpop.f32.mrb[0].mxu0
  %v3177 = vpop.f32.mrb[0].mxu0
  %v3178 = vadd.f32 %v272, %v3177
  %v3179 = vpop.f32.mrb[0].mxu0
  %3180 = vdwg.mxu0
  %v3181 = vsel %vm302, %v3175, -inf
  %3182 = vmax.xlane.f32.xlu0 %v3181
  %v3183 = vpop.xlane.xlu0 %3182
  %v3184 = vsel %vm302, %v3178, -inf
  %3185 = vmax.xlane.f32.xlu0 %v3184
  %v3186 = vpop.xlane.xlu0 %3185
  %v3187 = vsub.f32 %v3175, %v3183
  %v3188 = vsub.f32 %v3178, %v3186
  %v3189 = vmul.f32 %v3187, 1.442695
  %v3190 = vpow.pop %v3189
  %v3191 = vmul.f32 %v3188, 1.442695
  %v3192 = vpow.pop %v3191
  %v3193 = vsel %vm302, %v3190, 0.0
  %3194 = vadd.xlane.f32.xlu0 %v3193
  %v3195 = vpop.xlane.xlu0 %3194
  %v3196 = vsel %vm302, %v3192, 0.0
  %3197 = vadd.xlane.f32.xlu0 %v3196
  %v3198 = vpop.xlane.xlu0 %3197
  %v3199 = vrcp.pop %v3195
  %v3200 = vrcp.pop %v3198
  %v3201 = vmul.f32 %v3190, %v3199
  %v3202 = vmul.f32 %v3192, %v3200
  %v3203 = vpack.c.bf16 %v3202, %v3201
  %v3204 = vld [vmem:[%s1 + $0x1c8] sm:$0xf]
  %v3205 = vld [vmem:[%s1 + $0x1cc] sm:$0xf]
  %v3206 = vld [vmem:[%s1 + $0x1d0] sm:$0xf]
  %v3207 = vld [vmem:[%s1 + $0x1d4] sm:$0xf]
  %v3208 = vld [vmem:[%s2 + $0x158] sm:$0x1]
  %v3209 = vlaneseq
  %v3210 = vshrl.u32 %v3209, 7
  %v3211 = vsub.s32 0, %v3210
  %v3212 = vrot.slane %v3208, %v3211
  %v3217 = vunpack.c.l.b16 %v3204
  %v3218 = vunpack.c.l.b16 %v3205
  %v3219 = vunpack.c.l.b16 %v3206
  %v3220 = vunpack.c.l.b16 %v3207
  %v3221 = vpack.c.b16 %v3218, %v3217
  %v3222 = vpack.c.b16 %v3220, %v3219
  %3225 = vmatprep.subr.bf16.mxu0 0
  %3226 = vmatpush1.bf16.msra.mxu0 %v3221
  %3227 = vmatprep.subr.bf16.mxu0 0
  %3228 = vmatpush1.bf16.msra.mxu0 %v3222
  %3229 = vmatprep.subr.bf16.mxu0 0
  %3230 = vmatpush1.bf16.msra.mxu0 0
  %3231 = vmatprep.subr.bf16.mxu0 0
  %3232 = vmatpush1.bf16.msra.mxu0 0
  %3233 = vmatprep.subr.bf16.mxu0 0
  %3234 = vmatpush1.bf16.msra.mxu0 0
  %3235 = vmatprep.subr.bf16.mxu0 0
  %3236 = vmatpush1.bf16.msra.mxu0 0
  %3237 = vmatprep.subr.bf16.mxu0 0
  %3238 = vmatpush1.bf16.msra.mxu0 0
  %3239 = vmatprep.subr.bf16.mxu0 0
  %3240 = vmatpush1.bf16.msra.mxu0 0
  %3241 = vmatprep.subr.bf16.mxu0 0
  %3242 = vmatpush1.bf16.msra.mxu0 0
  %3243 = vmatprep.subr.bf16.mxu0 0
  %3244 = vmatpush1.bf16.msra.mxu0 0
  %3245 = vmatprep.subr.bf16.mxu0 0
  %3246 = vmatpush1.bf16.msra.mxu0 0
  %3247 = vmatprep.subr.bf16.mxu0 0
  %3248 = vmatpush1.bf16.msra.mxu0 0
  %3249 = vmatprep.subr.bf16.mxu0 0
  %3250 = vmatpush1.bf16.msra.mxu0 0
  %3251 = vmatprep.subr.bf16.mxu0 0
  %3252 = vmatpush1.bf16.msra.mxu0 0
  %3253 = vmatprep.subr.bf16.mxu0 0
  %3254 = vmatpush1.bf16.msra.mxu0 0
  %3255 = vmatprep.subr.bf16.mxu0 0
  %3256 = vmatpush1.bf16.msra.mxu0 0
  %3257 = vmatprep.mubr.bf16.mxu0 0
  %3258 = vmatmul.mubr.bf16.gmra.mrb[0].mxu0 %v3018
  %v3259 = vpop.f32.mrb[0].mxu0
  %v3260 = vadd.f32 %v3212, %v3259
  %v3261 = vpop.f32.mrb[0].mxu0
  %v3262 = vpop.f32.mrb[0].mxu0
  %v3263 = vadd.f32 %v3212, %v3262
  %v3264 = vpop.f32.mrb[0].mxu0
  %3265 = vmatprep.mubr.bf16.mxu0 0
  %3266 = vmatmul.mubr.bf16.gmra.mrb[0].mxu0 %v3021
  %v3267 = vpop.f32.mrb[0].mxu0
  %v3268 = vadd.f32 %v3212, %v3267
  %v3269 = vpop.f32.mrb[0].mxu0
  %v3270 = vpop.f32.mrb[0].mxu0
  %v3271 = vadd.f32 %v3212, %v3270
  %v3272 = vpop.f32.mrb[0].mxu0
  %3273 = vdwg.mxu0
  %v3274 = vpack.c.bf16 %v3263, %v3260
  %v3275 = vpack.c.bf16 %v3271, %v3268
  %v3277 = vsel %vm302, %v3203, 0
  %3279 = vmatprep.subr.bf16.mxu0 0
  %3280 = vmatpush1.bf16.msra.mxu0 %v3274
  %3281 = vmatprep.subr.bf16.mxu0 0
  %3282 = vmatpush1.bf16.msra.mxu0 %v3275
  %3283 = vmatprep.subr.bf16.mxu0 0
  %3284 = vmatpush1.bf16.msra.mxu0 0
  %3285 = vmatprep.subr.bf16.mxu0 0
  %3286 = vmatpush1.bf16.msra.mxu0 0
  %3287 = vmatprep.subr.bf16.mxu0 0
  %3288 = vmatpush1.bf16.msra.mxu0 0
  %3289 = vmatprep.subr.bf16.mxu0 0
  %3290 = vmatpush1.bf16.msra.mxu0 0
  %3291 = vmatprep.subr.bf16.mxu0 0
  %3292 = vmatpush1.bf16.msra.mxu0 0
  %3293 = vmatprep.subr.bf16.mxu0 0
  %3294 = vmatpush1.bf16.msra.mxu0 0
  %3295 = vmatprep.subr.bf16.mxu0 0
  %3296 = vmatpush1.bf16.msra.mxu0 0
  %3297 = vmatprep.subr.bf16.mxu0 0
  %3298 = vmatpush1.bf16.msra.mxu0 0
  %3299 = vmatprep.subr.bf16.mxu0 0
  %3300 = vmatpush1.bf16.msra.mxu0 0
  %3301 = vmatprep.subr.bf16.mxu0 0
  %3302 = vmatpush1.bf16.msra.mxu0 0
  %3303 = vmatprep.subr.bf16.mxu0 0
  %3304 = vmatpush1.bf16.msra.mxu0 0
  %3305 = vmatprep.subr.bf16.mxu0 0
  %3306 = vmatpush1.bf16.msra.mxu0 0
  %3307 = vmatprep.subr.bf16.mxu0 0
  %3308 = vmatpush1.bf16.msra.mxu0 0
  %3309 = vmatprep.subr.bf16.mxu0 0
  %3310 = vmatpush1.bf16.msra.mxu0 0
  %3311 = vmatprep.mubr.bf16.mxu0 0
  %3312 = vmatmul.mubr.bf16.gmra.mrb[0].mxu0 %v3277
  %v3313 = vpop.f32.mrb[0].mxu0
  %v3314 = vadd.f32 0.0, %v3313
  %v3315 = vpop.f32.mrb[0].mxu0
  %v3316 = vpop.f32.mrb[0].mxu0
  %v3317 = vadd.f32 0.0, %v3316
  %v3318 = vpop.f32.mrb[0].mxu0
  %3319 = vdwg.mxu0
  %v3321 = vsel %vm302, %v2995, 0
  %3323 = vmatprep.subr.bf16.mxu0 0
  %3324 = vmatpush1.bf16.msra.mxu0 %v3072
  %3325 = vmatprep.subr.bf16.mxu0 0
  %3326 = vmatpush1.bf16.msra.mxu0 %v3073
  %3327 = vmatprep.subr.bf16.mxu0 0
  %3328 = vmatpush1.bf16.msra.mxu0 0
  %3329 = vmatprep.subr.bf16.mxu0 0
  %3330 = vmatpush1.bf16.msra.mxu0 0
  %3331 = vmatprep.subr.bf16.mxu0 0
  %3332 = vmatpush1.bf16.msra.mxu0 0
  %3333 = vmatprep.subr.bf16.mxu0 0
  %3334 = vmatpush1.bf16.msra.mxu0 0
  %3335 = vmatprep.subr.bf16.mxu0 0
  %3336 = vmatpush1.bf16.msra.mxu0 0
  %3337 = vmatprep.subr.bf16.mxu0 0
  %3338 = vmatpush1.bf16.msra.mxu0 0
  %3339 = vmatprep.subr.bf16.mxu0 0
  %3340 = vmatpush1.bf16.msra.mxu0 0
  %3341 = vmatprep.subr.bf16.mxu0 0
  %3342 = vmatpush1.bf16.msra.mxu0 0
  %3343 = vmatprep.subr.bf16.mxu0 0
  %3344 = vmatpush1.bf16.msra.mxu0 0
  %3345 = vmatprep.subr.bf16.mxu0 0
  %3346 = vmatpush1.bf16.msra.mxu0 0
  %3347 = vmatprep.subr.bf16.mxu0 0
  %3348 = vmatpush1.bf16.msra.mxu0 0
  %3349 = vmatprep.subr.bf16.mxu0 0
  %3350 = vmatpush1.bf16.msra.mxu0 0
  %3351 = vmatprep.subr.bf16.mxu0 0
  %3352 = vmatpush1.bf16.msra.mxu0 0
  %3353 = vmatprep.subr.bf16.mxu0 0
  %3354 = vmatpush1.bf16.msra.mxu0 0
  %3355 = vmatprep.mubr.bf16.mxu0 0
  %3356 = vmatmul.mubr.bf16.gmra.mrb[0].mxu0 %v3321
  %v3357 = vpop.f32.mrb[0].mxu0
  %v3358 = vadd.f32 %v3314, %v3357
  %v3359 = vpop.f32.mrb[0].mxu0
  %v3360 = vpop.f32.mrb[0].mxu0
  %v3361 = vadd.f32 %v3317, %v3360
  %v3362 = vpop.f32.mrb[0].mxu0
  %3363 = vdwg.mxu0
  %v3364 = vld [vmem:[%s1 + $0x1d8] sm:$0xf]
  %v3365 = vld [vmem:[%s1 + $0x1dc] sm:$0xf]
  %v3366 = vld [vmem:[%s1 + $0x1e0] sm:$0xf]
  %v3367 = vld [vmem:[%s1 + $0x1e4] sm:$0xf]
  %v3368 = vld [vmem:[%s2 + $0x160] sm:$0x1]
  %v3369 = vlaneseq
  %v3370 = vshrl.u32 %v3369, 7
  %v3371 = vsub.s32 0, %v3370
  %v3372 = vrot.slane %v3368, %v3371
  %v3377 = vunpack.c.l.b16 %v3364
  %v3378 = vunpack.c.l.b16 %v3365
  %v3379 = vunpack.c.l.b16 %v3366
  %v3380 = vunpack.c.l.b16 %v3367
  %v3381 = vpack.c.b16 %v3378, %v3377
  %v3382 = vpack.c.b16 %v3380, %v3379
  %3385 = vmatprep.subr.bf16.mxu0 0
  %3386 = vmatpush1.bf16.msra.mxu0 %v3381
  %3387 = vmatprep.subr.bf16.mxu0 0
  %3388 = vmatpush1.bf16.msra.mxu0 %v3382
  %3389 = vmatprep.subr.bf16.mxu0 0
  %3390 = vmatpush1.bf16.msra.mxu0 0
  %3391 = vmatprep.subr.bf16.mxu0 0
  %3392 = vmatpush1.bf16.msra.mxu0 0
  %3393 = vmatprep.subr.bf16.mxu0 0
  %3394 = vmatpush1.bf16.msra.mxu0 0
  %3395 = vmatprep.subr.bf16.mxu0 0
  %3396 = vmatpush1.bf16.msra.mxu0 0
  %3397 = vmatprep.subr.bf16.mxu0 0
  %3398 = vmatpush1.bf16.msra.mxu0 0
  %3399 = vmatprep.subr.bf16.mxu0 0
  %3400 = vmatpush1.bf16.msra.mxu0 0
  %3401 = vmatprep.subr.bf16.mxu0 0
  %3402 = vmatpush1.bf16.msra.mxu0 0
  %3403 = vmatprep.subr.bf16.mxu0 0
  %3404 = vmatpush1.bf16.msra.mxu0 0
  %3405 = vmatprep.subr.bf16.mxu0 0
  %3406 = vmatpush1.bf16.msra.mxu0 0
  %3407 = vmatprep.subr.bf16.mxu0 0
  %3408 = vmatpush1.bf16.msra.mxu0 0
  %3409 = vmatprep.subr.bf16.mxu0 0
  %3410 = vmatpush1.bf16.msra.mxu0 0
  %3411 = vmatprep.subr.bf16.mxu0 0
  %3412 = vmatpush1.bf16.msra.mxu0 0
  %3413 = vmatprep.subr.bf16.mxu0 0
  %3414 = vmatpush1.bf16.msra.mxu0 0
  %3415 = vmatprep.subr.bf16.mxu0 0
  %3416 = vmatpush1.bf16.msra.mxu0 0
  %3417 = vmatprep.mubr.bf16.mxu0 0
  %3418 = vmatmul.mubr.bf16.gmra.mrb[0].mxu0 %v2879
  %v3419 = vpop.f32.mrb[0].mxu0
  %v3420 = vadd.f32 %v3372, %v3419
  %v3421 = vpop.f32.mrb[0].mxu0
  %v3422 = vpop.f32.mrb[0].mxu0
  %v3423 = vadd.f32 %v3372, %v3422
  %v3424 = vpop.f32.mrb[0].mxu0
  %3425 = vdwg.mxu0
  %v3426 = vpack.c.bf16 %v3423, %v3420
  %v3428 = vsel %vm302, %v3426, 0
  %3430 = vmatprep.subr.bf16.mxu0 0
  %3431 = vmatpush1.bf16.xpose.msra.mxu0 %v2927
  %3432 = vmatprep.subr.bf16.mxu0 0
  %3433 = vmatpush1.bf16.xpose.msra.mxu0 %v2930
  %3434 = vmatprep.subr.bf16.mxu0 0
  %3435 = vmatpush1.bf16.xpose.msra.mxu0 0
  %3436 = vmatprep.subr.bf16.mxu0 0
  %3437 = vmatpush1.bf16.xpose.msra.mxu0 0
  %3438 = vmatprep.subr.bf16.mxu0 0
  %3439 = vmatpush1.bf16.xpose.msra.mxu0 0
  %3440 = vmatprep.subr.bf16.mxu0 0
  %3441 = vmatpush1.bf16.xpose.msra.mxu0 0
  %3442 = vmatprep.subr.bf16.mxu0 0
  %3443 = vmatpush1.bf16.xpose.msra.mxu0 0
  %3444 = vmatprep.subr.bf16.mxu0 0
  %3445 = vmatpush1.bf16.xpose.msra.mxu0 0
  %3446 = vmatprep.subr.bf16.mxu0 0
  %3447 = vmatpush1.bf16.xpose.msra.mxu0 0
  %3448 = vmatprep.subr.bf16.mxu0 0
  %3449 = vmatpush1.bf16.xpose.msra.mxu0 0
  %3450 = vmatprep.subr.bf16.mxu0 0
  %3451 = vmatpush1.bf16.xpose.msra.mxu0 0
  %3452 = vmatprep.subr.bf16.mxu0 0
  %3453 = vmatpush1.bf16.xpose.msra.mxu0 0
  %3454 = vmatprep.subr.bf16.mxu0 0
  %3455 = vmatpush1.bf16.xpose.msra.mxu0 0
  %3456 = vmatprep.subr.bf16.mxu0 0
  %3457 = vmatpush1.bf16.xpose.msra.mxu0 0
  %3458 = vmatprep.subr.bf16.mxu0 0
  %3459 = vmatpush1.bf16.xpose.msra.mxu0 0
  %3460 = vmatprep.subr.bf16.mxu0 0
  %3461 = vmatpush1.bf16.xpose.msra.mxu0 0
  %3462 = vmatprep.mubr.bf16.mxu0 0
  %3463 = vmatmul.mubr.bf16.gmra.mrb[0].mxu0 %v3428
  %v3464 = vpop.f32.mrb[0].mxu0
  %v3465 = vadd.f32 %v271, %v3464
  %v3466 = vpop.f32.mrb[0].mxu0
  %v3467 = vpop.f32.mrb[0].mxu0
  %v3468 = vadd.f32 %v272, %v3467
  %v3469 = vpop.f32.mrb[0].mxu0
  %3470 = vdwg.mxu0
  %v3471 = vsel %vm302, %v3465, -inf
  %3472 = vmax.xlane.f32.xlu0 %v3471
  %v3473 = vpop.xlane.xlu0 %3472
  %v3474 = vsel %vm302, %v3468, -inf
  %3475 = vmax.xlane.f32.xlu0 %v3474
  %v3476 = vpop.xlane.xlu0 %3475
  %v3477 = vsub.f32 %v3465, %v3473
  %v3478 = vsub.f32 %v3468, %v3476
  %v3479 = vmul.f32 %v3477, 1.442695
  %v3480 = vpow.pop %v3479
  %v3481 = vmul.f32 %v3478, 1.442695
  %v3482 = vpow.pop %v3481
  %v3483 = vsel %vm302, %v3480, 0.0
  %3484 = vadd.xlane.f32.xlu0 %v3483
  %v3485 = vpop.xlane.xlu0 %3484
  %v3486 = vsel %vm302, %v3482, 0.0
  %3487 = vadd.xlane.f32.xlu0 %v3486
  %v3488 = vpop.xlane.xlu0 %3487
  %v3489 = vrcp.pop %v3485
  %v3490 = vrcp.pop %v3488
  %v3491 = vmul.f32 %v3480, %v3489
  %v3492 = vmul.f32 %v3482, %v3490
  %v3493 = vpack.c.bf16 %v3492, %v3491
  %v3494 = vld [vmem:[%s1 + $0x1e8] sm:$0xf]
  %v3495 = vld [vmem:[%s1 + $0x1ec] sm:$0xf]
  %v3496 = vld [vmem:[%s1 + $0x1f0] sm:$0xf]
  %v3497 = vld [vmem:[%s1 + $0x1f4] sm:$0xf]
  %v3498 = vld [vmem:[%s2 + $0x168] sm:$0x1]
  %v3499 = vlaneseq
  %v3500 = vshrl.u32 %v3499, 7
  %v3501 = vsub.s32 0, %v3500
  %v3502 = vrot.slane %v3498, %v3501
  %v3507 = vunpack.c.l.b16 %v3494
  %v3508 = vunpack.c.l.b16 %v3495
  %v3509 = vunpack.c.l.b16 %v3496
  %v3510 = vunpack.c.l.b16 %v3497
  %v3511 = vpack.c.b16 %v3508, %v3507
  %v3512 = vpack.c.b16 %v3510, %v3509
  %3515 = vmatprep.subr.bf16.mxu0 0
  %3516 = vmatpush1.bf16.msra.mxu0 %v3511
  %3517 = vmatprep.subr.bf16.mxu0 0
  %3518 = vmatpush1.bf16.msra.mxu0 %v3512
  %3519 = vmatprep.subr.bf16.mxu0 0
  %3520 = vmatpush1.bf16.msra.mxu0 0
  %3521 = vmatprep.subr.bf16.mxu0 0
  %3522 = vmatpush1.bf16.msra.mxu0 0
  %3523 = vmatprep.subr.bf16.mxu0 0
  %3524 = vmatpush1.bf16.msra.mxu0 0
  %3525 = vmatprep.subr.bf16.mxu0 0
  %3526 = vmatpush1.bf16.msra.mxu0 0
  %3527 = vmatprep.subr.bf16.mxu0 0
  %3528 = vmatpush1.bf16.msra.mxu0 0
  %3529 = vmatprep.subr.bf16.mxu0 0
  %3530 = vmatpush1.bf16.msra.mxu0 0
  %3531 = vmatprep.subr.bf16.mxu0 0
  %3532 = vmatpush1.bf16.msra.mxu0 0
  %3533 = vmatprep.subr.bf16.mxu0 0
  %3534 = vmatpush1.bf16.msra.mxu0 0
  %3535 = vmatprep.subr.bf16.mxu0 0
  %3536 = vmatpush1.bf16.msra.mxu0 0
  %3537 = vmatprep.subr.bf16.mxu0 0
  %3538 = vmatpush1.bf16.msra.mxu0 0
  %3539 = vmatprep.subr.bf16.mxu0 0
  %3540 = vmatpush1.bf16.msra.mxu0 0
  %3541 = vmatprep.subr.bf16.mxu0 0
  %3542 = vmatpush1.bf16.msra.mxu0 0
  %3543 = vmatprep.subr.bf16.mxu0 0
  %3544 = vmatpush1.bf16.msra.mxu0 0
  %3545 = vmatprep.subr.bf16.mxu0 0
  %3546 = vmatpush1.bf16.msra.mxu0 0
  %3547 = vmatprep.mubr.bf16.mxu0 0
  %3548 = vmatmul.mubr.bf16.gmra.mrb[0].mxu0 %v3018
  %v3549 = vpop.f32.mrb[0].mxu0
  %v3550 = vadd.f32 %v3502, %v3549
  %v3551 = vpop.f32.mrb[0].mxu0
  %v3552 = vpop.f32.mrb[0].mxu0
  %v3553 = vadd.f32 %v3502, %v3552
  %v3554 = vpop.f32.mrb[0].mxu0
  %3555 = vmatprep.mubr.bf16.mxu0 0
  %3556 = vmatmul.mubr.bf16.gmra.mrb[0].mxu0 %v3021
  %v3557 = vpop.f32.mrb[0].mxu0
  %v3558 = vadd.f32 %v3502, %v3557
  %v3559 = vpop.f32.mrb[0].mxu0
  %v3560 = vpop.f32.mrb[0].mxu0
  %v3561 = vadd.f32 %v3502, %v3560
  %v3562 = vpop.f32.mrb[0].mxu0
  %3563 = vdwg.mxu0
  %v3564 = vpack.c.bf16 %v3553, %v3550
  %v3565 = vpack.c.bf16 %v3561, %v3558
  %v3567 = vsel %vm302, %v3493, 0
  %3569 = vmatprep.subr.bf16.mxu0 0
  %3570 = vmatpush1.bf16.msra.mxu0 %v3564
  %3571 = vmatprep.subr.bf16.mxu0 0
  %3572 = vmatpush1.bf16.msra.mxu0 %v3565
  %3573 = vmatprep.subr.bf16.mxu0 0
  %3574 = vmatpush1.bf16.msra.mxu0 0
  %3575 = vmatprep.subr.bf16.mxu0 0
  %3576 = vmatpush1.bf16.msra.mxu0 0
  %3577 = vmatprep.subr.bf16.mxu0 0
  %3578 = vmatpush1.bf16.msra.mxu0 0
  %3579 = vmatprep.subr.bf16.mxu0 0
  %3580 = vmatpush1.bf16.msra.mxu0 0
  %3581 = vmatprep.subr.bf16.mxu0 0
  %3582 = vmatpush1.bf16.msra.mxu0 0
  %3583 = vmatprep.subr.bf16.mxu0 0
  %3584 = vmatpush1.bf16.msra.mxu0 0
  %3585 = vmatprep.subr.bf16.mxu0 0
  %3586 = vmatpush1.bf16.msra.mxu0 0
  %3587 = vmatprep.subr.bf16.mxu0 0
  %3588 = vmatpush1.bf16.msra.mxu0 0
  %3589 = vmatprep.subr.bf16.mxu0 0
  %3590 = vmatpush1.bf16.msra.mxu0 0
  %3591 = vmatprep.subr.bf16.mxu0 0
  %3592 = vmatpush1.bf16.msra.mxu0 0
  %3593 = vmatprep.subr.bf16.mxu0 0
  %3594 = vmatpush1.bf16.msra.mxu0 0
  %3595 = vmatprep.subr.bf16.mxu0 0
  %3596 = vmatpush1.bf16.msra.mxu0 0
  %3597 = vmatprep.subr.bf16.mxu0 0
  %3598 = vmatpush1.bf16.msra.mxu0 0
  %3599 = vmatprep.subr.bf16.mxu0 0
  %3600 = vmatpush1.bf16.msra.mxu0 0
  %3601 = vmatprep.mubr.bf16.mxu0 0
  %3602 = vmatmul.mubr.bf16.gmra.mrb[0].mxu0 %v3567
  %v3603 = vpop.f32.mrb[0].mxu0
  %v3604 = vadd.f32 0.0, %v3603
  %v3605 = vpop.f32.mrb[0].mxu0
  %v3606 = vpop.f32.mrb[0].mxu0
  %v3607 = vadd.f32 0.0, %v3606
  %v3608 = vpop.f32.mrb[0].mxu0
  %3609 = vdwg.mxu0
  %v3610 = vadd.f32 %v3358, %v3604
  %v3611 = vadd.f32 %v3361, %v3607
  %v3612 = vld [vmem:[%s1 + $0x1f8] sm:$0xf]
  %v3613 = vld [vmem:[%s1 + $0x1fc] sm:$0xf]
  %v3614 = vld [vmem:[%s1 + $0x200] sm:$0xf]
  %v3615 = vld [vmem:[%s1 + $0x204] sm:$0xf]
  %v3616 = vld [vmem:[%s2 + $0x170] sm:$0x1]
  %v3617 = vlaneseq
  %v3618 = vshrl.u32 %v3617, 7
  %v3619 = vsub.s32 0, %v3618
  %v3620 = vrot.slane %v3616, %v3619
  %v3625 = vunpack.c.l.b16 %v3612
  %v3626 = vunpack.c.l.b16 %v3613
  %v3627 = vunpack.c.l.b16 %v3614
  %v3628 = vunpack.c.l.b16 %v3615
  %v3629 = vpack.c.b16 %v3626, %v3625
  %v3630 = vpack.c.b16 %v3628, %v3627
  %3633 = vmatprep.subr.bf16.mxu0 0
  %3634 = vmatpush1.bf16.msra.mxu0 %v3629
  %3635 = vmatprep.subr.bf16.mxu0 0
  %3636 = vmatpush1.bf16.msra.mxu0 %v3630
  %3637 = vmatprep.subr.bf16.mxu0 0
  %3638 = vmatpush1.bf16.msra.mxu0 0
  %3639 = vmatprep.subr.bf16.mxu0 0
  %3640 = vmatpush1.bf16.msra.mxu0 0
  %3641 = vmatprep.subr.bf16.mxu0 0
  %3642 = vmatpush1.bf16.msra.mxu0 0
  %3643 = vmatprep.subr.bf16.mxu0 0
  %3644 = vmatpush1.bf16.msra.mxu0 0
  %3645 = vmatprep.subr.bf16.mxu0 0
  %3646 = vmatpush1.bf16.msra.mxu0 0
  %3647 = vmatprep.subr.bf16.mxu0 0
  %3648 = vmatpush1.bf16.msra.mxu0 0
  %3649 = vmatprep.subr.bf16.mxu0 0
  %3650 = vmatpush1.bf16.msra.mxu0 0
  %3651 = vmatprep.subr.bf16.mxu0 0
  %3652 = vmatpush1.bf16.msra.mxu0 0
  %3653 = vmatprep.subr.bf16.mxu0 0
  %3654 = vmatpush1.bf16.msra.mxu0 0
  %3655 = vmatprep.subr.bf16.mxu0 0
  %3656 = vmatpush1.bf16.msra.mxu0 0
  %3657 = vmatprep.subr.bf16.mxu0 0
  %3658 = vmatpush1.bf16.msra.mxu0 0
  %3659 = vmatprep.subr.bf16.mxu0 0
  %3660 = vmatpush1.bf16.msra.mxu0 0
  %3661 = vmatprep.subr.bf16.mxu0 0
  %3662 = vmatpush1.bf16.msra.mxu0 0
  %3663 = vmatprep.subr.bf16.mxu0 0
  %3664 = vmatpush1.bf16.msra.mxu0 0
  %3665 = vmatprep.mubr.bf16.mxu0 0
  %3666 = vmatmul.mubr.bf16.gmra.mrb[0].mxu0 %v2879
  %v3667 = vpop.f32.mrb[0].mxu0
  %v3668 = vadd.f32 %v3620, %v3667
  %v3669 = vpop.f32.mrb[0].mxu0
  %v3670 = vpop.f32.mrb[0].mxu0
  %v3671 = vadd.f32 %v3620, %v3670
  %v3672 = vpop.f32.mrb[0].mxu0
  %3673 = vdwg.mxu0
  %v3674 = vpack.c.bf16 %v3671, %v3668
  %v3676 = vsel %vm302, %v3674, 0
  %3678 = vmatprep.subr.bf16.mxu0 0
  %3679 = vmatpush1.bf16.xpose.msra.mxu0 %v2927
  %3680 = vmatprep.subr.bf16.mxu0 0
  %3681 = vmatpush1.bf16.xpose.msra.mxu0 %v2930
  %3682 = vmatprep.subr.bf16.mxu0 0
  %3683 = vmatpush1.bf16.xpose.msra.mxu0 0
  %3684 = vmatprep.subr.bf16.mxu0 0
  %3685 = vmatpush1.bf16.xpose.msra.mxu0 0
  %3686 = vmatprep.subr.bf16.mxu0 0
  %3687 = vmatpush1.bf16.xpose.msra.mxu0 0
  %3688 = vmatprep.subr.bf16.mxu0 0
  %3689 = vmatpush1.bf16.xpose.msra.mxu0 0
  %3690 = vmatprep.subr.bf16.mxu0 0
  %3691 = vmatpush1.bf16.xpose.msra.mxu0 0
  %3692 = vmatprep.subr.bf16.mxu0 0
  %3693 = vmatpush1.bf16.xpose.msra.mxu0 0
  %3694 = vmatprep.subr.bf16.mxu0 0
  %3695 = vmatpush1.bf16.xpose.msra.mxu0 0
  %3696 = vmatprep.subr.bf16.mxu0 0
  %3697 = vmatpush1.bf16.xpose.msra.mxu0 0
  %3698 = vmatprep.subr.bf16.mxu0 0
  %3699 = vmatpush1.bf16.xpose.msra.mxu0 0
  %3700 = vmatprep.subr.bf16.mxu0 0
  %3701 = vmatpush1.bf16.xpose.msra.mxu0 0
  %3702 = vmatprep.subr.bf16.mxu0 0
  %3703 = vmatpush1.bf16.xpose.msra.mxu0 0
  %3704 = vmatprep.subr.bf16.mxu0 0
  %3705 = vmatpush1.bf16.xpose.msra.mxu0 0
  %3706 = vmatprep.subr.bf16.mxu0 0
  %3707 = vmatpush1.bf16.xpose.msra.mxu0 0
  %3708 = vmatprep.subr.bf16.mxu0 0
  %3709 = vmatpush1.bf16.xpose.msra.mxu0 0
  %3710 = vmatprep.mubr.bf16.mxu0 0
  %3711 = vmatmul.mubr.bf16.gmra.mrb[0].mxu0 %v3676
  %v3712 = vpop.f32.mrb[0].mxu0
  %v3713 = vadd.f32 %v271, %v3712
  %v3714 = vpop.f32.mrb[0].mxu0
  %v3715 = vpop.f32.mrb[0].mxu0
  %v3716 = vadd.f32 %v272, %v3715
  %v3717 = vpop.f32.mrb[0].mxu0
  %3718 = vdwg.mxu0
  %v3719 = vsel %vm302, %v3713, -inf
  %3720 = vmax.xlane.f32.xlu0 %v3719
  %v3721 = vpop.xlane.xlu0 %3720
  %v3722 = vsel %vm302, %v3716, -inf
  %3723 = vmax.xlane.f32.xlu0 %v3722
  %v3724 = vpop.xlane.xlu0 %3723
  %v3725 = vsub.f32 %v3713, %v3721
  %v3726 = vsub.f32 %v3716, %v3724
  %v3727 = vmul.f32 %v3725, 1.442695
  %v3728 = vpow.pop %v3727
  %v3729 = vmul.f32 %v3726, 1.442695
  %v3730 = vpow.pop %v3729
  %v3731 = vsel %vm302, %v3728, 0.0
  %3732 = vadd.xlane.f32.xlu0 %v3731
  %v3733 = vpop.xlane.xlu0 %3732
  %v3734 = vsel %vm302, %v3730, 0.0
  %3735 = vadd.xlane.f32.xlu0 %v3734
  %v3736 = vpop.xlane.xlu0 %3735
  %v3737 = vrcp.pop %v3733
  %v3738 = vrcp.pop %v3736
  %v3739 = vmul.f32 %v3728, %v3737
  %v3740 = vmul.f32 %v3730, %v3738
  %v3741 = vpack.c.bf16 %v3740, %v3739
  %v3742 = vld [vmem:[%s1 + $0x208] sm:$0xf]
  %v3743 = vld [vmem:[%s1 + $0x20c] sm:$0xf]
  %v3744 = vld [vmem:[%s1 + $0x210] sm:$0xf]
  %v3745 = vld [vmem:[%s1 + $0x214] sm:$0xf]
  %v3746 = vld [vmem:[%s2 + $0x178] sm:$0x1]
  %v3747 = vlaneseq
  %v3748 = vshrl.u32 %v3747, 7
  %v3749 = vsub.s32 0, %v3748
  %v3750 = vrot.slane %v3746, %v3749
  %v3755 = vunpack.c.l.b16 %v3742
  %v3756 = vunpack.c.l.b16 %v3743
  %v3757 = vunpack.c.l.b16 %v3744
  %v3758 = vunpack.c.l.b16 %v3745
  %v3759 = vpack.c.b16 %v3756, %v3755
  %v3760 = vpack.c.b16 %v3758, %v3757
  %3763 = vmatprep.subr.bf16.mxu0 0
  %3764 = vmatpush1.bf16.msra.mxu0 %v3759
  %3765 = vmatprep.subr.bf16.mxu0 0
  %3766 = vmatpush1.bf16.msra.mxu0 %v3760
  %3767 = vmatprep.subr.bf16.mxu0 0
  %3768 = vmatpush1.bf16.msra.mxu0 0
  %3769 = vmatprep.subr.bf16.mxu0 0
  %3770 = vmatpush1.bf16.msra.mxu0 0
  %3771 = vmatprep.subr.bf16.mxu0 0
  %3772 = vmatpush1.bf16.msra.mxu0 0
  %3773 = vmatprep.subr.bf16.mxu0 0
  %3774 = vmatpush1.bf16.msra.mxu0 0
  %3775 = vmatprep.subr.bf16.mxu0 0
  %3776 = vmatpush1.bf16.msra.mxu0 0
  %3777 = vmatprep.subr.bf16.mxu0 0
  %3778 = vmatpush1.bf16.msra.mxu0 0
  %3779 = vmatprep.subr.bf16.mxu0 0
  %3780 = vmatpush1.bf16.msra.mxu0 0
  %3781 = vmatprep.subr.bf16.mxu0 0
  %3782 = vmatpush1.bf16.msra.mxu0 0
  %3783 = vmatprep.subr.bf16.mxu0 0
  %3784 = vmatpush1.bf16.msra.mxu0 0
  %3785 = vmatprep.subr.bf16.mxu0 0
  %3786 = vmatpush1.bf16.msra.mxu0 0
  %3787 = vmatprep.subr.bf16.mxu0 0
  %3788 = vmatpush1.bf16.msra.mxu0 0
  %3789 = vmatprep.subr.bf16.mxu0 0
  %3790 = vmatpush1.bf16.msra.mxu0 0
  %3791 = vmatprep.subr.bf16.mxu0 0
  %3792 = vmatpush1.bf16.msra.mxu0 0
  %3793 = vmatprep.subr.bf16.mxu0 0
  %3794 = vmatpush1.bf16.msra.mxu0 0
  %3795 = vmatprep.mubr.bf16.mxu0 0
  %3796 = vmatmul.mubr.bf16.gmra.mrb[0].mxu0 %v3018
  %v3797 = vpop.f32.mrb[0].mxu0
  %v3798 = vadd.f32 %v3750, %v3797
  %v3799 = vpop.f32.mrb[0].mxu0
  %v3800 = vpop.f32.mrb[0].mxu0
  %v3801 = vadd.f32 %v3750, %v3800
  %v3802 = vpop.f32.mrb[0].mxu0
  %3803 = vmatprep.mubr.bf16.mxu0 0
  %3804 = vmatmul.mubr.bf16.gmra.mrb[0].mxu0 %v3021
  %v3805 = vpop.f32.mrb[0].mxu0
  %v3806 = vadd.f32 %v3750, %v3805
  %v3807 = vpop.f32.mrb[0].mxu0
  %v3808 = vpop.f32.mrb[0].mxu0
  %v3809 = vadd.f32 %v3750, %v3808
  %v3810 = vpop.f32.mrb[0].mxu0
  %3811 = vdwg.mxu0
  %v3812 = vpack.c.bf16 %v3801, %v3798
  %v3813 = vpack.c.bf16 %v3809, %v3806
  %v3815 = vsel %vm302, %v3741, 0
  %3817 = vmatprep.subr.bf16.mxu0 0
  %3818 = vmatpush1.bf16.msra.mxu0 %v3812
  %3819 = vmatprep.subr.bf16.mxu0 0
  %3820 = vmatpush1.bf16.msra.mxu0 %v3813
  %3821 = vmatprep.subr.bf16.mxu0 0
  %3822 = vmatpush1.bf16.msra.mxu0 0
  %3823 = vmatprep.subr.bf16.mxu0 0
  %3824 = vmatpush1.bf16.msra.mxu0 0
  %3825 = vmatprep.subr.bf16.mxu0 0
  %3826 = vmatpush1.bf16.msra.mxu0 0
  %3827 = vmatprep.subr.bf16.mxu0 0
  %3828 = vmatpush1.bf16.msra.mxu0 0
  %3829 = vmatprep.subr.bf16.mxu0 0
  %3830 = vmatpush1.bf16.msra.mxu0 0
  %3831 = vmatprep.subr.bf16.mxu0 0
  %3832 = vmatpush1.bf16.msra.mxu0 0
  %3833 = vmatprep.subr.bf16.mxu0 0
  %3834 = vmatpush1.bf16.msra.mxu0 0
  %3835 = vmatprep.subr.bf16.mxu0 0
  %3836 = vmatpush1.bf16.msra.mxu0 0
  %3837 = vmatprep.subr.bf16.mxu0 0
  %3838 = vmatpush1.bf16.msra.mxu0 0
  %3839 = vmatprep.subr.bf16.mxu0 0
  %3840 = vmatpush1.bf16.msra.mxu0 0
  %3841 = vmatprep.subr.bf16.mxu0 0
  %3842 = vmatpush1.bf16.msra.mxu0 0
  %3843 = vmatprep.subr.bf16.mxu0 0
  %3844 = vmatpush1.bf16.msra.mxu0 0
  %3845 = vmatprep.subr.bf16.mxu0 0
  %3846 = vmatpush1.bf16.msra.mxu0 0
  %3847 = vmatprep.subr.bf16.mxu0 0
  %3848 = vmatpush1.bf16.msra.mxu0 0
  %3849 = vmatprep.mubr.bf16.mxu0 0
  %3850 = vmatmul.mubr.bf16.gmra.mrb[0].mxu0 %v3815
  %v3851 = vpop.f32.mrb[0].mxu0
  %v3852 = vadd.f32 0.0, %v3851
  %v3853 = vpop.f32.mrb[0].mxu0
  %v3854 = vpop.f32.mrb[0].mxu0
  %v3855 = vadd.f32 0.0, %v3854
  %v3856 = vpop.f32.mrb[0].mxu0
  %3857 = vdwg.mxu0
  %v3858 = vadd.f32 %v3610, %v3852
  %v3859 = vadd.f32 %v3611, %v3855
  %v3860 = vld [vmem:[%s2 + $0x180] sm:$0x1]
  %v3861 = vlaneseq
  %v3862 = vshrl.u32 %v3861, 7
  %v3863 = vsub.s32 0, %v3862
  %v3864 = vrot.slane %v3860, %v3863
  %v3865 = vadd.f32 %v3858, %v3864
  %v3866 = vadd.f32 %v3859, %v3864
  %v3867 = vadd.f32 %v2852, %v3865
  %v3868 = vadd.f32 %v2853, %v3866
  %v3869 = vld [vmem:[%s2 + $0x1a8] sm:$0x1]
  %v3870 = vld [vmem:[%s2 + $0x1b0] sm:$0x1]
  %v3871 = vsel %vm302, %v3867, 0.0
  %3872 = vadd.xlane.f32.xlu0 %v3871
  %v3873 = vpop.xlane.xlu0 %3872
  %v3874 = vsel %vm302, %v3868, 0.0
  %3875 = vadd.xlane.f32.xlu0 %v3874
  %v3876 = vpop.xlane.xlu0 %3875
  %v3877 = vmul.f32 %v3873, %v1529
  %v3878 = vmul.f32 %v3876, %v1529
  %v3879 = vsub.f32 %v3867, %v3877
  %v3880 = vsub.f32 %v3868, %v3878
  %v3881 = vmul.f32 %v3879, %v3879
  %v3882 = vmul.f32 %v3880, %v3880
  %v3883 = vsel %vm302, %v3881, 0.0
  %3884 = vadd.xlane.f32.xlu0 %v3883
  %v3885 = vpop.xlane.xlu0 %3884
  %v3886 = vsel %vm302, %v3882, 0.0
  %3887 = vadd.xlane.f32.xlu0 %v3886
  %v3888 = vpop.xlane.xlu0 %3887
  %v3889 = vmul.f32 %v3885, %v1529
  %v3890 = vmul.f32 %v3888, %v1529
  %v3891 = vadd.f32 %v3889, 1e-05
  %v3892 = vadd.f32 %v3890, 1e-05
  %v3893 = vrsqrt.pop %v3891
  %v3894 = vrsqrt.pop %v3892
  %v3895 = vmul.f32 %v3879, %v3893
  %v3896 = vmul.f32 %v3880, %v3894
  %v3897 = vlaneseq
  %v3898 = vshrl.u32 %v3897, 7
  %v3899 = vsub.s32 0, %v3898
  %v3900 = vrot.slane %v3869, %v3899
  %v3901 = vmul.f32 %v3895, %v3900
  %v3902 = vmul.f32 %v3896, %v3900
  %v3903 = vlaneseq
  %v3904 = vshrl.u32 %v3903, 7
  %v3905 = vsub.s32 0, %v3904
  %v3906 = vrot.slane %v3870, %v3905
  %v3907 = vadd.f32 %v3901, %v3906
  %v3908 = vadd.f32 %v3902, %v3906
  %v3909 = vpack.c.bf16 %v3908, %v3907
  %v3910 = vld [vmem:[%s1 + $0x218] sm:$0xf]
  %v3911 = vld [vmem:[%s1 + $0x21c] sm:$0xf]
  %v3912 = vld [vmem:[%s1 + $0x220] sm:$0xf]
  %v3913 = vld [vmem:[%s1 + $0x224] sm:$0xf]
  %v3914 = vld [vmem:[%s2 + $0x188] sm:$0x1]
  %v3915 = vlaneseq
  %v3916 = vshrl.u32 %v3915, 7
  %v3917 = vsub.s32 0, %v3916
  %v3918 = vrot.slane %v3914, %v3917
  %v3923 = vunpack.c.l.b16 %v3910
  %v3924 = vunpack.c.l.b16 %v3911
  %v3925 = vunpack.c.l.b16 %v3912
  %v3926 = vunpack.c.l.b16 %v3913
  %v3927 = vpack.c.b16 %v3924, %v3923
  %v3928 = vpack.c.b16 %v3926, %v3925
  %v3932 = vsel %vm302, %v3909, 0
  %3934 = vmatprep.subr.bf16.mxu0 0
  %3935 = vmatpush1.bf16.msra.mxu0 %v3927
  %3936 = vmatprep.subr.bf16.mxu0 0
  %3937 = vmatpush1.bf16.msra.mxu0 %v3928
  %3938 = vmatprep.subr.bf16.mxu0 0
  %3939 = vmatpush1.bf16.msra.mxu0 0
  %3940 = vmatprep.subr.bf16.mxu0 0
  %3941 = vmatpush1.bf16.msra.mxu0 0
  %3942 = vmatprep.subr.bf16.mxu0 0
  %3943 = vmatpush1.bf16.msra.mxu0 0
  %3944 = vmatprep.subr.bf16.mxu0 0
  %3945 = vmatpush1.bf16.msra.mxu0 0
  %3946 = vmatprep.subr.bf16.mxu0 0
  %3947 = vmatpush1.bf16.msra.mxu0 0
  %3948 = vmatprep.subr.bf16.mxu0 0
  %3949 = vmatpush1.bf16.msra.mxu0 0
  %3950 = vmatprep.subr.bf16.mxu0 0
  %3951 = vmatpush1.bf16.msra.mxu0 0
  %3952 = vmatprep.subr.bf16.mxu0 0
  %3953 = vmatpush1.bf16.msra.mxu0 0
  %3954 = vmatprep.subr.bf16.mxu0 0
  %3955 = vmatpush1.bf16.msra.mxu0 0
  %3956 = vmatprep.subr.bf16.mxu0 0
  %3957 = vmatpush1.bf16.msra.mxu0 0
  %3958 = vmatprep.subr.bf16.mxu0 0
  %3959 = vmatpush1.bf16.msra.mxu0 0
  %3960 = vmatprep.subr.bf16.mxu0 0
  %3961 = vmatpush1.bf16.msra.mxu0 0
  %3962 = vmatprep.subr.bf16.mxu0 0
  %3963 = vmatpush1.bf16.msra.mxu0 0
  %3964 = vmatprep.subr.bf16.mxu0 0
  %3965 = vmatpush1.bf16.msra.mxu0 0
  %3966 = vmatprep.mubr.bf16.mxu0 0
  %3967 = vmatmul.mubr.bf16.gmra.mrb[0].mxu0 %v3932
  %v3968 = vpop.f32.mrb[0].mxu0
  %v3969 = vadd.f32 %v3918, %v3968
  %v3970 = vpop.f32.mrb[0].mxu0
  %v3971 = vpop.f32.mrb[0].mxu0
  %v3972 = vadd.f32 %v3918, %v3971
  %v3973 = vpop.f32.mrb[0].mxu0
  %3974 = vdwg.mxu0
  %v3975 = vmax.f32 %v3969, 0.0
  %v3976 = vmax.f32 %v3972, 0.0
  %v3977 = vpack.c.bf16 %v3976, %v3975
  %v3978 = vld [vmem:[%s1 + $0x228] sm:$0xf]
  %v3979 = vld [vmem:[%s1 + $0x22c] sm:$0xf]
  %v3980 = vld [vmem:[%s1 + $0x230] sm:$0xf]
  %v3981 = vld [vmem:[%s1 + $0x234] sm:$0xf]
  %v3982 = vld [vmem:[%s1 + $0x238] sm:$0xf]
  %v3983 = vld [vmem:[%s1 + $0x23c] sm:$0xf]
  %v3984 = vld [vmem:[%s1 + $0x240] sm:$0xf]
  %v3985 = vld [vmem:[%s1 + $0x244] sm:$0xf]
  %v3986 = vld [vmem:[%s2 + $0x190] sm:$0x1]
  %v3987 = vlaneseq
  %v3988 = vshrl.u32 %v3987, 7
  %v3989 = vsub.s32 0, %v3988
  %v3990 = vrot.slane %v3986, %v3989
  %v3999 = vunpack.c.l.b16 %v3978
  %v4000 = vunpack.c.l.b16 %v3979
  %v4001 = vunpack.c.l.b16 %v3980
  %v4002 = vunpack.c.l.b16 %v3981
  %v4003 = vunpack.c.l.b16 %v3982
  %v4004 = vunpack.c.l.b16 %v3983
  %v4005 = vunpack.c.l.b16 %v3984
  %v4006 = vunpack.c.l.b16 %v3985
  %v4007 = vpack.c.b16 %v4000, %v3999
  %v4008 = vpack.c.b16 %v4002, %v4001
  %v4009 = vpack.c.b16 %v4004, %v4003
  %v4010 = vpack.c.b16 %v4006, %v4005
  %v4016 = vsel %vm128, %v3977, 0
  %4018 = vmatprep.subr.bf16.mxu0 0
  %4019 = vmatpush1.bf16.msra.mxu0 %v4007
  %4020 = vmatprep.subr.bf16.mxu0 0
  %4021 = vmatpush1.bf16.msra.mxu0 %v4008
  %4022 = vmatprep.subr.bf16.mxu0 0
  %4023 = vmatpush1.bf16.msra.mxu0 %v4009
  %4024 = vmatprep.subr.bf16.mxu0 0
  %4025 = vmatpush1.bf16.msra.mxu0 %v4010
  %4026 = vmatprep.subr.bf16.mxu0 0
  %4027 = vmatpush1.bf16.msra.mxu0 0
  %4028 = vmatprep.subr.bf16.mxu0 0
  %4029 = vmatpush1.bf16.msra.mxu0 0
  %4030 = vmatprep.subr.bf16.mxu0 0
  %4031 = vmatpush1.bf16.msra.mxu0 0
  %4032 = vmatprep.subr.bf16.mxu0 0
  %4033 = vmatpush1.bf16.msra.mxu0 0
  %4034 = vmatprep.subr.bf16.mxu0 0
  %4035 = vmatpush1.bf16.msra.mxu0 0
  %4036 = vmatprep.subr.bf16.mxu0 0
  %4037 = vmatpush1.bf16.msra.mxu0 0
  %4038 = vmatprep.subr.bf16.mxu0 0
  %4039 = vmatpush1.bf16.msra.mxu0 0
  %4040 = vmatprep.subr.bf16.mxu0 0
  %4041 = vmatpush1.bf16.msra.mxu0 0
  %4042 = vmatprep.subr.bf16.mxu0 0
  %4043 = vmatpush1.bf16.msra.mxu0 0
  %4044 = vmatprep.subr.bf16.mxu0 0
  %4045 = vmatpush1.bf16.msra.mxu0 0
  %4046 = vmatprep.subr.bf16.mxu0 0
  %4047 = vmatpush1.bf16.msra.mxu0 0
  %4048 = vmatprep.subr.bf16.mxu0 0
  %4049 = vmatpush1.bf16.msra.mxu0 0
  %4050 = vmatprep.mubr.bf16.mxu0 0
  %4051 = vmatmul.mubr.bf16.gmra.mrb[0].mxu0 %v4016
  %v4052 = vpop.f32.mrb[0].mxu0
  %v4053 = vadd.f32 %v3990, %v4052
  %v4054 = vpop.f32.mrb[0].mxu0
  %v4055 = vpop.f32.mrb[0].mxu0
  %v4056 = vadd.f32 %v3990, %v4055
  %v4057 = vpop.f32.mrb[0].mxu0
  %4058 = vdwg.mxu0
  %v4059 = vadd.f32 %v3907, %v4053
  %v4060 = vadd.f32 %v3908, %v4056
  %v4061 = vld [vmem:[%s2 + $0x1b8] sm:$0x1]
  %v4062 = vld [vmem:[%s2 + $0x1c0] sm:$0x1]
  %v4063 = vsel %vm302, %v4059, 0.0
  %4064 = vadd.xlane.f32.xlu0 %v4063
  %v4065 = vpop.xlane.xlu0 %4064
  %v4066 = vsel %vm302, %v4060, 0.0
  %4067 = vadd.xlane.f32.xlu0 %v4066
  %v4068 = vpop.xlane.xlu0 %4067
  %v4069 = vmul.f32 %v4065, %v1529
  %v4070 = vmul.f32 %v4068, %v1529
  %v4071 = vsub.f32 %v4059, %v4069
  %v4072 = vsub.f32 %v4060, %v4070
  %v4073 = vmul.f32 %v4071, %v4071
  %v4074 = vmul.f32 %v4072, %v4072
  %v4075 = vsel %vm302, %v4073, 0.0
  %4076 = vadd.xlane.f32.xlu0 %v4075
  %v4077 = vpop.xlane.xlu0 %4076
  %v4078 = vsel %vm302, %v4074, 0.0
  %4079 = vadd.xlane.f32.xlu0 %v4078
  %v4080 = vpop.xlane.xlu0 %4079
  %v4081 = vmul.f32 %v4077, %v1529
  %v4082 = vmul.f32 %v4080, %v1529
  %v4083 = vadd.f32 %v4081, 1e-05
  %v4084 = vadd.f32 %v4082, 1e-05
  %v4085 = vrsqrt.pop %v4083
  %v4086 = vrsqrt.pop %v4084
  %v4087 = vmul.f32 %v4071, %v4085
  %v4088 = vmul.f32 %v4072, %v4086
  %v4089 = vlaneseq
  %v4090 = vshrl.u32 %v4089, 7
  %v4091 = vsub.s32 0, %v4090
  %v4092 = vrot.slane %v4061, %v4091
  %v4093 = vmul.f32 %v4087, %v4092
  %v4094 = vmul.f32 %v4088, %v4092
  %v4095 = vlaneseq
  %v4096 = vshrl.u32 %v4095, 7
  %v4097 = vsub.s32 0, %v4096
  %v4098 = vrot.slane %v4062, %v4097
  %v4099 = vadd.f32 %v4093, %v4098
  %v4100 = vadd.f32 %v4094, %v4098
  %v4101 = vld [vmem:[%s2 + $0x1c8] sm:$0x1]
  %v4102 = vld [vmem:[%s2 + $0x1d0] sm:$0x1]
  %v4103 = vsel %vm302, %v4099, 0.0
  %4104 = vadd.xlane.f32.xlu0 %v4103
  %v4105 = vpop.xlane.xlu0 %4104
  %v4106 = vsel %vm302, %v4100, 0.0
  %4107 = vadd.xlane.f32.xlu0 %v4106
  %v4108 = vpop.xlane.xlu0 %4107
  %v4109 = vmul.f32 %v4105, %v1529
  %v4110 = vmul.f32 %v4108, %v1529
  %v4111 = vsub.f32 %v4099, %v4109
  %v4112 = vsub.f32 %v4100, %v4110
  %v4113 = vmul.f32 %v4111, %v4111
  %v4114 = vmul.f32 %v4112, %v4112
  %v4115 = vsel %vm302, %v4113, 0.0
  %4116 = vadd.xlane.f32.xlu0 %v4115
  %v4117 = vpop.xlane.xlu0 %4116
  %v4118 = vsel %vm302, %v4114, 0.0
  %4119 = vadd.xlane.f32.xlu0 %v4118
  %v4120 = vpop.xlane.xlu0 %4119
  %v4121 = vmul.f32 %v4117, %v1529
  %v4122 = vmul.f32 %v4120, %v1529
  %v4123 = vadd.f32 %v4121, 1e-05
  %v4124 = vadd.f32 %v4122, 1e-05
  %v4125 = vrsqrt.pop %v4123
  %v4126 = vrsqrt.pop %v4124
  %v4127 = vmul.f32 %v4111, %v4125
  %v4128 = vmul.f32 %v4112, %v4126
  %v4129 = vlaneseq
  %v4130 = vshrl.u32 %v4129, 7
  %v4131 = vsub.s32 0, %v4130
  %v4132 = vrot.slane %v4101, %v4131
  %v4133 = vmul.f32 %v4127, %v4132
  %v4134 = vmul.f32 %v4128, %v4132
  %v4135 = vlaneseq
  %v4136 = vshrl.u32 %v4135, 7
  %v4137 = vsub.s32 0, %v4136
  %v4138 = vrot.slane %v4102, %v4137
  %v4139 = vadd.f32 %v4133, %v4138
  %v4140 = vadd.f32 %v4134, %v4138
  %v4141 = vpack.c.bf16 %v4140, %v4139
  %v4142 = vld [vmem:[%s1 + $0x248] sm:$0xf]
  %v4143 = vld [vmem:[%s1 + $0x24c] sm:$0xf]
  %v4144 = vld [vmem:[%s1 + $0x250] sm:$0xf]
  %v4145 = vld [vmem:[%s1 + $0x254] sm:$0xf]
  %v4146 = vld [vmem:[%s2 + $0x1d8] sm:$0x1]
  %v4147 = vlaneseq
  %v4148 = vshrl.u32 %v4147, 7
  %v4149 = vsub.s32 0, %v4148
  %v4150 = vrot.slane %v4146, %v4149
  %v4155 = vunpack.c.l.b16 %v4142
  %v4156 = vunpack.c.l.b16 %v4143
  %v4157 = vunpack.c.l.b16 %v4144
  %v4158 = vunpack.c.l.b16 %v4145
  %v4159 = vpack.c.b16 %v4156, %v4155
  %v4160 = vpack.c.b16 %v4158, %v4157
  %v4164 = vsel %vm302, %v4141, 0
  %4166 = vmatprep.subr.bf16.mxu0 0
  %4167 = vmatpush1.bf16.msra.mxu0 %v4159
  %4168 = vmatprep.subr.bf16.mxu0 0
  %4169 = vmatpush1.bf16.msra.mxu0 %v4160
  %4170 = vmatprep.subr.bf16.mxu0 0
  %4171 = vmatpush1.bf16.msra.mxu0 0
  %4172 = vmatprep.subr.bf16.mxu0 0
  %4173 = vmatpush1.bf16.msra.mxu0 0
  %4174 = vmatprep.subr.bf16.mxu0 0
  %4175 = vmatpush1.bf16.msra.mxu0 0
  %4176 = vmatprep.subr.bf16.mxu0 0
  %4177 = vmatpush1.bf16.msra.mxu0 0
  %4178 = vmatprep.subr.bf16.mxu0 0
  %4179 = vmatpush1.bf16.msra.mxu0 0
  %4180 = vmatprep.subr.bf16.mxu0 0
  %4181 = vmatpush1.bf16.msra.mxu0 0
  %4182 = vmatprep.subr.bf16.mxu0 0
  %4183 = vmatpush1.bf16.msra.mxu0 0
  %4184 = vmatprep.subr.bf16.mxu0 0
  %4185 = vmatpush1.bf16.msra.mxu0 0
  %4186 = vmatprep.subr.bf16.mxu0 0
  %4187 = vmatpush1.bf16.msra.mxu0 0
  %4188 = vmatprep.subr.bf16.mxu0 0
  %4189 = vmatpush1.bf16.msra.mxu0 0
  %4190 = vmatprep.subr.bf16.mxu0 0
  %4191 = vmatpush1.bf16.msra.mxu0 0
  %4192 = vmatprep.subr.bf16.mxu0 0
  %4193 = vmatpush1.bf16.msra.mxu0 0
  %4194 = vmatprep.subr.bf16.mxu0 0
  %4195 = vmatpush1.bf16.msra.mxu0 0
  %4196 = vmatprep.subr.bf16.mxu0 0
  %4197 = vmatpush1.bf16.msra.mxu0 0
  %4198 = vmatprep.mubr.bf16.mxu0 0
  %4199 = vmatmul.mubr.bf16.gmra.mrb[0].mxu0 %v4164
  %v4200 = vpop.f32.mrb[0].mxu0
  %v4201 = vadd.f32 %v4150, %v4200
  %v4202 = vpop.f32.mrb[0].mxu0
  %v4203 = vpop.f32.mrb[0].mxu0
  %v4204 = vadd.f32 %v4150, %v4203
  %v4205 = vpop.f32.mrb[0].mxu0
  %4206 = vdwg.mxu0
  %v4207 = vld [vmem:[%s1 + $0x258] sm:$0xf]
  %v4208 = vld [vmem:[%s1 + $0x25c] sm:$0xf]
  %v4209 = vld [vmem:[%s1 + $0x260] sm:$0xf]
  %v4210 = vld [vmem:[%s1 + $0x264] sm:$0xf]
  %v4211 = vld [vmem:[%s2 + $0x1e0] sm:$0x1]
  %v4212 = vlaneseq
  %v4213 = vshrl.u32 %v4212, 7
  %v4214 = vsub.s32 0, %v4213
  %v4215 = vrot.slane %v4211, %v4214
  %v4220 = vunpack.c.l.b16 %v4207
  %v4221 = vunpack.c.l.b16 %v4208
  %v4222 = vunpack.c.l.b16 %v4209
  %v4223 = vunpack.c.l.b16 %v4210
  %v4224 = vpack.c.b16 %v4221, %v4220
  %v4225 = vpack.c.b16 %v4223, %v4222
  %4228 = vmatprep.subr.bf16.mxu0 0
  %4229 = vmatpush1.bf16.msra.mxu0 %v4224
  %4230 = vmatprep.subr.bf16.mxu0 0
  %4231 = vmatpush1.bf16.msra.mxu0 %v4225
  %4232 = vmatprep.subr.bf16.mxu0 0
  %4233 = vmatpush1.bf16.msra.mxu0 0
  %4234 = vmatprep.subr.bf16.mxu0 0
  %4235 = vmatpush1.bf16.msra.mxu0 0
  %4236 = vmatprep.subr.bf16.mxu0 0
  %4237 = vmatpush1.bf16.msra.mxu0 0
  %4238 = vmatprep.subr.bf16.mxu0 0
  %4239 = vmatpush1.bf16.msra.mxu0 0
  %4240 = vmatprep.subr.bf16.mxu0 0
  %4241 = vmatpush1.bf16.msra.mxu0 0
  %4242 = vmatprep.subr.bf16.mxu0 0
  %4243 = vmatpush1.bf16.msra.mxu0 0
  %4244 = vmatprep.subr.bf16.mxu0 0
  %4245 = vmatpush1.bf16.msra.mxu0 0
  %4246 = vmatprep.subr.bf16.mxu0 0
  %4247 = vmatpush1.bf16.msra.mxu0 0
  %4248 = vmatprep.subr.bf16.mxu0 0
  %4249 = vmatpush1.bf16.msra.mxu0 0
  %4250 = vmatprep.subr.bf16.mxu0 0
  %4251 = vmatpush1.bf16.msra.mxu0 0
  %4252 = vmatprep.subr.bf16.mxu0 0
  %4253 = vmatpush1.bf16.msra.mxu0 0
  %4254 = vmatprep.subr.bf16.mxu0 0
  %4255 = vmatpush1.bf16.msra.mxu0 0
  %4256 = vmatprep.subr.bf16.mxu0 0
  %4257 = vmatpush1.bf16.msra.mxu0 0
  %4258 = vmatprep.subr.bf16.mxu0 0
  %4259 = vmatpush1.bf16.msra.mxu0 0
  %4260 = vmatprep.mubr.bf16.mxu0 0
  %4261 = vmatmul.mubr.bf16.gmra.mrb[0].mxu0 %v4164
  %v4262 = vpop.f32.mrb[0].mxu0
  %v4263 = vadd.f32 %v4215, %v4262
  %v4264 = vpop.f32.mrb[0].mxu0
  %v4265 = vpop.f32.mrb[0].mxu0
  %v4266 = vadd.f32 %v4215, %v4265
  %v4267 = vpop.f32.mrb[0].mxu0
  %4268 = vdwg.mxu0
  %v4269 = vmax.f32 %v4263, 0.0
  %v4270 = vmax.f32 %v4266, 0.0
  %v4271 = vpack.c.bf16 %v4270, %v4269
  %v4272 = vld [vmem:[%s1 + $0x268] sm:$0xf]
  %v4273 = vld [vmem:[%s1 + $0x26c] sm:$0xf]
  %v4274 = vld [vmem:[%s1 + $0x270] sm:$0xf]
  %v4275 = vld [vmem:[%s1 + $0x274] sm:$0xf]
  %v4276 = vld [vmem:[%s2 + $0x1e8] sm:$0x1]
  %v4277 = vlaneseq
  %v4278 = vshrl.u32 %v4277, 7
  %v4279 = vsub.s32 0, %v4278
  %v4280 = vrot.slane %v4276, %v4279
  %v4285 = vunpack.c.l.b16 %v4272
  %v4286 = vunpack.c.l.b16 %v4273
  %v4287 = vunpack.c.l.b16 %v4274
  %v4288 = vunpack.c.l.b16 %v4275
  %v4289 = vpack.c.b16 %v4286, %v4285
  %v4290 = vpack.c.b16 %v4288, %v4287
  %v4294 = vsel %vm302, %v4271, 0
  %4296 = vmatprep.subr.bf16.mxu0 0
  %4297 = vmatpush1.bf16.msra.mxu0 %v4289
  %4298 = vmatprep.subr.bf16.mxu0 0
  %4299 = vmatpush1.bf16.msra.mxu0 %v4290
  %4300 = vmatprep.subr.bf16.mxu0 0
  %4301 = vmatpush1.bf16.msra.mxu0 0
  %4302 = vmatprep.subr.bf16.mxu0 0
  %4303 = vmatpush1.bf16.msra.mxu0 0
  %4304 = vmatprep.subr.bf16.mxu0 0
  %4305 = vmatpush1.bf16.msra.mxu0 0
  %4306 = vmatprep.subr.bf16.mxu0 0
  %4307 = vmatpush1.bf16.msra.mxu0 0
  %4308 = vmatprep.subr.bf16.mxu0 0
  %4309 = vmatpush1.bf16.msra.mxu0 0
  %4310 = vmatprep.subr.bf16.mxu0 0
  %4311 = vmatpush1.bf16.msra.mxu0 0
  %4312 = vmatprep.subr.bf16.mxu0 0
  %4313 = vmatpush1.bf16.msra.mxu0 0
  %4314 = vmatprep.subr.bf16.mxu0 0
  %4315 = vmatpush1.bf16.msra.mxu0 0
  %4316 = vmatprep.subr.bf16.mxu0 0
  %4317 = vmatpush1.bf16.msra.mxu0 0
  %4318 = vmatprep.subr.bf16.mxu0 0
  %4319 = vmatpush1.bf16.msra.mxu0 0
  %4320 = vmatprep.subr.bf16.mxu0 0
  %4321 = vmatpush1.bf16.msra.mxu0 0
  %4322 = vmatprep.subr.bf16.mxu0 0
  %4323 = vmatpush1.bf16.msra.mxu0 0
  %4324 = vmatprep.subr.bf16.mxu0 0
  %4325 = vmatpush1.bf16.msra.mxu0 0
  %4326 = vmatprep.subr.bf16.mxu0 0
  %4327 = vmatpush1.bf16.msra.mxu0 0
  %4328 = vmatprep.mubr.bf16.mxu0 0
  %4329 = vmatmul.mubr.bf16.gmra.mrb[0].mxu0 %v4294
  %v4330 = vpop.f32.mrb[0].mxu0
  %v4331 = vadd.f32 %v4280, %v4330
  %v4332 = vpop.f32.mrb[0].mxu0
  %v4333 = vpop.f32.mrb[0].mxu0
  %v4334 = vadd.f32 %v4280, %v4333
  %v4335 = vpop.f32.mrb[0].mxu0
  %4336 = vdwg.mxu0
  %v4337 = vmax.f32 %v4331, 0.0
  %v4338 = vmax.f32 %v4334, 0.0
  %v4339 = vpack.c.bf16 %v4338, %v4337
  %v4340 = vld [vmem:[%s1 + $0x278] sm:$0xf]
  %v4341 = vld [vmem:[%s1 + $0x27c] sm:$0xf]
  %v4342 = vld [vmem:[%s1 + $0x280] sm:$0xf]
  %v4343 = vld [vmem:[%s1 + $0x284] sm:$0xf]
  %v4344 = vld [vmem:[%s2 + $0x1f0] sm:$0x1]
  %v4345 = vlaneseq
  %v4346 = vshrl.u32 %v4345, 7
  %v4347 = vsub.s32 0, %v4346
  %v4348 = vrot.slane %v4344, %v4347
  %v4353 = vunpack.c.l.b16 %v4340
  %v4354 = vunpack.c.l.b16 %v4341
  %v4355 = vunpack.c.l.b16 %v4342
  %v4356 = vunpack.c.l.b16 %v4343
  %v4357 = vpack.c.b16 %v4354, %v4353
  %v4358 = vpack.c.b16 %v4356, %v4355
  %v4362 = vsel %vm302, %v4339, 0
  %4364 = vmatprep.subr.bf16.mxu0 0
  %4365 = vmatpush1.bf16.msra.mxu0 %v4357
  %4366 = vmatprep.subr.bf16.mxu0 0
  %4367 = vmatpush1.bf16.msra.mxu0 %v4358
  %4368 = vmatprep.subr.bf16.mxu0 0
  %4369 = vmatpush1.bf16.msra.mxu0 0
  %4370 = vmatprep.subr.bf16.mxu0 0
  %4371 = vmatpush1.bf16.msra.mxu0 0
  %4372 = vmatprep.subr.bf16.mxu0 0
  %4373 = vmatpush1.bf16.msra.mxu0 0
  %4374 = vmatprep.subr.bf16.mxu0 0
  %4375 = vmatpush1.bf16.msra.mxu0 0
  %4376 = vmatprep.subr.bf16.mxu0 0
  %4377 = vmatpush1.bf16.msra.mxu0 0
  %4378 = vmatprep.subr.bf16.mxu0 0
  %4379 = vmatpush1.bf16.msra.mxu0 0
  %4380 = vmatprep.subr.bf16.mxu0 0
  %4381 = vmatpush1.bf16.msra.mxu0 0
  %4382 = vmatprep.subr.bf16.mxu0 0
  %4383 = vmatpush1.bf16.msra.mxu0 0
  %4384 = vmatprep.subr.bf16.mxu0 0
  %4385 = vmatpush1.bf16.msra.mxu0 0
  %4386 = vmatprep.subr.bf16.mxu0 0
  %4387 = vmatpush1.bf16.msra.mxu0 0
  %4388 = vmatprep.subr.bf16.mxu0 0
  %4389 = vmatpush1.bf16.msra.mxu0 0
  %4390 = vmatprep.subr.bf16.mxu0 0
  %4391 = vmatpush1.bf16.msra.mxu0 0
  %4392 = vmatprep.subr.bf16.mxu0 0
  %4393 = vmatpush1.bf16.msra.mxu0 0
  %4394 = vmatprep.subr.bf16.mxu0 0
  %4395 = vmatpush1.bf16.msra.mxu0 0
  %4396 = vmatprep.mubr.bf16.mxu0 0
  %4397 = vmatmul.mubr.bf16.gmra.mrb[0].mxu0 %v4362
  %v4398 = vpop.f32.mrb[0].mxu0
  %v4399 = vadd.f32 %v4348, %v4398
  %v4400 = vpop.f32.mrb[0].mxu0
  %v4401 = vpop.f32.mrb[0].mxu0
  %v4402 = vadd.f32 %v4348, %v4401
  %v4403 = vpop.f32.mrb[0].mxu0
  %4404 = vdwg.mxu0
  %v4405 = vsub.f32 0.0, %v4399
  %v4406 = vsub.f32 0.0, %v4402
  %v4407 = vmul.f32 %v4405, 1.442695
  %v4408 = vpow.pop %v4407
  %v4409 = vmul.f32 %v4406, 1.442695
  %v4410 = vpow.pop %v4409
  %v4411 = vadd.f32 %v4408, 1.0
  %v4412 = vadd.f32 %v4410, 1.0
  %v4413 = vrcp.pop %v4411
  %v4414 = vmul.f32 1.0, %v4413
  %v4415 = vrcp.pop %v4412
  %v4416 = vmul.f32 1.0, %v4415
  %4417 = vst [vmem:[%s3] sm:$0xff] %v4201
  %4418 = vst [vmem:[%s3 + $0x10] sm:$0xff] %v4204
  %4419 = vst [vmem:[%s3 + $0x8] sm:$0xff] %v4414
  %4420 = vst [vmem:[%s3 + $0x18] sm:$0xff] %v4416
  // Predicated region
  $region14: #{vision_detr_forward.1} parent=0 // pred_check
    _
  $region15: #{vision_detr_forward.1} parent=0 // pred_check_branch
    %4422 = sbr.rel (0) target = $region17
  $region16: #{vision_detr_forward.1} parent=0 // pred_region
    _
  $region17: #{vision_detr_forward.1} parent=0 // pred_fallthru
    _
  // Predicated region
  $region18: #{vision_detr_forward.1} parent=0 // pred_check
    _
  $region19: #{vision_detr_forward.1} parent=0 // pred_check_branch
    %4424 = sbr.rel (0) target = $region21
  $region20: #{vision_detr_forward.1} parent=0 // pred_region
    _
  $region21: #{vision_detr_forward.1} parent=0 // pred_fallthru
    _

</llo_original>
